<compile_context>
chip_gen: v7x
topology: tpu7x:2x2x1
jax: 0.10.0
libtpu: 0.0.40
codegen_flags: <defaults>
</compile_context>

<pallas_src>
import jax
import jax.numpy as jnp
from jax.experimental import pallas as pl
from jax.experimental.pallas import tpu as pltpu

# ----- small, module-consistent shapes -----
T = 8              # sequence length
B = 8              # batch per group (fills all vreg sublanes)
F = 14             # input_features
K = 5              # conv kernel size
PAD = 2            # conv padding
CONV_OUT = 64
H = 32             # hiddenSize (4H = 128 -> gates fill one vreg)
NUM_CLASSES = 8
NUM_SUBJECTS = 10
OUT_LANES = 128    # lane-dense fused output slab
BN_EPS = 1e-5

F32 = jnp.float32
BF16 = jnp.bfloat16


def _sclstm_dann_kernel(
    thr_ref,        # SMEM (4,) scalar prefetch: [lif1, slstm1, slstm2, lif_domain]
    xim_ref,        # (T*B, K*F)  bf16 im2col'd conv input, row = t*B + b
    wconv_ref,      # (K*F, 64)   bf16 Conv1d weight (tap-major rows)
    gamma_ref,      # (1, 64)     f32  BatchNorm weight
    beta_ref,       # (1, 64)     f32  BatchNorm bias
    w_ih1_ref,      # (64, 4H)    bf16
    w_hh1_ref,      # (H, 4H)     bf16
    b1_ref,         # (1, 4H)     f32  b_ih + b_hh of SLSTM1
    w_ih2_ref,      # (H, 4H)     bf16
    w_hh2_ref,      # (H, 4H)     bf16
    b2_ref,         # (1, 4H)     f32  b_ih + b_hh of SLSTM2
    wd1_ref,        # (H, 64)     bf16
    bd1_ref,        # (1, 64)     f32
    whg_ref,        # (H, 128)    bf16 gesture head -> lanes 0:8
    whd_ref,        # (64, 128)   bf16 domain head  -> lanes 8:18
    bh_ref,         # (1, 128)    f32  fused head bias
    out_ref,        # (B, 128)    f32  lane-dense output slab
):
    # ---- hoisted scalar threshold reads (SMEM -> sreg, done once) ----
    thr_lif1 = thr_ref[0]
    thr_s1 = thr_ref[1]
    thr_dom = thr_ref[3]
    # thr_ref[2] (slstm2 threshold) only affects spk2, which the forward never uses.

    # ---- Conv1d(k=5, pad=2, bias=False) as ONE im2col matmul (contraction 70) ----
    conv = jnp.dot(xim_ref[...], wconv_ref[...], preferred_element_type=F32)  # (T*B, 64)

    # ---- BatchNorm1d: training-mode batch statistics over (B, T) per channel ----
    mean = jnp.mean(conv, axis=0, keepdims=True)
    cen = conv - mean
    var = jnp.mean(cen * cen, axis=0, keepdims=True)                  # biased variance
    bn = cen * jax.lax.rsqrt(var + BN_EPS) * gamma_ref[...] + beta_ref[...]

    # ---- snn.Leaky, single application with mem reset to 0 -> heaviside spike ----
    spk_conv = jnp.where(bn > thr_lif1, 1.0, 0.0)                     # f32 (T*B, 64)

    # ---- SLSTM1 input projection hoisted out of the recurrence ----
    xg1_all = jnp.dot(spk_conv.astype(BF16), w_ih1_ref[...],
                      preferred_element_type=F32) + b1_ref[...]       # (T*B, 4H) f32

    w_hh1 = w_hh1_ref[...]
    w_ih2 = w_ih2_ref[...]
    w_hh2 = w_hh2_ref[...]
    b2 = b2_ref[...]

    def lstm_update(gates, c):
        # Full-vreg activations, then lane-slice (LSTMCell gate order i, f, g, o).
        sig = jax.nn.sigmoid(gates)                                   # one EUP pass
        tnh = jnp.tanh(gates)                                         # one EUP pass
        i_g = sig[:, 0 * H:1 * H]
        f_g = sig[:, 1 * H:2 * H]
        g_g = tnh[:, 2 * H:3 * H]
        o_g = sig[:, 3 * H:4 * H]
        c_new = f_g * c + i_g * g_g
        h_new = o_g * jnp.tanh(c_new)
        return h_new, c_new

    h1 = jnp.zeros((B, H), F32)   # mem1
    c1 = jnp.zeros((B, H), F32)   # syn1
    h2 = jnp.zeros((B, H), F32)   # mem2
    c2 = jnp.zeros((B, H), F32)   # syn2
    acc = jnp.zeros((B, H), F32)

    # Static fully-unrolled time loop (T is small and known at trace time).
    for t in range(T):
        # Both recurrent matmuls depend only on the PREVIOUS step's state, so
        # issue them first: h2@w_hh2 overlaps cell-1's matmul and EUP work;
        # only h1@w_hh1 -> spk1@w_ih2 remains strictly serialized.
        rec1 = jnp.dot(h1.astype(BF16), w_hh1, preferred_element_type=F32)
        rec2 = jnp.dot(h2.astype(BF16), w_hh2, preferred_element_type=F32)

        # ---- cell 1 ----
        gates1 = xg1_all[t * B:(t + 1) * B, :] + rec1
        h1, c1 = lstm_update(gates1, c1)
        spk1 = jnp.where(h1 > thr_s1, 1.0, 0.0)                       # f32 (B, H)

        # ---- cell 2 (no VMEM staging: pure register dataflow) ----
        gates2 = (jnp.dot(spk1.astype(BF16), w_ih2, preferred_element_type=F32)
                  + rec2 + b2)
        h2, c2 = lstm_update(gates2, c2)
        acc = acc + h2

    features = acc * (1.0 / T)                                        # mean over time of mem2

    # ---- domain head (gradient reversal = identity in forward) ----
    feat_b = features.astype(BF16)
    d_hidden = (jnp.dot(feat_b, wd1_ref[...], preferred_element_type=F32)
                + bd1_ref[...])
    d_spk = jnp.where(d_hidden > thr_dom, 1.0, 0.0)

    # ---- fused lane-dense output: lanes [0:8]=gesture, [8:18]=domain ----
    out_ref[...] = (jnp.dot(feat_b, whg_ref[...], preferred_element_type=F32)
                    + jnp.dot(d_spk.astype(BF16), whd_ref[...],
                              preferred_element_type=F32)
                    + bh_ref[...])


def init_params(key):
    ks = jax.random.split(key, 16)

    def unif(k, shape, fan_in):
        bound = 1.0 / (fan_in ** 0.5)
        return jax.random.uniform(k, shape, F32, -bound, bound)

    p = {}
    # Conv1d(F -> 64, k=5, no bias)
    p["conv_w"] = unif(ks[0], (CONV_OUT, F, K), F * K)
    # BatchNorm1d(64) default affine init
    p["bn_gamma"] = jnp.ones((1, CONV_OUT), F32)
    p["bn_beta"] = jnp.zeros((1, CONV_OUT), F32)
    # SLSTM1: LSTMCell(64 -> H)
    p["w_ih1"] = unif(ks[1], (4 * H, CONV_OUT), H)
    p["w_hh1"] = unif(ks[2], (4 * H, H), H)
    p["b_ih1"] = unif(ks[3], (4 * H,), H)
    p["b_hh1"] = unif(ks[4], (4 * H,), H)
    # SLSTM2: LSTMCell(H -> H)
    p["w_ih2"] = unif(ks[5], (4 * H, H), H)
    p["w_hh2"] = unif(ks[6], (4 * H, H), H)
    p["b_ih2"] = unif(ks[7], (4 * H,), H)
    p["b_hh2"] = unif(ks[8], (4 * H,), H)
    # fc_gesture: Linear(H -> NUM_CLASSES)
    p["wg"] = unif(ks[9], (NUM_CLASSES, H), H)
    p["bg"] = unif(ks[10], (NUM_CLASSES,), H)
    # fc_domain_1: Linear(H -> 64)
    p["wd1"] = unif(ks[11], (64, H), H)
    p["bd1"] = unif(ks[12], (64,), H)
    # fc_domain_2: Linear(64 -> NUM_SUBJECTS)
    p["wd2"] = unif(ks[13], (NUM_SUBJECTS, 64), 64)
    p["bd2"] = unif(ks[14], (NUM_SUBJECTS,), 64)
    # learnable thresholds (snntorch init: 1.0)
    p["thr"] = jnp.ones((4,), F32)
    return p


def _forward_impl(xg, params):
    # xg: (G, T, B, F) -- G independent batches, each one full module forward.
    G_, Tn, Bn, Fn = xg.shape
    assert (Tn, Bn, Fn) == (T, B, F)

    # ---- glue (fused under jit): zero-pad time by 2, im2col the 5 taps ----
    xp = jnp.pad(xg, ((0, 0), (PAD, PAD), (0, 0), (0, 0)))            # (G, T+4, B, F)
    xim = jnp.concatenate([xp[:, k:k + Tn] for k in range(K)], axis=-1)  # (G, T, B, K*F)
    xim = xim.reshape(G_ * Tn * Bn, K * Fn).astype(BF16)              # row = g*T*B + t*B + b

    # ---- glue: pre-transpose weights for x @ W; MXU operands in bf16 ----
    wconv = jnp.transpose(params["conv_w"], (2, 1, 0)).reshape(K * Fn, CONV_OUT).astype(BF16)
    w_ih1 = params["w_ih1"].T.astype(BF16)                            # (64, 4H)
    w_hh1 = params["w_hh1"].T.astype(BF16)                            # (H, 4H)
    b1 = (params["b_ih1"] + params["b_hh1"]).reshape(1, 4 * H)
    w_ih2 = params["w_ih2"].T.astype(BF16)                            # (H, 4H)
    w_hh2 = params["w_hh2"].T.astype(BF16)                            # (H, 4H)
    b2 = (params["b_ih2"] + params["b_hh2"]).reshape(1, 4 * H)
    wd1 = params["wd1"].T.astype(BF16)                                # (H, 64)
    bd1 = params["bd1"].reshape(1, CONV_OUT)

    # fused, lane-dense output head: lanes [0:8] = gesture, [8:18] = domain
    whg = (jnp.zeros((H, OUT_LANES), F32)
           .at[:, :NUM_CLASSES].set(params["wg"].T)).astype(BF16)
    whd = (jnp.zeros((CONV_OUT, OUT_LANES), F32)
           .at[:, NUM_CLASSES:NUM_CLASSES + NUM_SUBJECTS].set(params["wd2"].T)).astype(BF16)
    bh = (jnp.zeros((1, OUT_LANES), F32)
          .at[0, :NUM_CLASSES].set(params["bg"])
          .at[0, NUM_CLASSES:NUM_CLASSES + NUM_SUBJECTS].set(params["bd2"]))

    def cst(shape):
        # Weight block: full array, constant index_map -> stays VMEM-resident
        # across grid steps (no re-DMA).  Index maps also receive the scalar-
        # prefetch ref (positional trailing arg) and ignore it.
        return pl.BlockSpec(shape, lambda g, thr: (0, 0))

    grid_spec = pltpu.PrefetchScalarGridSpec(
        num_scalar_prefetch=1,                                        # thresholds -> SMEM
        grid=(G_,),
        in_specs=[
            pl.BlockSpec((Tn * Bn, K * Fn), lambda g, thr: (g, 0)),   # per-group im2col block
            cst((K * Fn, CONV_OUT)),                                  # wconv
            cst((1, CONV_OUT)), cst((1, CONV_OUT)),                   # gamma, beta
            cst((CONV_OUT, 4 * H)), cst((H, 4 * H)), cst((1, 4 * H)), # w_ih1, w_hh1, b1
            cst((H, 4 * H)), cst((H, 4 * H)), cst((1, 4 * H)),        # w_ih2, w_hh2, b2
            cst((H, CONV_OUT)), cst((1, CONV_OUT)),                   # wd1, bd1
            cst((H, OUT_LANES)), cst((CONV_OUT, OUT_LANES)),          # whg, whd
            cst((1, OUT_LANES)),                                      # bh
        ],
        out_specs=pl.BlockSpec((Bn, OUT_LANES), lambda g, thr: (g, 0)),
    )

    out = pl.pallas_call(
        _sclstm_dann_kernel,
        out_shape=jax.ShapeDtypeStruct((G_ * Bn, OUT_LANES), F32),
        grid_spec=grid_spec,
        compiler_params=pltpu.CompilerParams(dimension_semantics=("parallel",)),
        cost_estimate=pl.CostEstimate(flops=3_400_000 * G_,
                                      transcendentals=40_000 * G_,
                                      bytes_accessed=120_000 * G_),
    )(
        params["thr"], xim, wconv,
        params["bn_gamma"], params["bn_beta"],
        w_ih1, w_hh1, b1,
        w_ih2, w_hh2, b2,
        wd1, bd1,
        whg, whd, bh,
    )

    gesture = out[:, :NUM_CLASSES].reshape(G_, Bn, NUM_CLASSES)
    domain = out[:, NUM_CLASSES:NUM_CLASSES + NUM_SUBJECTS].reshape(G_, Bn, NUM_SUBJECTS)
    return gesture, domain


_forward_jit = jax.jit(_forward_impl)


def sclstm_dann_forward(x, params, alpha=1.0):
    """x: (T, B, F) single batch, or (G, T, B, F) stack of independent batches.

    GradientReversal is identity in the forward pass; alpha only affects backward.
    """
    del alpha
    if x.ndim == 3:
        g_out, d_out = _forward_jit(x[None], params)
        return g_out[0], d_out[0]
    return _forward_jit(x, params)


if __name__ == "__main__":
    key = jax.random.PRNGKey(0)
    k_x, k_p = jax.random.split(key)

    G = 2   # macro-batch: 2 independent (T, B, F) batches over a parallel grid
    x = jax.random.normal(k_x, (G, T, B, F), F32)
    params = init_params(k_p)

    gesture_out, domain_out = sclstm_dann_forward(x, params, alpha=1.0)
    jax.block_until_ready((gesture_out, domain_out))

    assert gesture_out.shape == (G, B, NUM_CLASSES)
    assert domain_out.shape == (G, B, NUM_SUBJECTS)
    assert bool(jnp.all(jnp.isfinite(gesture_out)))
    assert bool(jnp.all(jnp.isfinite(domain_out)))
    print("KERNEL_OK")
</pallas_src>

<mosaic_0001>
module attributes {stable_mosaic.version = 11 : i64} {
  func.func @_sclstm_dann_kernel(%arg0: i32, %arg1: memref<4xf32, #tpu.memory_space<smem>>, %arg2: memref<64x70xbf16, #tpu.memory_space<vmem>>, %arg3: memref<70x64xbf16, #tpu.memory_space<vmem>>, %arg4: memref<1x64xf32, #tpu.memory_space<vmem>>, %arg5: memref<1x64xf32, #tpu.memory_space<vmem>>, %arg6: memref<64x128xbf16, #tpu.memory_space<vmem>>, %arg7: memref<32x128xbf16, #tpu.memory_space<vmem>>, %arg8: memref<1x128xf32, #tpu.memory_space<vmem>>, %arg9: memref<32x128xbf16, #tpu.memory_space<vmem>>, %arg10: memref<32x128xbf16, #tpu.memory_space<vmem>>, %arg11: memref<1x128xf32, #tpu.memory_space<vmem>>, %arg12: memref<32x64xbf16, #tpu.memory_space<vmem>>, %arg13: memref<1x64xf32, #tpu.memory_space<vmem>>, %arg14: memref<32x128xbf16, #tpu.memory_space<vmem>>, %arg15: memref<64x128xbf16, #tpu.memory_space<vmem>>, %arg16: memref<1x128xf32, #tpu.memory_space<vmem>>, %arg17: memref<8x128xf32, #tpu.memory_space<vmem>>) attributes {dimension_semantics = [#tpu.dimension_semantics<parallel>], iteration_bounds = array<i64: 2>, scalar_prefetch = 1 : i64, scratch_operands = 0 : i64, tpu.core_type = #tpu.core_type<tc>, window_params = [{transform_indices = @transform_0, window_bounds = array<i64: 64, 70>}, {pipeline_mode = #tpu.pipeline_mode<synchronous>, transform_indices = @transform_1, window_bounds = array<i64: 70, 64>}, {pipeline_mode = #tpu.pipeline_mode<synchronous>, transform_indices = @transform_2, window_bounds = array<i64: 1, 64>}, {pipeline_mode = #tpu.pipeline_mode<synchronous>, transform_indices = @transform_3, window_bounds = array<i64: 1, 64>}, {pipeline_mode = #tpu.pipeline_mode<synchronous>, transform_indices = @transform_4, window_bounds = array<i64: 64, 128>}, {pipeline_mode = #tpu.pipeline_mode<synchronous>, transform_indices = @transform_5, window_bounds = array<i64: 32, 128>}, {pipeline_mode = #tpu.pipeline_mode<synchronous>, transform_indices = @transform_6, window_bounds = array<i64: 1, 128>}, {pipeline_mode = #tpu.pipeline_mode<synchronous>, transform_indices = @transform_7, window_bounds = array<i64: 32, 128>}, {pipeline_mode = #tpu.pipeline_mode<synchronous>, transform_indices = @transform_8, window_bounds = array<i64: 32, 128>}, {pipeline_mode = #tpu.pipeline_mode<synchronous>, transform_indices = @transform_9, window_bounds = array<i64: 1, 128>}, {pipeline_mode = #tpu.pipeline_mode<synchronous>, transform_indices = @transform_10, window_bounds = array<i64: 32, 64>}, {pipeline_mode = #tpu.pipeline_mode<synchronous>, transform_indices = @transform_11, window_bounds = array<i64: 1, 64>}, {pipeline_mode = #tpu.pipeline_mode<synchronous>, transform_indices = @transform_12, window_bounds = array<i64: 32, 128>}, {pipeline_mode = #tpu.pipeline_mode<synchronous>, transform_indices = @transform_13, window_bounds = array<i64: 64, 128>}, {pipeline_mode = #tpu.pipeline_mode<synchronous>, transform_indices = @transform_14, window_bounds = array<i64: 1, 128>}, {transform_indices = @transform_15, window_bounds = array<i64: 8, 128>}]} {
    %c0 = arith.constant 0 : index
    %0 = memref.load %arg1[%c0] : memref<4xf32, #tpu.memory_space<smem>>
    %c1 = arith.constant 1 : index
    %1 = memref.load %arg1[%c1] : memref<4xf32, #tpu.memory_space<smem>>
    %c3 = arith.constant 3 : index
    %2 = memref.load %arg1[%c3] : memref<4xf32, #tpu.memory_space<smem>>
    %c0_0 = arith.constant 0 : index
    %c0_1 = arith.constant 0 : index
    %3 = vector.load %arg2[%c0_0, %c0_1] : memref<64x70xbf16, #tpu.memory_space<vmem>>, vector<64x70xbf16>
    %c0_2 = arith.constant 0 : index
    %c0_3 = arith.constant 0 : index
    %4 = vector.load %arg3[%c0_2, %c0_3] : memref<70x64xbf16, #tpu.memory_space<vmem>>, vector<70x64xbf16>
    %cst = arith.constant dense<0.000000e+00> : vector<64x64xf32>
    %5 = tpu.matmul %3, %4, %cst {dimension_numbers = #tpu.dot_dimension_numbers<[1], [0], [0], [1], [0, 0, 1, 1], [], []>} : vector<64x70xbf16>, vector<70x64xbf16>, vector<64x64xf32> -> vector<64x64xf32>
    %cst_4 = arith.constant dense<0.000000e+00> : vector<64xf32>
    %6 = vector.multi_reduction <add>, %5, %cst_4 [0] : vector<64x64xf32> to vector<64xf32>
    %7 = vector.shape_cast %6 : vector<64xf32> to vector<1x64xf32>
    %cst_5 = arith.constant 6.400000e+01 : f32
    %8 = vector.broadcast %cst_5 : f32 to vector<1x64xf32>
    %9 = arith.divf %7, %8 : vector<1x64xf32>
    %10 = vector.broadcast %9 : vector<1x64xf32> to vector<64x64xf32>
    %11 = arith.subf %5, %10 : vector<64x64xf32>
    %12 = arith.mulf %11, %11 : vector<64x64xf32>
    %cst_6 = arith.constant dense<0.000000e+00> : vector<64xf32>
    %13 = vector.multi_reduction <add>, %12, %cst_6 [0] : vector<64x64xf32> to vector<64xf32>
    %14 = vector.shape_cast %13 : vector<64xf32> to vector<1x64xf32>
    %cst_7 = arith.constant 6.400000e+01 : f32
    %15 = vector.broadcast %cst_7 : f32 to vector<1x64xf32>
    %16 = arith.divf %14, %15 : vector<1x64xf32>
    %cst_8 = arith.constant 9.99999974E-6 : f32
    %17 = vector.broadcast %cst_8 : f32 to vector<1x64xf32>
    %18 = arith.addf %16, %17 : vector<1x64xf32>
    %19 = math.rsqrt %18 : vector<1x64xf32>
    %20 = vector.broadcast %19 : vector<1x64xf32> to vector<64x64xf32>
    %21 = arith.mulf %11, %20 : vector<64x64xf32>
    %c0_9 = arith.constant 0 : index
    %c0_10 = arith.constant 0 : index
    %22 = vector.load %arg4[%c0_9, %c0_10] : memref<1x64xf32, #tpu.memory_space<vmem>>, vector<1x64xf32>
    %23 = vector.broadcast %22 : vector<1x64xf32> to vector<64x64xf32>
    %24 = arith.mulf %21, %23 : vector<64x64xf32>
    %c0_11 = arith.constant 0 : index
    %c0_12 = arith.constant 0 : index
    %25 = vector.load %arg5[%c0_11, %c0_12] : memref<1x64xf32, #tpu.memory_space<vmem>>, vector<1x64xf32>
    %26 = vector.broadcast %25 : vector<1x64xf32> to vector<64x64xf32>
    %27 = arith.addf %24, %26 : vector<64x64xf32>
    %28 = vector.broadcast %0 : f32 to vector<64x64xf32>
    %29 = arith.cmpf ogt, %27, %28 : vector<64x64xf32>
    %cst_13 = arith.constant 1.000000e+00 : f32
    %cst_14 = arith.constant 0.000000e+00 : f32
    %30 = vector.broadcast %cst_13 : f32 to vector<64x64xf32>
    %31 = vector.broadcast %cst_14 : f32 to vector<64x64xf32>
    %32 = arith.select %29, %30, %31 : vector<64x64xi1>, vector<64x64xf32>
    %33 = arith.truncf %32 : vector<64x64xf32> to vector<64x64xbf16>
    %c0_15 = arith.constant 0 : index
    %c0_16 = arith.constant 0 : index
    %34 = vector.load %arg6[%c0_15, %c0_16] : memref<64x128xbf16, #tpu.memory_space<vmem>>, vector<64x128xbf16>
    %cst_17 = arith.constant dense<0.000000e+00> : vector<64x128xf32>
    %35 = tpu.matmul %33, %34, %cst_17 {dimension_numbers = #tpu.dot_dimension_numbers<[1], [0], [0], [1], [0, 0, 1, 1], [], []>} : vector<64x64xbf16>, vector<64x128xbf16>, vector<64x128xf32> -> vector<64x128xf32>
    %c0_18 = arith.constant 0 : index
    %c0_19 = arith.constant 0 : index
    %36 = vector.load %arg8[%c0_18, %c0_19] : memref<1x128xf32, #tpu.memory_space<vmem>>, vector<1x128xf32>
    %37 = vector.broadcast %36 : vector<1x128xf32> to vector<64x128xf32>
    %38 = arith.addf %35, %37 : vector<64x128xf32>
    %c0_20 = arith.constant 0 : index
    %c0_21 = arith.constant 0 : index
    %39 = vector.load %arg7[%c0_20, %c0_21] : memref<32x128xbf16, #tpu.memory_space<vmem>>, vector<32x128xbf16>
    %c0_22 = arith.constant 0 : index
    %c0_23 = arith.constant 0 : index
    %40 = vector.load %arg9[%c0_22, %c0_23] : memref<32x128xbf16, #tpu.memory_space<vmem>>, vector<32x128xbf16>
    %c0_24 = arith.constant 0 : index
    %c0_25 = arith.constant 0 : index
    %41 = vector.load %arg10[%c0_24, %c0_25] : memref<32x128xbf16, #tpu.memory_space<vmem>>, vector<32x128xbf16>
    %c0_26 = arith.constant 0 : index
    %c0_27 = arith.constant 0 : index
    %42 = vector.load %arg11[%c0_26, %c0_27] : memref<1x128xf32, #tpu.memory_space<vmem>>, vector<1x128xf32>
    %cst_28 = arith.constant 0.000000e+00 : f32
    %43 = vector.broadcast %cst_28 : f32 to vector<8x32xf32>
    %cst_29 = arith.constant 0.000000e+00 : f32
    %44 = vector.broadcast %cst_29 : f32 to vector<8x32xf32>
    %cst_30 = arith.constant 0.000000e+00 : f32
    %45 = vector.broadcast %cst_30 : f32 to vector<8x32xf32>
    %cst_31 = arith.constant 0.000000e+00 : f32
    %46 = vector.broadcast %cst_31 : f32 to vector<8x32xf32>
    %cst_32 = arith.constant 0.000000e+00 : f32
    %47 = vector.broadcast %cst_32 : f32 to vector<8x32xf32>
    %48 = arith.truncf %43 : vector<8x32xf32> to vector<8x32xbf16>
    %cst_33 = arith.constant dense<0.000000e+00> : vector<8x128xf32>
    %49 = tpu.matmul %48, %39, %cst_33 {dimension_numbers = #tpu.dot_dimension_numbers<[1], [0], [0], [1], [0, 0, 1, 1], [], []>} : vector<8x32xbf16>, vector<32x128xbf16>, vector<8x128xf32> -> vector<8x128xf32>
    %50 = arith.truncf %45 : vector<8x32xf32> to vector<8x32xbf16>
    %cst_34 = arith.constant dense<0.000000e+00> : vector<8x128xf32>
    %51 = tpu.matmul %50, %41, %cst_34 {dimension_numbers = #tpu.dot_dimension_numbers<[1], [0], [0], [1], [0, 0, 1, 1], [], []>} : vector<8x32xbf16>, vector<32x128xbf16>, vector<8x128xf32> -> vector<8x128xf32>
    %52 = vector.extract_strided_slice %38 {offsets = [0, 0], sizes = [8, 128], strides = [1, 1]} : vector<64x128xf32> to vector<8x128xf32>
    %53 = arith.addf %52, %49 : vector<8x128xf32>
    %54 = arith.negf %53 : vector<8x128xf32>
    %55 = math.exp %54 : vector<8x128xf32>
    %cst_35 = arith.constant 1.000000e+00 : f32
    %56 = vector.broadcast %cst_35 : f32 to vector<8x128xf32>
    %57 = arith.addf %56, %55 : vector<8x128xf32>
    %58 = arith.divf %56, %57 : vector<8x128xf32>
    %59 = math.tanh %53 : vector<8x128xf32>
    %60 = vector.extract_strided_slice %58 {offsets = [0, 0], sizes = [8, 32], strides = [1, 1]} : vector<8x128xf32> to vector<8x32xf32>
    %61 = vector.extract_strided_slice %58 {offsets = [0, 32], sizes = [8, 32], strides = [1, 1]} : vector<8x128xf32> to vector<8x32xf32>
    %62 = vector.extract_strided_slice %59 {offsets = [0, 64], sizes = [8, 32], strides = [1, 1]} : vector<8x128xf32> to vector<8x32xf32>
    %63 = vector.extract_strided_slice %58 {offsets = [0, 96], sizes = [8, 32], strides = [1, 1]} : vector<8x128xf32> to vector<8x32xf32>
    %64 = arith.mulf %61, %44 : vector<8x32xf32>
    %65 = arith.mulf %60, %62 : vector<8x32xf32>
    %66 = arith.addf %64, %65 : vector<8x32xf32>
    %67 = math.tanh %66 : vector<8x32xf32>
    %68 = arith.mulf %63, %67 : vector<8x32xf32>
    %69 = vector.broadcast %1 : f32 to vector<8x32xf32>
    %70 = arith.cmpf ogt, %68, %69 : vector<8x32xf32>
    %cst_36 = arith.constant 1.000000e+00 : f32
    %cst_37 = arith.constant 0.000000e+00 : f32
    %71 = vector.broadcast %cst_36 : f32 to vector<8x32xf32>
    %72 = vector.broadcast %cst_37 : f32 to vector<8x32xf32>
    %73 = arith.select %70, %71, %72 : vector<8x32xi1>, vector<8x32xf32>
    %74 = arith.truncf %73 : vector<8x32xf32> to vector<8x32xbf16>
    %cst_38 = arith.constant dense<0.000000e+00> : vector<8x128xf32>
    %75 = tpu.matmul %74, %40, %cst_38 {dimension_numbers = #tpu.dot_dimension_numbers<[1], [0], [0], [1], [0, 0, 1, 1], [], []>} : vector<8x32xbf16>, vector<32x128xbf16>, vector<8x128xf32> -> vector<8x128xf32>
    %76 = arith.addf %75, %51 : vector<8x128xf32>
    %77 = vector.broadcast %42 : vector<1x128xf32> to vector<8x128xf32>
    %78 = arith.addf %76, %77 : vector<8x128xf32>
    %79 = arith.negf %78 : vector<8x128xf32>
    %80 = math.exp %79 : vector<8x128xf32>
    %cst_39 = arith.constant 1.000000e+00 : f32
    %81 = vector.broadcast %cst_39 : f32 to vector<8x128xf32>
    %82 = arith.addf %81, %80 : vector<8x128xf32>
    %83 = arith.divf %81, %82 : vector<8x128xf32>
    %84 = math.tanh %78 : vector<8x128xf32>
    %85 = vector.extract_strided_slice %83 {offsets = [0, 0], sizes = [8, 32], strides = [1, 1]} : vector<8x128xf32> to vector<8x32xf32>
    %86 = vector.extract_strided_slice %83 {offsets = [0, 32], sizes = [8, 32], strides = [1, 1]} : vector<8x128xf32> to vector<8x32xf32>
    %87 = vector.extract_strided_slice %84 {offsets = [0, 64], sizes = [8, 32], strides = [1, 1]} : vector<8x128xf32> to vector<8x32xf32>
    %88 = vector.extract_strided_slice %83 {offsets = [0, 96], sizes = [8, 32], strides = [1, 1]} : vector<8x128xf32> to vector<8x32xf32>
    %89 = arith.mulf %86, %46 : vector<8x32xf32>
    %90 = arith.mulf %85, %87 : vector<8x32xf32>
    %91 = arith.addf %89, %90 : vector<8x32xf32>
    %92 = math.tanh %91 : vector<8x32xf32>
    %93 = arith.mulf %88, %92 : vector<8x32xf32>
    %94 = arith.addf %47, %93 : vector<8x32xf32>
    %95 = arith.truncf %68 : vector<8x32xf32> to vector<8x32xbf16>
    %cst_40 = arith.constant dense<0.000000e+00> : vector<8x128xf32>
    %96 = tpu.matmul %95, %39, %cst_40 {dimension_numbers = #tpu.dot_dimension_numbers<[1], [0], [0], [1], [0, 0, 1, 1], [], []>} : vector<8x32xbf16>, vector<32x128xbf16>, vector<8x128xf32> -> vector<8x128xf32>
    %97 = arith.truncf %93 : vector<8x32xf32> to vector<8x32xbf16>
    %cst_41 = arith.constant dense<0.000000e+00> : vector<8x128xf32>
    %98 = tpu.matmul %97, %41, %cst_41 {dimension_numbers = #tpu.dot_dimension_numbers<[1], [0], [0], [1], [0, 0, 1, 1], [], []>} : vector<8x32xbf16>, vector<32x128xbf16>, vector<8x128xf32> -> vector<8x128xf32>
    %99 = vector.extract_strided_slice %38 {offsets = [8, 0], sizes = [8, 128], strides = [1, 1]} : vector<64x128xf32> to vector<8x128xf32>
    %100 = arith.addf %99, %96 : vector<8x128xf32>
    %101 = arith.negf %100 : vector<8x128xf32>
    %102 = math.exp %101 : vector<8x128xf32>
    %cst_42 = arith.constant 1.000000e+00 : f32
    %103 = vector.broadcast %cst_42 : f32 to vector<8x128xf32>
    %104 = arith.addf %103, %102 : vector<8x128xf32>
    %105 = arith.divf %103, %104 : vector<8x128xf32>
    %106 = math.tanh %100 : vector<8x128xf32>
    %107 = vector.extract_strided_slice %105 {offsets = [0, 0], sizes = [8, 32], strides = [1, 1]} : vector<8x128xf32> to vector<8x32xf32>
    %108 = vector.extract_strided_slice %105 {offsets = [0, 32], sizes = [8, 32], strides = [1, 1]} : vector<8x128xf32> to vector<8x32xf32>
    %109 = vector.extract_strided_slice %106 {offsets = [0, 64], sizes = [8, 32], strides = [1, 1]} : vector<8x128xf32> to vector<8x32xf32>
    %110 = vector.extract_strided_slice %105 {offsets = [0, 96], sizes = [8, 32], strides = [1, 1]} : vector<8x128xf32> to vector<8x32xf32>
    %111 = arith.mulf %108, %66 : vector<8x32xf32>
    %112 = arith.mulf %107, %109 : vector<8x32xf32>
    %113 = arith.addf %111, %112 : vector<8x32xf32>
    %114 = math.tanh %113 : vector<8x32xf32>
    %115 = arith.mulf %110, %114 : vector<8x32xf32>
    %116 = vector.broadcast %1 : f32 to vector<8x32xf32>
    %117 = arith.cmpf ogt, %115, %116 : vector<8x32xf32>
    %cst_43 = arith.constant 1.000000e+00 : f32
    %cst_44 = arith.constant 0.000000e+00 : f32
    %118 = vector.broadcast %cst_43 : f32 to vector<8x32xf32>
    %119 = vector.broadcast %cst_44 : f32 to vector<8x32xf32>
    %120 = arith.select %117, %118, %119 : vector<8x32xi1>, vector<8x32xf32>
    %121 = arith.truncf %120 : vector<8x32xf32> to vector<8x32xbf16>
    %cst_45 = arith.constant dense<0.000000e+00> : vector<8x128xf32>
    %122 = tpu.matmul %121, %40, %cst_45 {dimension_numbers = #tpu.dot_dimension_numbers<[1], [0], [0], [1], [0, 0, 1, 1], [], []>} : vector<8x32xbf16>, vector<32x128xbf16>, vector<8x128xf32> -> vector<8x128xf32>
    %123 = arith.addf %122, %98 : vector<8x128xf32>
    %124 = vector.broadcast %42 : vector<1x128xf32> to vector<8x128xf32>
    %125 = arith.addf %123, %124 : vector<8x128xf32>
    %126 = arith.negf %125 : vector<8x128xf32>
    %127 = math.exp %126 : vector<8x128xf32>
    %cst_46 = arith.constant 1.000000e+00 : f32
    %128 = vector.broadcast %cst_46 : f32 to vector<8x128xf32>
    %129 = arith.addf %128, %127 : vector<8x128xf32>
    %130 = arith.divf %128, %129 : vector<8x128xf32>
    %131 = math.tanh %125 : vector<8x128xf32>
    %132 = vector.extract_strided_slice %130 {offsets = [0, 0], sizes = [8, 32], strides = [1, 1]} : vector<8x128xf32> to vector<8x32xf32>
    %133 = vector.extract_strided_slice %130 {offsets = [0, 32], sizes = [8, 32], strides = [1, 1]} : vector<8x128xf32> to vector<8x32xf32>
    %134 = vector.extract_strided_slice %131 {offsets = [0, 64], sizes = [8, 32], strides = [1, 1]} : vector<8x128xf32> to vector<8x32xf32>
    %135 = vector.extract_strided_slice %130 {offsets = [0, 96], sizes = [8, 32], strides = [1, 1]} : vector<8x128xf32> to vector<8x32xf32>
    %136 = arith.mulf %133, %91 : vector<8x32xf32>
    %137 = arith.mulf %132, %134 : vector<8x32xf32>
    %138 = arith.addf %136, %137 : vector<8x32xf32>
    %139 = math.tanh %138 : vector<8x32xf32>
    %140 = arith.mulf %135, %139 : vector<8x32xf32>
    %141 = arith.addf %94, %140 : vector<8x32xf32>
    %142 = arith.truncf %115 : vector<8x32xf32> to vector<8x32xbf16>
    %cst_47 = arith.constant dense<0.000000e+00> : vector<8x128xf32>
    %143 = tpu.matmul %142, %39, %cst_47 {dimension_numbers = #tpu.dot_dimension_numbers<[1], [0], [0], [1], [0, 0, 1, 1], [], []>} : vector<8x32xbf16>, vector<32x128xbf16>, vector<8x128xf32> -> vector<8x128xf32>
    %144 = arith.truncf %140 : vector<8x32xf32> to vector<8x32xbf16>
    %cst_48 = arith.constant dense<0.000000e+00> : vector<8x128xf32>
    %145 = tpu.matmul %144, %41, %cst_48 {dimension_numbers = #tpu.dot_dimension_numbers<[1], [0], [0], [1], [0, 0, 1, 1], [], []>} : vector<8x32xbf16>, vector<32x128xbf16>, vector<8x128xf32> -> vector<8x128xf32>
    %146 = vector.extract_strided_slice %38 {offsets = [16, 0], sizes = [8, 128], strides = [1, 1]} : vector<64x128xf32> to vector<8x128xf32>
    %147 = arith.addf %146, %143 : vector<8x128xf32>
    %148 = arith.negf %147 : vector<8x128xf32>
    %149 = math.exp %148 : vector<8x128xf32>
    %cst_49 = arith.constant 1.000000e+00 : f32
    %150 = vector.broadcast %cst_49 : f32 to vector<8x128xf32>
    %151 = arith.addf %150, %149 : vector<8x128xf32>
    %152 = arith.divf %150, %151 : vector<8x128xf32>
    %153 = math.tanh %147 : vector<8x128xf32>
    %154 = vector.extract_strided_slice %152 {offsets = [0, 0], sizes = [8, 32], strides = [1, 1]} : vector<8x128xf32> to vector<8x32xf32>
    %155 = vector.extract_strided_slice %152 {offsets = [0, 32], sizes = [8, 32], strides = [1, 1]} : vector<8x128xf32> to vector<8x32xf32>
    %156 = vector.extract_strided_slice %153 {offsets = [0, 64], sizes = [8, 32], strides = [1, 1]} : vector<8x128xf32> to vector<8x32xf32>
    %157 = vector.extract_strided_slice %152 {offsets = [0, 96], sizes = [8, 32], strides = [1, 1]} : vector<8x128xf32> to vector<8x32xf32>
    %158 = arith.mulf %155, %113 : vector<8x32xf32>
    %159 = arith.mulf %154, %156 : vector<8x32xf32>
    %160 = arith.addf %158, %159 : vector<8x32xf32>
    %161 = math.tanh %160 : vector<8x32xf32>
    %162 = arith.mulf %157, %161 : vector<8x32xf32>
    %163 = vector.broadcast %1 : f32 to vector<8x32xf32>
    %164 = arith.cmpf ogt, %162, %163 : vector<8x32xf32>
    %cst_50 = arith.constant 1.000000e+00 : f32
    %cst_51 = arith.constant 0.000000e+00 : f32
    %165 = vector.broadcast %cst_50 : f32 to vector<8x32xf32>
    %166 = vector.broadcast %cst_51 : f32 to vector<8x32xf32>
    %167 = arith.select %164, %165, %166 : vector<8x32xi1>, vector<8x32xf32>
    %168 = arith.truncf %167 : vector<8x32xf32> to vector<8x32xbf16>
    %cst_52 = arith.constant dense<0.000000e+00> : vector<8x128xf32>
    %169 = tpu.matmul %168, %40, %cst_52 {dimension_numbers = #tpu.dot_dimension_numbers<[1], [0], [0], [1], [0, 0, 1, 1], [], []>} : vector<8x32xbf16>, vector<32x128xbf16>, vector<8x128xf32> -> vector<8x128xf32>
    %170 = arith.addf %169, %145 : vector<8x128xf32>
    %171 = vector.broadcast %42 : vector<1x128xf32> to vector<8x128xf32>
    %172 = arith.addf %170, %171 : vector<8x128xf32>
    %173 = arith.negf %172 : vector<8x128xf32>
    %174 = math.exp %173 : vector<8x128xf32>
    %cst_53 = arith.constant 1.000000e+00 : f32
    %175 = vector.broadcast %cst_53 : f32 to vector<8x128xf32>
    %176 = arith.addf %175, %174 : vector<8x128xf32>
    %177 = arith.divf %175, %176 : vector<8x128xf32>
    %178 = math.tanh %172 : vector<8x128xf32>
    %179 = vector.extract_strided_slice %177 {offsets = [0, 0], sizes = [8, 32], strides = [1, 1]} : vector<8x128xf32> to vector<8x32xf32>
    %180 = vector.extract_strided_slice %177 {offsets = [0, 32], sizes = [8, 32], strides = [1, 1]} : vector<8x128xf32> to vector<8x32xf32>
    %181 = vector.extract_strided_slice %178 {offsets = [0, 64], sizes = [8, 32], strides = [1, 1]} : vector<8x128xf32> to vector<8x32xf32>
    %182 = vector.extract_strided_slice %177 {offsets = [0, 96], sizes = [8, 32], strides = [1, 1]} : vector<8x128xf32> to vector<8x32xf32>
    %183 = arith.mulf %180, %138 : vector<8x32xf32>
    %184 = arith.mulf %179, %181 : vector<8x32xf32>
    %185 = arith.addf %183, %184 : vector<8x32xf32>
    %186 = math.tanh %185 : vector<8x32xf32>
    %187 = arith.mulf %182, %186 : vector<8x32xf32>
    %188 = arith.addf %141, %187 : vector<8x32xf32>
    %189 = arith.truncf %162 : vector<8x32xf32> to vector<8x32xbf16>
    %cst_54 = arith.constant dense<0.000000e+00> : vector<8x128xf32>
    %190 = tpu.matmul %189, %39, %cst_54 {dimension_numbers = #tpu.dot_dimension_numbers<[1], [0], [0], [1], [0, 0, 1, 1], [], []>} : vector<8x32xbf16>, vector<32x128xbf16>, vector<8x128xf32> -> vector<8x128xf32>
    %191 = arith.truncf %187 : vector<8x32xf32> to vector<8x32xbf16>
    %cst_55 = arith.constant dense<0.000000e+00> : vector<8x128xf32>
    %192 = tpu.matmul %191, %41, %cst_55 {dimension_numbers = #tpu.dot_dimension_numbers<[1], [0], [0], [1], [0, 0, 1, 1], [], []>} : vector<8x32xbf16>, vector<32x128xbf16>, vector<8x128xf32> -> vector<8x128xf32>
    %193 = vector.extract_strided_slice %38 {offsets = [24, 0], sizes = [8, 128], strides = [1, 1]} : vector<64x128xf32> to vector<8x128xf32>
    %194 = arith.addf %193, %190 : vector<8x128xf32>
    %195 = arith.negf %194 : vector<8x128xf32>
    %196 = math.exp %195 : vector<8x128xf32>
    %cst_56 = arith.constant 1.000000e+00 : f32
    %197 = vector.broadcast %cst_56 : f32 to vector<8x128xf32>
    %198 = arith.addf %197, %196 : vector<8x128xf32>
    %199 = arith.divf %197, %198 : vector<8x128xf32>
    %200 = math.tanh %194 : vector<8x128xf32>
    %201 = vector.extract_strided_slice %199 {offsets = [0, 0], sizes = [8, 32], strides = [1, 1]} : vector<8x128xf32> to vector<8x32xf32>
    %202 = vector.extract_strided_slice %199 {offsets = [0, 32], sizes = [8, 32], strides = [1, 1]} : vector<8x128xf32> to vector<8x32xf32>
    %203 = vector.extract_strided_slice %200 {offsets = [0, 64], sizes = [8, 32], strides = [1, 1]} : vector<8x128xf32> to vector<8x32xf32>
    %204 = vector.extract_strided_slice %199 {offsets = [0, 96], sizes = [8, 32], strides = [1, 1]} : vector<8x128xf32> to vector<8x32xf32>
    %205 = arith.mulf %202, %160 : vector<8x32xf32>
    %206 = arith.mulf %201, %203 : vector<8x32xf32>
    %207 = arith.addf %205, %206 : vector<8x32xf32>
    %208 = math.tanh %207 : vector<8x32xf32>
    %209 = arith.mulf %204, %208 : vector<8x32xf32>
    %210 = vector.broadcast %1 : f32 to vector<8x32xf32>
    %211 = arith.cmpf ogt, %209, %210 : vector<8x32xf32>
    %cst_57 = arith.constant 1.000000e+00 : f32
    %cst_58 = arith.constant 0.000000e+00 : f32
    %212 = vector.broadcast %cst_57 : f32 to vector<8x32xf32>
    %213 = vector.broadcast %cst_58 : f32 to vector<8x32xf32>
    %214 = arith.select %211, %212, %213 : vector<8x32xi1>, vector<8x32xf32>
    %215 = arith.truncf %214 : vector<8x32xf32> to vector<8x32xbf16>
    %cst_59 = arith.constant dense<0.000000e+00> : vector<8x128xf32>
    %216 = tpu.matmul %215, %40, %cst_59 {dimension_numbers = #tpu.dot_dimension_numbers<[1], [0], [0], [1], [0, 0, 1, 1], [], []>} : vector<8x32xbf16>, vector<32x128xbf16>, vector<8x128xf32> -> vector<8x128xf32>
    %217 = arith.addf %216, %192 : vector<8x128xf32>
    %218 = vector.broadcast %42 : vector<1x128xf32> to vector<8x128xf32>
    %219 = arith.addf %217, %218 : vector<8x128xf32>
    %220 = arith.negf %219 : vector<8x128xf32>
    %221 = math.exp %220 : vector<8x128xf32>
    %cst_60 = arith.constant 1.000000e+00 : f32
    %222 = vector.broadcast %cst_60 : f32 to vector<8x128xf32>
    %223 = arith.addf %222, %221 : vector<8x128xf32>
    %224 = arith.divf %222, %223 : vector<8x128xf32>
    %225 = math.tanh %219 : vector<8x128xf32>
    %226 = vector.extract_strided_slice %224 {offsets = [0, 0], sizes = [8, 32], strides = [1, 1]} : vector<8x128xf32> to vector<8x32xf32>
    %227 = vector.extract_strided_slice %224 {offsets = [0, 32], sizes = [8, 32], strides = [1, 1]} : vector<8x128xf32> to vector<8x32xf32>
    %228 = vector.extract_strided_slice %225 {offsets = [0, 64], sizes = [8, 32], strides = [1, 1]} : vector<8x128xf32> to vector<8x32xf32>
    %229 = vector.extract_strided_slice %224 {offsets = [0, 96], sizes = [8, 32], strides = [1, 1]} : vector<8x128xf32> to vector<8x32xf32>
    %230 = arith.mulf %227, %185 : vector<8x32xf32>
    %231 = arith.mulf %226, %228 : vector<8x32xf32>
    %232 = arith.addf %230, %231 : vector<8x32xf32>
    %233 = math.tanh %232 : vector<8x32xf32>
    %234 = arith.mulf %229, %233 : vector<8x32xf32>
    %235 = arith.addf %188, %234 : vector<8x32xf32>
    %236 = arith.truncf %209 : vector<8x32xf32> to vector<8x32xbf16>
    %cst_61 = arith.constant dense<0.000000e+00> : vector<8x128xf32>
    %237 = tpu.matmul %236, %39, %cst_61 {dimension_numbers = #tpu.dot_dimension_numbers<[1], [0], [0], [1], [0, 0, 1, 1], [], []>} : vector<8x32xbf16>, vector<32x128xbf16>, vector<8x128xf32> -> vector<8x128xf32>
    %238 = arith.truncf %234 : vector<8x32xf32> to vector<8x32xbf16>
    %cst_62 = arith.constant dense<0.000000e+00> : vector<8x128xf32>
    %239 = tpu.matmul %238, %41, %cst_62 {dimension_numbers = #tpu.dot_dimension_numbers<[1], [0], [0], [1], [0, 0, 1, 1], [], []>} : vector<8x32xbf16>, vector<32x128xbf16>, vector<8x128xf32> -> vector<8x128xf32>
    %240 = vector.extract_strided_slice %38 {offsets = [32, 0], sizes = [8, 128], strides = [1, 1]} : vector<64x128xf32> to vector<8x128xf32>
    %241 = arith.addf %240, %237 : vector<8x128xf32>
    %242 = arith.negf %241 : vector<8x128xf32>
    %243 = math.exp %242 : vector<8x128xf32>
    %cst_63 = arith.constant 1.000000e+00 : f32
    %244 = vector.broadcast %cst_63 : f32 to vector<8x128xf32>
    %245 = arith.addf %244, %243 : vector<8x128xf32>
    %246 = arith.divf %244, %245 : vector<8x128xf32>
    %247 = math.tanh %241 : vector<8x128xf32>
    %248 = vector.extract_strided_slice %246 {offsets = [0, 0], sizes = [8, 32], strides = [1, 1]} : vector<8x128xf32> to vector<8x32xf32>
    %249 = vector.extract_strided_slice %246 {offsets = [0, 32], sizes = [8, 32], strides = [1, 1]} : vector<8x128xf32> to vector<8x32xf32>
    %250 = vector.extract_strided_slice %247 {offsets = [0, 64], sizes = [8, 32], strides = [1, 1]} : vector<8x128xf32> to vector<8x32xf32>
    %251 = vector.extract_strided_slice %246 {offsets = [0, 96], sizes = [8, 32], strides = [1, 1]} : vector<8x128xf32> to vector<8x32xf32>
    %252 = arith.mulf %249, %207 : vector<8x32xf32>
    %253 = arith.mulf %248, %250 : vector<8x32xf32>
    %254 = arith.addf %252, %253 : vector<8x32xf32>
    %255 = math.tanh %254 : vector<8x32xf32>
    %256 = arith.mulf %251, %255 : vector<8x32xf32>
    %257 = vector.broadcast %1 : f32 to vector<8x32xf32>
    %258 = arith.cmpf ogt, %256, %257 : vector<8x32xf32>
    %cst_64 = arith.constant 1.000000e+00 : f32
    %cst_65 = arith.constant 0.000000e+00 : f32
    %259 = vector.broadcast %cst_64 : f32 to vector<8x32xf32>
    %260 = vector.broadcast %cst_65 : f32 to vector<8x32xf32>
    %261 = arith.select %258, %259, %260 : vector<8x32xi1>, vector<8x32xf32>
    %262 = arith.truncf %261 : vector<8x32xf32> to vector<8x32xbf16>
    %cst_66 = arith.constant dense<0.000000e+00> : vector<8x128xf32>
    %263 = tpu.matmul %262, %40, %cst_66 {dimension_numbers = #tpu.dot_dimension_numbers<[1], [0], [0], [1], [0, 0, 1, 1], [], []>} : vector<8x32xbf16>, vector<32x128xbf16>, vector<8x128xf32> -> vector<8x128xf32>
    %264 = arith.addf %263, %239 : vector<8x128xf32>
    %265 = vector.broadcast %42 : vector<1x128xf32> to vector<8x128xf32>
    %266 = arith.addf %264, %265 : vector<8x128xf32>
    %267 = arith.negf %266 : vector<8x128xf32>
    %268 = math.exp %267 : vector<8x128xf32>
    %cst_67 = arith.constant 1.000000e+00 : f32
    %269 = vector.broadcast %cst_67 : f32 to vector<8x128xf32>
    %270 = arith.addf %269, %268 : vector<8x128xf32>
    %271 = arith.divf %269, %270 : vector<8x128xf32>
    %272 = math.tanh %266 : vector<8x128xf32>
    %273 = vector.extract_strided_slice %271 {offsets = [0, 0], sizes = [8, 32], strides = [1, 1]} : vector<8x128xf32> to vector<8x32xf32>
    %274 = vector.extract_strided_slice %271 {offsets = [0, 32], sizes = [8, 32], strides = [1, 1]} : vector<8x128xf32> to vector<8x32xf32>
    %275 = vector.extract_strided_slice %272 {offsets = [0, 64], sizes = [8, 32], strides = [1, 1]} : vector<8x128xf32> to vector<8x32xf32>
    %276 = vector.extract_strided_slice %271 {offsets = [0, 96], sizes = [8, 32], strides = [1, 1]} : vector<8x128xf32> to vector<8x32xf32>
    %277 = arith.mulf %274, %232 : vector<8x32xf32>
    %278 = arith.mulf %273, %275 : vector<8x32xf32>
    %279 = arith.addf %277, %278 : vector<8x32xf32>
    %280 = math.tanh %279 : vector<8x32xf32>
    %281 = arith.mulf %276, %280 : vector<8x32xf32>
    %282 = arith.addf %235, %281 : vector<8x32xf32>
    %283 = arith.truncf %256 : vector<8x32xf32> to vector<8x32xbf16>
    %cst_68 = arith.constant dense<0.000000e+00> : vector<8x128xf32>
    %284 = tpu.matmul %283, %39, %cst_68 {dimension_numbers = #tpu.dot_dimension_numbers<[1], [0], [0], [1], [0, 0, 1, 1], [], []>} : vector<8x32xbf16>, vector<32x128xbf16>, vector<8x128xf32> -> vector<8x128xf32>
    %285 = arith.truncf %281 : vector<8x32xf32> to vector<8x32xbf16>
    %cst_69 = arith.constant dense<0.000000e+00> : vector<8x128xf32>
    %286 = tpu.matmul %285, %41, %cst_69 {dimension_numbers = #tpu.dot_dimension_numbers<[1], [0], [0], [1], [0, 0, 1, 1], [], []>} : vector<8x32xbf16>, vector<32x128xbf16>, vector<8x128xf32> -> vector<8x128xf32>
    %287 = vector.extract_strided_slice %38 {offsets = [40, 0], sizes = [8, 128], strides = [1, 1]} : vector<64x128xf32> to vector<8x128xf32>
    %288 = arith.addf %287, %284 : vector<8x128xf32>
    %289 = arith.negf %288 : vector<8x128xf32>
    %290 = math.exp %289 : vector<8x128xf32>
    %cst_70 = arith.constant 1.000000e+00 : f32
    %291 = vector.broadcast %cst_70 : f32 to vector<8x128xf32>
    %292 = arith.addf %291, %290 : vector<8x128xf32>
    %293 = arith.divf %291, %292 : vector<8x128xf32>
    %294 = math.tanh %288 : vector<8x128xf32>
    %295 = vector.extract_strided_slice %293 {offsets = [0, 0], sizes = [8, 32], strides = [1, 1]} : vector<8x128xf32> to vector<8x32xf32>
    %296 = vector.extract_strided_slice %293 {offsets = [0, 32], sizes = [8, 32], strides = [1, 1]} : vector<8x128xf32> to vector<8x32xf32>
    %297 = vector.extract_strided_slice %294 {offsets = [0, 64], sizes = [8, 32], strides = [1, 1]} : vector<8x128xf32> to vector<8x32xf32>
    %298 = vector.extract_strided_slice %293 {offsets = [0, 96], sizes = [8, 32], strides = [1, 1]} : vector<8x128xf32> to vector<8x32xf32>
    %299 = arith.mulf %296, %254 : vector<8x32xf32>
    %300 = arith.mulf %295, %297 : vector<8x32xf32>
    %301 = arith.addf %299, %300 : vector<8x32xf32>
    %302 = math.tanh %301 : vector<8x32xf32>
    %303 = arith.mulf %298, %302 : vector<8x32xf32>
    %304 = vector.broadcast %1 : f32 to vector<8x32xf32>
    %305 = arith.cmpf ogt, %303, %304 : vector<8x32xf32>
    %cst_71 = arith.constant 1.000000e+00 : f32
    %cst_72 = arith.constant 0.000000e+00 : f32
    %306 = vector.broadcast %cst_71 : f32 to vector<8x32xf32>
    %307 = vector.broadcast %cst_72 : f32 to vector<8x32xf32>
    %308 = arith.select %305, %306, %307 : vector<8x32xi1>, vector<8x32xf32>
    %309 = arith.truncf %308 : vector<8x32xf32> to vector<8x32xbf16>
    %cst_73 = arith.constant dense<0.000000e+00> : vector<8x128xf32>
    %310 = tpu.matmul %309, %40, %cst_73 {dimension_numbers = #tpu.dot_dimension_numbers<[1], [0], [0], [1], [0, 0, 1, 1], [], []>} : vector<8x32xbf16>, vector<32x128xbf16>, vector<8x128xf32> -> vector<8x128xf32>
    %311 = arith.addf %310, %286 : vector<8x128xf32>
    %312 = vector.broadcast %42 : vector<1x128xf32> to vector<8x128xf32>
    %313 = arith.addf %311, %312 : vector<8x128xf32>
    %314 = arith.negf %313 : vector<8x128xf32>
    %315 = math.exp %314 : vector<8x128xf32>
    %cst_74 = arith.constant 1.000000e+00 : f32
    %316 = vector.broadcast %cst_74 : f32 to vector<8x128xf32>
    %317 = arith.addf %316, %315 : vector<8x128xf32>
    %318 = arith.divf %316, %317 : vector<8x128xf32>
    %319 = math.tanh %313 : vector<8x128xf32>
    %320 = vector.extract_strided_slice %318 {offsets = [0, 0], sizes = [8, 32], strides = [1, 1]} : vector<8x128xf32> to vector<8x32xf32>
    %321 = vector.extract_strided_slice %318 {offsets = [0, 32], sizes = [8, 32], strides = [1, 1]} : vector<8x128xf32> to vector<8x32xf32>
    %322 = vector.extract_strided_slice %319 {offsets = [0, 64], sizes = [8, 32], strides = [1, 1]} : vector<8x128xf32> to vector<8x32xf32>
    %323 = vector.extract_strided_slice %318 {offsets = [0, 96], sizes = [8, 32], strides = [1, 1]} : vector<8x128xf32> to vector<8x32xf32>
    %324 = arith.mulf %321, %279 : vector<8x32xf32>
    %325 = arith.mulf %320, %322 : vector<8x32xf32>
    %326 = arith.addf %324, %325 : vector<8x32xf32>
    %327 = math.tanh %326 : vector<8x32xf32>
    %328 = arith.mulf %323, %327 : vector<8x32xf32>
    %329 = arith.addf %282, %328 : vector<8x32xf32>
    %330 = arith.truncf %303 : vector<8x32xf32> to vector<8x32xbf16>
    %cst_75 = arith.constant dense<0.000000e+00> : vector<8x128xf32>
    %331 = tpu.matmul %330, %39, %cst_75 {dimension_numbers = #tpu.dot_dimension_numbers<[1], [0], [0], [1], [0, 0, 1, 1], [], []>} : vector<8x32xbf16>, vector<32x128xbf16>, vector<8x128xf32> -> vector<8x128xf32>
    %332 = arith.truncf %328 : vector<8x32xf32> to vector<8x32xbf16>
    %cst_76 = arith.constant dense<0.000000e+00> : vector<8x128xf32>
    %333 = tpu.matmul %332, %41, %cst_76 {dimension_numbers = #tpu.dot_dimension_numbers<[1], [0], [0], [1], [0, 0, 1, 1], [], []>} : vector<8x32xbf16>, vector<32x128xbf16>, vector<8x128xf32> -> vector<8x128xf32>
    %334 = vector.extract_strided_slice %38 {offsets = [48, 0], sizes = [8, 128], strides = [1, 1]} : vector<64x128xf32> to vector<8x128xf32>
    %335 = arith.addf %334, %331 : vector<8x128xf32>
    %336 = arith.negf %335 : vector<8x128xf32>
    %337 = math.exp %336 : vector<8x128xf32>
    %cst_77 = arith.constant 1.000000e+00 : f32
    %338 = vector.broadcast %cst_77 : f32 to vector<8x128xf32>
    %339 = arith.addf %338, %337 : vector<8x128xf32>
    %340 = arith.divf %338, %339 : vector<8x128xf32>
    %341 = math.tanh %335 : vector<8x128xf32>
    %342 = vector.extract_strided_slice %340 {offsets = [0, 0], sizes = [8, 32], strides = [1, 1]} : vector<8x128xf32> to vector<8x32xf32>
    %343 = vector.extract_strided_slice %340 {offsets = [0, 32], sizes = [8, 32], strides = [1, 1]} : vector<8x128xf32> to vector<8x32xf32>
    %344 = vector.extract_strided_slice %341 {offsets = [0, 64], sizes = [8, 32], strides = [1, 1]} : vector<8x128xf32> to vector<8x32xf32>
    %345 = vector.extract_strided_slice %340 {offsets = [0, 96], sizes = [8, 32], strides = [1, 1]} : vector<8x128xf32> to vector<8x32xf32>
    %346 = arith.mulf %343, %301 : vector<8x32xf32>
    %347 = arith.mulf %342, %344 : vector<8x32xf32>
    %348 = arith.addf %346, %347 : vector<8x32xf32>
    %349 = math.tanh %348 : vector<8x32xf32>
    %350 = arith.mulf %345, %349 : vector<8x32xf32>
    %351 = vector.broadcast %1 : f32 to vector<8x32xf32>
    %352 = arith.cmpf ogt, %350, %351 : vector<8x32xf32>
    %cst_78 = arith.constant 1.000000e+00 : f32
    %cst_79 = arith.constant 0.000000e+00 : f32
    %353 = vector.broadcast %cst_78 : f32 to vector<8x32xf32>
    %354 = vector.broadcast %cst_79 : f32 to vector<8x32xf32>
    %355 = arith.select %352, %353, %354 : vector<8x32xi1>, vector<8x32xf32>
    %356 = arith.truncf %355 : vector<8x32xf32> to vector<8x32xbf16>
    %cst_80 = arith.constant dense<0.000000e+00> : vector<8x128xf32>
    %357 = tpu.matmul %356, %40, %cst_80 {dimension_numbers = #tpu.dot_dimension_numbers<[1], [0], [0], [1], [0, 0, 1, 1], [], []>} : vector<8x32xbf16>, vector<32x128xbf16>, vector<8x128xf32> -> vector<8x128xf32>
    %358 = arith.addf %357, %333 : vector<8x128xf32>
    %359 = vector.broadcast %42 : vector<1x128xf32> to vector<8x128xf32>
    %360 = arith.addf %358, %359 : vector<8x128xf32>
    %361 = arith.negf %360 : vector<8x128xf32>
    %362 = math.exp %361 : vector<8x128xf32>
    %cst_81 = arith.constant 1.000000e+00 : f32
    %363 = vector.broadcast %cst_81 : f32 to vector<8x128xf32>
    %364 = arith.addf %363, %362 : vector<8x128xf32>
    %365 = arith.divf %363, %364 : vector<8x128xf32>
    %366 = math.tanh %360 : vector<8x128xf32>
    %367 = vector.extract_strided_slice %365 {offsets = [0, 0], sizes = [8, 32], strides = [1, 1]} : vector<8x128xf32> to vector<8x32xf32>
    %368 = vector.extract_strided_slice %365 {offsets = [0, 32], sizes = [8, 32], strides = [1, 1]} : vector<8x128xf32> to vector<8x32xf32>
    %369 = vector.extract_strided_slice %366 {offsets = [0, 64], sizes = [8, 32], strides = [1, 1]} : vector<8x128xf32> to vector<8x32xf32>
    %370 = vector.extract_strided_slice %365 {offsets = [0, 96], sizes = [8, 32], strides = [1, 1]} : vector<8x128xf32> to vector<8x32xf32>
    %371 = arith.mulf %368, %326 : vector<8x32xf32>
    %372 = arith.mulf %367, %369 : vector<8x32xf32>
    %373 = arith.addf %371, %372 : vector<8x32xf32>
    %374 = math.tanh %373 : vector<8x32xf32>
    %375 = arith.mulf %370, %374 : vector<8x32xf32>
    %376 = arith.addf %329, %375 : vector<8x32xf32>
    %377 = arith.truncf %350 : vector<8x32xf32> to vector<8x32xbf16>
    %cst_82 = arith.constant dense<0.000000e+00> : vector<8x128xf32>
    %378 = tpu.matmul %377, %39, %cst_82 {dimension_numbers = #tpu.dot_dimension_numbers<[1], [0], [0], [1], [0, 0, 1, 1], [], []>} : vector<8x32xbf16>, vector<32x128xbf16>, vector<8x128xf32> -> vector<8x128xf32>
    %379 = arith.truncf %375 : vector<8x32xf32> to vector<8x32xbf16>
    %cst_83 = arith.constant dense<0.000000e+00> : vector<8x128xf32>
    %380 = tpu.matmul %379, %41, %cst_83 {dimension_numbers = #tpu.dot_dimension_numbers<[1], [0], [0], [1], [0, 0, 1, 1], [], []>} : vector<8x32xbf16>, vector<32x128xbf16>, vector<8x128xf32> -> vector<8x128xf32>
    %381 = vector.extract_strided_slice %38 {offsets = [56, 0], sizes = [8, 128], strides = [1, 1]} : vector<64x128xf32> to vector<8x128xf32>
    %382 = arith.addf %381, %378 : vector<8x128xf32>
    %383 = arith.negf %382 : vector<8x128xf32>
    %384 = math.exp %383 : vector<8x128xf32>
    %cst_84 = arith.constant 1.000000e+00 : f32
    %385 = vector.broadcast %cst_84 : f32 to vector<8x128xf32>
    %386 = arith.addf %385, %384 : vector<8x128xf32>
    %387 = arith.divf %385, %386 : vector<8x128xf32>
    %388 = math.tanh %382 : vector<8x128xf32>
    %389 = vector.extract_strided_slice %387 {offsets = [0, 0], sizes = [8, 32], strides = [1, 1]} : vector<8x128xf32> to vector<8x32xf32>
    %390 = vector.extract_strided_slice %387 {offsets = [0, 32], sizes = [8, 32], strides = [1, 1]} : vector<8x128xf32> to vector<8x32xf32>
    %391 = vector.extract_strided_slice %388 {offsets = [0, 64], sizes = [8, 32], strides = [1, 1]} : vector<8x128xf32> to vector<8x32xf32>
    %392 = vector.extract_strided_slice %387 {offsets = [0, 96], sizes = [8, 32], strides = [1, 1]} : vector<8x128xf32> to vector<8x32xf32>
    %393 = arith.mulf %390, %348 : vector<8x32xf32>
    %394 = arith.mulf %389, %391 : vector<8x32xf32>
    %395 = arith.addf %393, %394 : vector<8x32xf32>
    %396 = math.tanh %395 : vector<8x32xf32>
    %397 = arith.mulf %392, %396 : vector<8x32xf32>
    %398 = vector.broadcast %1 : f32 to vector<8x32xf32>
    %399 = arith.cmpf ogt, %397, %398 : vector<8x32xf32>
    %cst_85 = arith.constant 1.000000e+00 : f32
    %cst_86 = arith.constant 0.000000e+00 : f32
    %400 = vector.broadcast %cst_85 : f32 to vector<8x32xf32>
    %401 = vector.broadcast %cst_86 : f32 to vector<8x32xf32>
    %402 = arith.select %399, %400, %401 : vector<8x32xi1>, vector<8x32xf32>
    %403 = arith.truncf %402 : vector<8x32xf32> to vector<8x32xbf16>
    %cst_87 = arith.constant dense<0.000000e+00> : vector<8x128xf32>
    %404 = tpu.matmul %403, %40, %cst_87 {dimension_numbers = #tpu.dot_dimension_numbers<[1], [0], [0], [1], [0, 0, 1, 1], [], []>} : vector<8x32xbf16>, vector<32x128xbf16>, vector<8x128xf32> -> vector<8x128xf32>
    %405 = arith.addf %404, %380 : vector<8x128xf32>
    %406 = vector.broadcast %42 : vector<1x128xf32> to vector<8x128xf32>
    %407 = arith.addf %405, %406 : vector<8x128xf32>
    %408 = arith.negf %407 : vector<8x128xf32>
    %409 = math.exp %408 : vector<8x128xf32>
    %cst_88 = arith.constant 1.000000e+00 : f32
    %410 = vector.broadcast %cst_88 : f32 to vector<8x128xf32>
    %411 = arith.addf %410, %409 : vector<8x128xf32>
    %412 = arith.divf %410, %411 : vector<8x128xf32>
    %413 = math.tanh %407 : vector<8x128xf32>
    %414 = vector.extract_strided_slice %412 {offsets = [0, 0], sizes = [8, 32], strides = [1, 1]} : vector<8x128xf32> to vector<8x32xf32>
    %415 = vector.extract_strided_slice %412 {offsets = [0, 32], sizes = [8, 32], strides = [1, 1]} : vector<8x128xf32> to vector<8x32xf32>
    %416 = vector.extract_strided_slice %413 {offsets = [0, 64], sizes = [8, 32], strides = [1, 1]} : vector<8x128xf32> to vector<8x32xf32>
    %417 = vector.extract_strided_slice %412 {offsets = [0, 96], sizes = [8, 32], strides = [1, 1]} : vector<8x128xf32> to vector<8x32xf32>
    %418 = arith.mulf %415, %373 : vector<8x32xf32>
    %419 = arith.mulf %414, %416 : vector<8x32xf32>
    %420 = arith.addf %418, %419 : vector<8x32xf32>
    %421 = math.tanh %420 : vector<8x32xf32>
    %422 = arith.mulf %417, %421 : vector<8x32xf32>
    %423 = arith.addf %376, %422 : vector<8x32xf32>
    %cst_89 = arith.constant 1.250000e-01 : f32
    %424 = vector.broadcast %cst_89 : f32 to vector<8x32xf32>
    %425 = arith.mulf %423, %424 : vector<8x32xf32>
    %426 = arith.truncf %425 : vector<8x32xf32> to vector<8x32xbf16>
    %c0_90 = arith.constant 0 : index
    %c0_91 = arith.constant 0 : index
    %427 = vector.load %arg12[%c0_90, %c0_91] : memref<32x64xbf16, #tpu.memory_space<vmem>>, vector<32x64xbf16>
    %cst_92 = arith.constant dense<0.000000e+00> : vector<8x64xf32>
    %428 = tpu.matmul %426, %427, %cst_92 {dimension_numbers = #tpu.dot_dimension_numbers<[1], [0], [0], [1], [0, 0, 1, 1], [], []>} : vector<8x32xbf16>, vector<32x64xbf16>, vector<8x64xf32> -> vector<8x64xf32>
    %c0_93 = arith.constant 0 : index
    %c0_94 = arith.constant 0 : index
    %429 = vector.load %arg13[%c0_93, %c0_94] : memref<1x64xf32, #tpu.memory_space<vmem>>, vector<1x64xf32>
    %430 = vector.broadcast %429 : vector<1x64xf32> to vector<8x64xf32>
    %431 = arith.addf %428, %430 : vector<8x64xf32>
    %432 = vector.broadcast %2 : f32 to vector<8x64xf32>
    %433 = arith.cmpf ogt, %431, %432 : vector<8x64xf32>
    %cst_95 = arith.constant 1.000000e+00 : f32
    %cst_96 = arith.constant 0.000000e+00 : f32
    %434 = vector.broadcast %cst_95 : f32 to vector<8x64xf32>
    %435 = vector.broadcast %cst_96 : f32 to vector<8x64xf32>
    %436 = arith.select %433, %434, %435 : vector<8x64xi1>, vector<8x64xf32>
    %c0_97 = arith.constant 0 : index
    %c0_98 = arith.constant 0 : index
    %437 = vector.load %arg14[%c0_97, %c0_98] : memref<32x128xbf16, #tpu.memory_space<vmem>>, vector<32x128xbf16>
    %cst_99 = arith.constant dense<0.000000e+00> : vector<8x128xf32>
    %438 = tpu.matmul %426, %437, %cst_99 {dimension_numbers = #tpu.dot_dimension_numbers<[1], [0], [0], [1], [0, 0, 1, 1], [], []>} : vector<8x32xbf16>, vector<32x128xbf16>, vector<8x128xf32> -> vector<8x128xf32>
    %439 = arith.truncf %436 : vector<8x64xf32> to vector<8x64xbf16>
    %c0_100 = arith.constant 0 : index
    %c0_101 = arith.constant 0 : index
    %440 = vector.load %arg15[%c0_100, %c0_101] : memref<64x128xbf16, #tpu.memory_space<vmem>>, vector<64x128xbf16>
    %cst_102 = arith.constant dense<0.000000e+00> : vector<8x128xf32>
    %441 = tpu.matmul %439, %440, %cst_102 {dimension_numbers = #tpu.dot_dimension_numbers<[1], [0], [0], [1], [0, 0, 1, 1], [], []>} : vector<8x64xbf16>, vector<64x128xbf16>, vector<8x128xf32> -> vector<8x128xf32>
    %442 = arith.addf %438, %441 : vector<8x128xf32>
    %c0_103 = arith.constant 0 : index
    %c0_104 = arith.constant 0 : index
    %443 = vector.load %arg16[%c0_103, %c0_104] : memref<1x128xf32, #tpu.memory_space<vmem>>, vector<1x128xf32>
    %444 = vector.broadcast %443 : vector<1x128xf32> to vector<8x128xf32>
    %445 = arith.addf %442, %444 : vector<8x128xf32>
    %c0_105 = arith.constant 0 : index
    %c0_106 = arith.constant 0 : index
    %446 = vector.load %arg17[%c0_105, %c0_106] : memref<8x128xf32, #tpu.memory_space<vmem>>, vector<8x128xf32>
    tpu.vector_store %arg17[%c0_105, %c0_106], %445 {strides = array<i32>} : memref<8x128xf32, #tpu.memory_space<vmem>>, vector<8x128xf32>,
    return
  }
  func.func @transform_0(%arg0: i32, %arg1: memref<4xf32, #tpu.memory_space<smem>>) -> (i32, i32) {
    %c0_i32 = arith.constant 0 : i32
    %c0_i32_0 = arith.constant 0 : i32
    return %arg0, %c0_i32 : i32, i32
  }
  func.func @transform_1(%arg0: i32, %arg1: memref<4xf32, #tpu.memory_space<smem>>) -> (i32, i32) {
    %c0_i32 = arith.constant 0 : i32
    %c0_i32_0 = arith.constant 0 : i32
    %c0_i32_1 = arith.constant 0 : i32
    return %c0_i32, %c0_i32_0 : i32, i32
  }
  func.func @transform_2(%arg0: i32, %arg1: memref<4xf32, #tpu.memory_space<smem>>) -> (i32, i32) {
    %c0_i32 = arith.constant 0 : i32
    %c0_i32_0 = arith.constant 0 : i32
    %c0_i32_1 = arith.constant 0 : i32
    return %c0_i32, %c0_i32_0 : i32, i32
  }
  func.func @transform_3(%arg0: i32, %arg1: memref<4xf32, #tpu.memory_space<smem>>) -> (i32, i32) {
    %c0_i32 = arith.constant 0 : i32
    %c0_i32_0 = arith.constant 0 : i32
    %c0_i32_1 = arith.constant 0 : i32
    return %c0_i32, %c0_i32_0 : i32, i32
  }
  func.func @transform_4(%arg0: i32, %arg1: memref<4xf32, #tpu.memory_space<smem>>) -> (i32, i32) {
    %c0_i32 = arith.constant 0 : i32
    %c0_i32_0 = arith.constant 0 : i32
    %c0_i32_1 = arith.constant 0 : i32
    return %c0_i32, %c0_i32_0 : i32, i32
  }
  func.func @transform_5(%arg0: i32, %arg1: memref<4xf32, #tpu.memory_space<smem>>) -> (i32, i32) {
    %c0_i32 = arith.constant 0 : i32
    %c0_i32_0 = arith.constant 0 : i32
    %c0_i32_1 = arith.constant 0 : i32
    return %c0_i32, %c0_i32_0 : i32, i32
  }
  func.func @transform_6(%arg0: i32, %arg1: memref<4xf32, #tpu.memory_space<smem>>) -> (i32, i32) {
    %c0_i32 = arith.constant 0 : i32
    %c0_i32_0 = arith.constant 0 : i32
    %c0_i32_1 = arith.constant 0 : i32
    return %c0_i32, %c0_i32_0 : i32, i32
  }
  func.func @transform_7(%arg0: i32, %arg1: memref<4xf32, #tpu.memory_space<smem>>) -> (i32, i32) {
    %c0_i32 = arith.constant 0 : i32
    %c0_i32_0 = arith.constant 0 : i32
    %c0_i32_1 = arith.constant 0 : i32
    return %c0_i32, %c0_i32_0 : i32, i32
  }
  func.func @transform_8(%arg0: i32, %arg1: memref<4xf32, #tpu.memory_space<smem>>) -> (i32, i32) {
    %c0_i32 = arith.constant 0 : i32
    %c0_i32_0 = arith.constant 0 : i32
    %c0_i32_1 = arith.constant 0 : i32
    return %c0_i32, %c0_i32_0 : i32, i32
  }
  func.func @transform_9(%arg0: i32, %arg1: memref<4xf32, #tpu.memory_space<smem>>) -> (i32, i32) {
    %c0_i32 = arith.constant 0 : i32
    %c0_i32_0 = arith.constant 0 : i32
    %c0_i32_1 = arith.constant 0 : i32
    return %c0_i32, %c0_i32_0 : i32, i32
  }
  func.func @transform_10(%arg0: i32, %arg1: memref<4xf32, #tpu.memory_space<smem>>) -> (i32, i32) {
    %c0_i32 = arith.constant 0 : i32
    %c0_i32_0 = arith.constant 0 : i32
    %c0_i32_1 = arith.constant 0 : i32
    return %c0_i32, %c0_i32_0 : i32, i32
  }
  func.func @transform_11(%arg0: i32, %arg1: memref<4xf32, #tpu.memory_space<smem>>) -> (i32, i32) {
    %c0_i32 = arith.constant 0 : i32
    %c0_i32_0 = arith.constant 0 : i32
    %c0_i32_1 = arith.constant 0 : i32
    return %c0_i32, %c0_i32_0 : i32, i32
  }
  func.func @transform_12(%arg0: i32, %arg1: memref<4xf32, #tpu.memory_space<smem>>) -> (i32, i32) {
    %c0_i32 = arith.constant 0 : i32
    %c0_i32_0 = arith.constant 0 : i32
    %c0_i32_1 = arith.constant 0 : i32
    return %c0_i32, %c0_i32_0 : i32, i32
  }
  func.func @transform_13(%arg0: i32, %arg1: memref<4xf32, #tpu.memory_space<smem>>) -> (i32, i32) {
    %c0_i32 = arith.constant 0 : i32
    %c0_i32_0 = arith.constant 0 : i32
    %c0_i32_1 = arith.constant 0 : i32
    return %c0_i32, %c0_i32_0 : i32, i32
  }
  func.func @transform_14(%arg0: i32, %arg1: memref<4xf32, #tpu.memory_space<smem>>) -> (i32, i32) {
    %c0_i32 = arith.constant 0 : i32
    %c0_i32_0 = arith.constant 0 : i32
    %c0_i32_1 = arith.constant 0 : i32
    return %c0_i32, %c0_i32_0 : i32, i32
  }
  func.func @transform_15(%arg0: i32, %arg1: memref<4xf32, #tpu.memory_space<smem>>) -> (i32, i32) {
    %c0_i32 = arith.constant 0 : i32
    %c0_i32_0 = arith.constant 0 : i32
    return %arg0, %c0_i32 : i32, i32
  }
}

</mosaic_0001>

<llo_original>
// kernel: _forward_impl.1
$region0: #{_forward_impl.1}
  #allocation0 [shape = 'u32[]', space=smem, size = 0x4, offset = 0x4, fixed_abs, tag = 'smem constant byte address 0x4 - core index']
  #allocation1 [shape = 'u32[144,128]{1,0:T(1,128)}', space=vmem, size = 0x12000, scoped, tag = 'internal scratch']
  #allocation2 [shape = 's32[1]{0}', space=sflag, size = 0x4, scoped, tag = 'scoped memory for _forward_impl.1']
  #allocation3 [shape = 'u8[512]{0}', space=smem, size = 0x200, scoped, tag = 'prefetched SMEM operand 0']
  %s0 = inlined_call_operand.vmem [shape: f32[4], index: 0, kind: input, shape index: {}]
  %s1 = inlined_call_operand.vmem [shape: bf16[128,70], index: 1, kind: input, shape index: {}]
  %s2 = inlined_call_operand.vmem [shape: bf16[70,64], index: 2, kind: input, shape index: {}]
  %s3 = inlined_call_operand.vmem [shape: f32[1,64], index: 3, kind: input, shape index: {}]
  %s4 = inlined_call_operand.vmem [shape: f32[1,64], index: 4, kind: input, shape index: {}]
  %s5 = inlined_call_operand.vmem [shape: bf16[64,128], index: 5, kind: input, shape index: {}]
  %s6 = inlined_call_operand.vmem [shape: bf16[32,128], index: 6, kind: input, shape index: {}]
  %s7 = inlined_call_operand.vmem [shape: f32[1,128], index: 7, kind: input, shape index: {}]
  %s8 = inlined_call_operand.vmem [shape: bf16[32,128], index: 8, kind: input, shape index: {}]
  %s9 = inlined_call_operand.vmem [shape: bf16[32,128], index: 9, kind: input, shape index: {}]
  %s10 = inlined_call_operand.vmem [shape: f32[1,128], index: 10, kind: input, shape index: {}]
  %s11 = inlined_call_operand.vmem [shape: bf16[32,64], index: 11, kind: input, shape index: {}]
  %s12 = inlined_call_operand.vmem [shape: f32[1,64], index: 12, kind: input, shape index: {}]
  %s13 = inlined_call_operand.vmem [shape: bf16[32,128], index: 13, kind: input, shape index: {}]
  %s14 = inlined_call_operand.vmem [shape: bf16[64,128], index: 14, kind: input, shape index: {}]
  %s15 = inlined_call_operand.vmem [shape: f32[1,128], index: 15, kind: input, shape index: {}]
  %s16 = inlined_call_operand.vmem [shape: f32[16,128], index: 16, kind: output, shape index: {}]
  %s17 = sld [smem:[#allocation0]]
  $region93: #{_forward_impl.1} parent=0
    _
  %s19 = ssub.s32 1, %s17
  %s20 = scalar_select 0, %s19, %s17
  %s21 = sshll.u32 %s0, 4
  %s22 = int_to_ptr.vmem [resolvable:$true] %s21
  %24 = dma.vmem_to_smem %s22, 16, [#allocation3], [#allocation2]
  %25 = dma.done [#allocation2], 16
  %26 = sfence
  loop: start=0, step=1, limit=4
  $region2: #{_forward_impl.1} parent=0 // loop_pre_header
    _
  $region3: #{_forward_impl.1} parent=0 // loop_header
    %s28 = sphi 0, %s32
    %p29 = scmp.ge.s32.totalorder %s28, 4
    %s38 = sphi 0, %s40
    %s41 = sphi 0, %s38
    %s42 = sphi 0, %s41
    %s58 = sphi 0, %s42
    %s62 = sphi 0, %s62
    %s64 = sphi 0, %s62
    %s65 = sphi 0, %s64
    %s79 = sphi 0, %s65
    %s83 = sphi 0, %s83
    %s85 = sphi 0, %s83
    %s86 = sphi 0, %s85
    %s100 = sphi 0, %s86
    %s104 = sphi 0, %s104
    %s106 = sphi 0, %s104
    %s107 = sphi 0, %s106
    %s121 = sphi 0, %s107
    %s125 = sphi 0, %s125
    %s127 = sphi 0, %s125
    %s128 = sphi 0, %s127
    %s142 = sphi 0, %s128
    %s146 = sphi 0, %s146
    %s148 = sphi 0, %s146
    %s149 = sphi 0, %s148
    %s163 = sphi 0, %s149
    %s167 = sphi 0, %s167
    %s169 = sphi 0, %s167
    %s170 = sphi 0, %s169
    %s184 = sphi 0, %s170
    %s188 = sphi 0, %s188
    %s190 = sphi 0, %s188
    %s191 = sphi 0, %s190
    %s205 = sphi 0, %s191
    %s209 = sphi 0, %s209
    %s211 = sphi 0, %s209
    %s212 = sphi 0, %s211
    %s226 = sphi 0, %s212
    %s230 = sphi 0, %s230
    %s232 = sphi 0, %s230
    %s233 = sphi 0, %s232
    %s247 = sphi 0, %s233
    %s251 = sphi 0, %s251
    %s253 = sphi 0, %s251
    %s254 = sphi 0, %s253
    %s268 = sphi 0, %s254
    %s272 = sphi 0, %s272
    %s274 = sphi 0, %s272
    %s275 = sphi 0, %s274
    %s289 = sphi 0, %s275
    %s293 = sphi 0, %s293
    %s295 = sphi 0, %s293
    %s296 = sphi 0, %s295
    %s310 = sphi 0, %s296
    %s314 = sphi 0, %s314
    %s316 = sphi 0, %s314
    %s317 = sphi 0, %s316
    %s331 = sphi 0, %s317
    %s335 = sphi 0, %s335
    %s337 = sphi 0, %s335
    %s338 = sphi 0, %s337
    %s352 = sphi 0, %s338
    %s358 = sphi 0, %s360
    %s361 = sphi 0, %s358
    %s362 = sphi 0, %s361
    %s378 = sphi 0, %s362
  $region4: #{_forward_impl.1} parent=0 // loop_header_branch
    %31 = sbr.rel (%p29) target = $region8
  $region5: #{_forward_impl.1} parent=0 // loop_body
    %s33 = ssub.s32 %s28, 1
    %s34 = ssub.s32 %s28, 2
    %s35 = sadd.s32 %s28, 1
    %s36 = ssub.s32 %s28, %s35
    %p37 = scmp.eq.s32.totalorder %s36, 0
    %s39 = sadd.s32 %s38, 1
    %s40 = scalar_select %p37, %s38, %s39
    %p43 = pneg %p37
    %p44 = scmp.eq.s32.totalorder %s28, 1
    %p45 = por %p43, %p44
    %p46 = scmp.ne.s32.totalorder %s38, %s41
    %p47 = scmp.eq.s32.totalorder %s28, 0
    %p48 = por %p46, %p47
    %p49 = scmp.ne.s32.totalorder %s38, %s41
    %p50 = scmp.eq.s32.totalorder %s33, 1
    %p51 = por %p49, %p50
    %p52 = scmp.ne.s32.totalorder %s41, %s42
    %p53 = scmp.eq.s32.totalorder %s33, 0
    %p54 = por %p52, %p53
    %p55 = scmp.ne.s32.totalorder %s41, %s42
    %p56 = scmp.eq.s32.totalorder %s34, 1
    %p57 = por %p55, %p56
    %p59 = scmp.ne.s32.totalorder %s42, %s58
    %p60 = scmp.eq.s32.totalorder %s34, 0
    %p61 = por %p59, %p60
    %s63 = sadd.s32 %s62, 1
    %p66 = scmp.eq.s32.totalorder %s28, 1
    %p67 = scmp.ne.s32.totalorder %s62, %s64
    %p68 = scmp.eq.s32.totalorder %s28, 0
    %p69 = por %p67, %p68
    %p70 = scmp.ne.s32.totalorder %s62, %s64
    %p71 = scmp.eq.s32.totalorder %s33, 1
    %p72 = por %p70, %p71
    %p73 = scmp.ne.s32.totalorder %s64, %s65
    %p74 = scmp.eq.s32.totalorder %s33, 0
    %p75 = por %p73, %p74
    %p76 = scmp.ne.s32.totalorder %s64, %s65
    %p77 = scmp.eq.s32.totalorder %s34, 1
    %p78 = por %p76, %p77
    %p80 = scmp.ne.s32.totalorder %s65, %s79
    %p81 = scmp.eq.s32.totalorder %s34, 0
    %p82 = por %p80, %p81
    %s84 = sadd.s32 %s83, 1
    %p87 = scmp.eq.s32.totalorder %s28, 1
    %p88 = scmp.ne.s32.totalorder %s83, %s85
    %p89 = scmp.eq.s32.totalorder %s28, 0
    %p90 = por %p88, %p89
    %p91 = scmp.ne.s32.totalorder %s83, %s85
    %p92 = scmp.eq.s32.totalorder %s33, 1
    %p93 = por %p91, %p92
    %p94 = scmp.ne.s32.totalorder %s85, %s86
    %p95 = scmp.eq.s32.totalorder %s33, 0
    %p96 = por %p94, %p95
    %p97 = scmp.ne.s32.totalorder %s85, %s86
    %p98 = scmp.eq.s32.totalorder %s34, 1
    %p99 = por %p97, %p98
    %p101 = scmp.ne.s32.totalorder %s86, %s100
    %p102 = scmp.eq.s32.totalorder %s34, 0
    %p103 = por %p101, %p102
    %s105 = sadd.s32 %s104, 1
    %p108 = scmp.eq.s32.totalorder %s28, 1
    %p109 = scmp.ne.s32.totalorder %s104, %s106
    %p110 = scmp.eq.s32.totalorder %s28, 0
    %p111 = por %p109, %p110
    %p112 = scmp.ne.s32.totalorder %s104, %s106
    %p113 = scmp.eq.s32.totalorder %s33, 1
    %p114 = por %p112, %p113
    %p115 = scmp.ne.s32.totalorder %s106, %s107
    %p116 = scmp.eq.s32.totalorder %s33, 0
    %p117 = por %p115, %p116
    %p118 = scmp.ne.s32.totalorder %s106, %s107
    %p119 = scmp.eq.s32.totalorder %s34, 1
    %p120 = por %p118, %p119
    %p122 = scmp.ne.s32.totalorder %s107, %s121
    %p123 = scmp.eq.s32.totalorder %s34, 0
    %p124 = por %p122, %p123
    %s126 = sadd.s32 %s125, 1
    %p129 = scmp.eq.s32.totalorder %s28, 1
    %p130 = scmp.ne.s32.totalorder %s125, %s127
    %p131 = scmp.eq.s32.totalorder %s28, 0
    %p132 = por %p130, %p131
    %p133 = scmp.ne.s32.totalorder %s125, %s127
    %p134 = scmp.eq.s32.totalorder %s33, 1
    %p135 = por %p133, %p134
    %p136 = scmp.ne.s32.totalorder %s127, %s128
    %p137 = scmp.eq.s32.totalorder %s33, 0
    %p138 = por %p136, %p137
    %p139 = scmp.ne.s32.totalorder %s127, %s128
    %p140 = scmp.eq.s32.totalorder %s34, 1
    %p141 = por %p139, %p140
    %p143 = scmp.ne.s32.totalorder %s128, %s142
    %p144 = scmp.eq.s32.totalorder %s34, 0
    %p145 = por %p143, %p144
    %s147 = sadd.s32 %s146, 1
    %p150 = scmp.eq.s32.totalorder %s28, 1
    %p151 = scmp.ne.s32.totalorder %s146, %s148
    %p152 = scmp.eq.s32.totalorder %s28, 0
    %p153 = por %p151, %p152
    %p154 = scmp.ne.s32.totalorder %s146, %s148
    %p155 = scmp.eq.s32.totalorder %s33, 1
    %p156 = por %p154, %p155
    %p157 = scmp.ne.s32.totalorder %s148, %s149
    %p158 = scmp.eq.s32.totalorder %s33, 0
    %p159 = por %p157, %p158
    %p160 = scmp.ne.s32.totalorder %s148, %s149
    %p161 = scmp.eq.s32.totalorder %s34, 1
    %p162 = por %p160, %p161
    %p164 = scmp.ne.s32.totalorder %s149, %s163
    %p165 = scmp.eq.s32.totalorder %s34, 0
    %p166 = por %p164, %p165
    %s168 = sadd.s32 %s167, 1
    %p171 = scmp.eq.s32.totalorder %s28, 1
    %p172 = scmp.ne.s32.totalorder %s167, %s169
    %p173 = scmp.eq.s32.totalorder %s28, 0
    %p174 = por %p172, %p173
    %p175 = scmp.ne.s32.totalorder %s167, %s169
    %p176 = scmp.eq.s32.totalorder %s33, 1
    %p177 = por %p175, %p176
    %p178 = scmp.ne.s32.totalorder %s169, %s170
    %p179 = scmp.eq.s32.totalorder %s33, 0
    %p180 = por %p178, %p179
    %p181 = scmp.ne.s32.totalorder %s169, %s170
    %p182 = scmp.eq.s32.totalorder %s34, 1
    %p183 = por %p181, %p182
    %p185 = scmp.ne.s32.totalorder %s170, %s184
    %p186 = scmp.eq.s32.totalorder %s34, 0
    %p187 = por %p185, %p186
    %s189 = sadd.s32 %s188, 1
    %p192 = scmp.eq.s32.totalorder %s28, 1
    %p193 = scmp.ne.s32.totalorder %s188, %s190
    %p194 = scmp.eq.s32.totalorder %s28, 0
    %p195 = por %p193, %p194
    %p196 = scmp.ne.s32.totalorder %s188, %s190
    %p197 = scmp.eq.s32.totalorder %s33, 1
    %p198 = por %p196, %p197
    %p199 = scmp.ne.s32.totalorder %s190, %s191
    %p200 = scmp.eq.s32.totalorder %s33, 0
    %p201 = por %p199, %p200
    %p202 = scmp.ne.s32.totalorder %s190, %s191
    %p203 = scmp.eq.s32.totalorder %s34, 1
    %p204 = por %p202, %p203
    %p206 = scmp.ne.s32.totalorder %s191, %s205
    %p207 = scmp.eq.s32.totalorder %s34, 0
    %p208 = por %p206, %p207
    %s210 = sadd.s32 %s209, 1
    %p213 = scmp.eq.s32.totalorder %s28, 1
    %p214 = scmp.ne.s32.totalorder %s209, %s211
    %p215 = scmp.eq.s32.totalorder %s28, 0
    %p216 = por %p214, %p215
    %p217 = scmp.ne.s32.totalorder %s209, %s211
    %p218 = scmp.eq.s32.totalorder %s33, 1
    %p219 = por %p217, %p218
    %p220 = scmp.ne.s32.totalorder %s211, %s212
    %p221 = scmp.eq.s32.totalorder %s33, 0
    %p222 = por %p220, %p221
    %p223 = scmp.ne.s32.totalorder %s211, %s212
    %p224 = scmp.eq.s32.totalorder %s34, 1
    %p225 = por %p223, %p224
    %p227 = scmp.ne.s32.totalorder %s212, %s226
    %p228 = scmp.eq.s32.totalorder %s34, 0
    %p229 = por %p227, %p228
    %s231 = sadd.s32 %s230, 1
    %p234 = scmp.eq.s32.totalorder %s28, 1
    %p235 = scmp.ne.s32.totalorder %s230, %s232
    %p236 = scmp.eq.s32.totalorder %s28, 0
    %p237 = por %p235, %p236
    %p238 = scmp.ne.s32.totalorder %s230, %s232
    %p239 = scmp.eq.s32.totalorder %s33, 1
    %p240 = por %p238, %p239
    %p241 = scmp.ne.s32.totalorder %s232, %s233
    %p242 = scmp.eq.s32.totalorder %s33, 0
    %p243 = por %p241, %p242
    %p244 = scmp.ne.s32.totalorder %s232, %s233
    %p245 = scmp.eq.s32.totalorder %s34, 1
    %p246 = por %p244, %p245
    %p248 = scmp.ne.s32.totalorder %s233, %s247
    %p249 = scmp.eq.s32.totalorder %s34, 0
    %p250 = por %p248, %p249
    %s252 = sadd.s32 %s251, 1
    %p255 = scmp.eq.s32.totalorder %s28, 1
    %p256 = scmp.ne.s32.totalorder %s251, %s253
    %p257 = scmp.eq.s32.totalorder %s28, 0
    %p258 = por %p256, %p257
    %p259 = scmp.ne.s32.totalorder %s251, %s253
    %p260 = scmp.eq.s32.totalorder %s33, 1
    %p261 = por %p259, %p260
    %p262 = scmp.ne.s32.totalorder %s253, %s254
    %p263 = scmp.eq.s32.totalorder %s33, 0
    %p264 = por %p262, %p263
    %p265 = scmp.ne.s32.totalorder %s253, %s254
    %p266 = scmp.eq.s32.totalorder %s34, 1
    %p267 = por %p265, %p266
    %p269 = scmp.ne.s32.totalorder %s254, %s268
    %p270 = scmp.eq.s32.totalorder %s34, 0
    %p271 = por %p269, %p270
    %s273 = sadd.s32 %s272, 1
    %p276 = scmp.eq.s32.totalorder %s28, 1
    %p277 = scmp.ne.s32.totalorder %s272, %s274
    %p278 = scmp.eq.s32.totalorder %s28, 0
    %p279 = por %p277, %p278
    %p280 = scmp.ne.s32.totalorder %s272, %s274
    %p281 = scmp.eq.s32.totalorder %s33, 1
    %p282 = por %p280, %p281
    %p283 = scmp.ne.s32.totalorder %s274, %s275
    %p284 = scmp.eq.s32.totalorder %s33, 0
    %p285 = por %p283, %p284
    %p286 = scmp.ne.s32.totalorder %s274, %s275
    %p287 = scmp.eq.s32.totalorder %s34, 1
    %p288 = por %p286, %p287
    %p290 = scmp.ne.s32.totalorder %s275, %s289
    %p291 = scmp.eq.s32.totalorder %s34, 0
    %p292 = por %p290, %p291
    %s294 = sadd.s32 %s293, 1
    %p297 = scmp.eq.s32.totalorder %s28, 1
    %p298 = scmp.ne.s32.totalorder %s293, %s295
    %p299 = scmp.eq.s32.totalorder %s28, 0
    %p300 = por %p298, %p299
    %p301 = scmp.ne.s32.totalorder %s293, %s295
    %p302 = scmp.eq.s32.totalorder %s33, 1
    %p303 = por %p301, %p302
    %p304 = scmp.ne.s32.totalorder %s295, %s296
    %p305 = scmp.eq.s32.totalorder %s33, 0
    %p306 = por %p304, %p305
    %p307 = scmp.ne.s32.totalorder %s295, %s296
    %p308 = scmp.eq.s32.totalorder %s34, 1
    %p309 = por %p307, %p308
    %p311 = scmp.ne.s32.totalorder %s296, %s310
    %p312 = scmp.eq.s32.totalorder %s34, 0
    %p313 = por %p311, %p312
    %s315 = sadd.s32 %s314, 1
    %p318 = scmp.eq.s32.totalorder %s28, 1
    %p319 = scmp.ne.s32.totalorder %s314, %s316
    %p320 = scmp.eq.s32.totalorder %s28, 0
    %p321 = por %p319, %p320
    %p322 = scmp.ne.s32.totalorder %s314, %s316
    %p323 = scmp.eq.s32.totalorder %s33, 1
    %p324 = por %p322, %p323
    %p325 = scmp.ne.s32.totalorder %s316, %s317
    %p326 = scmp.eq.s32.totalorder %s33, 0
    %p327 = por %p325, %p326
    %p328 = scmp.ne.s32.totalorder %s316, %s317
    %p329 = scmp.eq.s32.totalorder %s34, 1
    %p330 = por %p328, %p329
    %p332 = scmp.ne.s32.totalorder %s317, %s331
    %p333 = scmp.eq.s32.totalorder %s34, 0
    %p334 = por %p332, %p333
    %s336 = sadd.s32 %s335, 1
    %p339 = scmp.eq.s32.totalorder %s28, 1
    %p340 = scmp.ne.s32.totalorder %s335, %s337
    %p341 = scmp.eq.s32.totalorder %s28, 0
    %p342 = por %p340, %p341
    %p343 = scmp.ne.s32.totalorder %s335, %s337
    %p344 = scmp.eq.s32.totalorder %s33, 1
    %p345 = por %p343, %p344
    %p346 = scmp.ne.s32.totalorder %s337, %s338
    %p347 = scmp.eq.s32.totalorder %s33, 0
    %p348 = por %p346, %p347
    %p349 = scmp.ne.s32.totalorder %s337, %s338
    %p350 = scmp.eq.s32.totalorder %s34, 1
    %p351 = por %p349, %p350
    %p353 = scmp.ne.s32.totalorder %s338, %s352
    %p354 = scmp.eq.s32.totalorder %s34, 0
    %p355 = por %p353, %p354
    %s356 = ssub.s32 %s28, %s35
    %p357 = scmp.eq.s32.totalorder %s356, 0
    %s359 = sadd.s32 %s358, 1
    %s360 = scalar_select %p357, %s358, %s359
    %p363 = pneg %p357
    %p364 = scmp.eq.s32.totalorder %s28, 1
    %p365 = por %p363, %p364
    %p366 = scmp.ne.s32.totalorder %s358, %s361
    %p367 = scmp.eq.s32.totalorder %s28, 0
    %p368 = por %p366, %p367
    %p369 = scmp.ne.s32.totalorder %s358, %s361
    %p370 = scmp.eq.s32.totalorder %s33, 1
    %p371 = por %p369, %p370
    %p372 = scmp.ne.s32.totalorder %s361, %s362
    %p373 = scmp.eq.s32.totalorder %s33, 0
    %p374 = por %p372, %p373
    %p375 = scmp.ne.s32.totalorder %s361, %s362
    %p376 = scmp.eq.s32.totalorder %s34, 1
    %p377 = por %p375, %p376
    %p379 = scmp.ne.s32.totalorder %s362, %s378
    %p380 = scmp.eq.s32.totalorder %s34, 0
    %p381 = por %p379, %p380
    %p382 = scmp.le.s32.totalorder 1, %s28
    %p383 = scmp.lt.s32.totalorder %s28, 3
    %p384 = pnand %p382, %p383
    %p385 = pneg %p384
    // Predicated region
    $region9: #{_forward_impl.1} parent=5 // pred_check
      _
    $region10: #{_forward_impl.1} parent=5 // pred_check_branch
      %387 = sbr.rel (%p384) target = $region12
    $region11: #{_forward_impl.1} parent=5 // pred_region
      %s388 = ssub.s32 %s28, 1
      // Predicated region
      $region13: #{_forward_impl.1} parent=11 // pred_check
        %p389 = pneg %p75
      $region14: #{_forward_impl.1} parent=11 // pred_check_branch
        %391 = sbr.rel (%p389) target = $region16
      $region15: #{_forward_impl.1} parent=11 // pred_region
        _
      $region16: #{_forward_impl.1} parent=11 // pred_fallthru
        _
      // Predicated region
      $region17: #{_forward_impl.1} parent=11 // pred_check
        %p392 = pneg %p96
      $region18: #{_forward_impl.1} parent=11 // pred_check_branch
        %394 = sbr.rel (%p392) target = $region20
      $region19: #{_forward_impl.1} parent=11 // pred_region
        _
      $region20: #{_forward_impl.1} parent=11 // pred_fallthru
        _
      // Predicated region
      $region21: #{_forward_impl.1} parent=11 // pred_check
        %p395 = pneg %p117
      $region22: #{_forward_impl.1} parent=11 // pred_check_branch
        %397 = sbr.rel (%p395) target = $region24
      $region23: #{_forward_impl.1} parent=11 // pred_region
        _
      $region24: #{_forward_impl.1} parent=11 // pred_fallthru
        _
      // Predicated region
      $region25: #{_forward_impl.1} parent=11 // pred_check
        %p398 = pneg %p138
      $region26: #{_forward_impl.1} parent=11 // pred_check_branch
        %400 = sbr.rel (%p398) target = $region28
      $region27: #{_forward_impl.1} parent=11 // pred_region
        _
      $region28: #{_forward_impl.1} parent=11 // pred_fallthru
        _
      // Predicated region
      $region29: #{_forward_impl.1} parent=11 // pred_check
        %p401 = pneg %p159
      $region30: #{_forward_impl.1} parent=11 // pred_check_branch
        %403 = sbr.rel (%p401) target = $region32
      $region31: #{_forward_impl.1} parent=11 // pred_region
        _
      $region32: #{_forward_impl.1} parent=11 // pred_fallthru
        _
      // Predicated region
      $region33: #{_forward_impl.1} parent=11 // pred_check
        %p404 = pneg %p180
      $region34: #{_forward_impl.1} parent=11 // pred_check_branch
        %406 = sbr.rel (%p404) target = $region36
      $region35: #{_forward_impl.1} parent=11 // pred_region
        _
      $region36: #{_forward_impl.1} parent=11 // pred_fallthru
        _
      // Predicated region
      $region37: #{_forward_impl.1} parent=11 // pred_check
        %p407 = pneg %p201
      $region38: #{_forward_impl.1} parent=11 // pred_check_branch
        %409 = sbr.rel (%p407) target = $region40
      $region39: #{_forward_impl.1} parent=11 // pred_region
        _
      $region40: #{_forward_impl.1} parent=11 // pred_fallthru
        _
      // Predicated region
      $region41: #{_forward_impl.1} parent=11 // pred_check
        %p410 = pneg %p222
      $region42: #{_forward_impl.1} parent=11 // pred_check_branch
        %412 = sbr.rel (%p410) target = $region44
      $region43: #{_forward_impl.1} parent=11 // pred_region
        _
      $region44: #{_forward_impl.1} parent=11 // pred_fallthru
        _
      // Predicated region
      $region45: #{_forward_impl.1} parent=11 // pred_check
        %p413 = pneg %p243
      $region46: #{_forward_impl.1} parent=11 // pred_check_branch
        %415 = sbr.rel (%p413) target = $region48
      $region47: #{_forward_impl.1} parent=11 // pred_region
        _
      $region48: #{_forward_impl.1} parent=11 // pred_fallthru
        _
      // Predicated region
      $region49: #{_forward_impl.1} parent=11 // pred_check
        %p416 = pneg %p264
      $region50: #{_forward_impl.1} parent=11 // pred_check_branch
        %418 = sbr.rel (%p416) target = $region52
      $region51: #{_forward_impl.1} parent=11 // pred_region
        _
      $region52: #{_forward_impl.1} parent=11 // pred_fallthru
        _
      // Predicated region
      $region53: #{_forward_impl.1} parent=11 // pred_check
        %p419 = pneg %p285
      $region54: #{_forward_impl.1} parent=11 // pred_check_branch
        %421 = sbr.rel (%p419) target = $region56
      $region55: #{_forward_impl.1} parent=11 // pred_region
        _
      $region56: #{_forward_impl.1} parent=11 // pred_fallthru
        _
      // Predicated region
      $region57: #{_forward_impl.1} parent=11 // pred_check
        %p422 = pneg %p306
      $region58: #{_forward_impl.1} parent=11 // pred_check_branch
        %424 = sbr.rel (%p422) target = $region60
      $region59: #{_forward_impl.1} parent=11 // pred_region
        _
      $region60: #{_forward_impl.1} parent=11 // pred_fallthru
        _
      // Predicated region
      $region61: #{_forward_impl.1} parent=11 // pred_check
        %p425 = pneg %p327
      $region62: #{_forward_impl.1} parent=11 // pred_check_branch
        %427 = sbr.rel (%p425) target = $region64
      $region63: #{_forward_impl.1} parent=11 // pred_region
        _
      $region64: #{_forward_impl.1} parent=11 // pred_fallthru
        _
      // Predicated region
      $region65: #{_forward_impl.1} parent=11 // pred_check
        %p428 = pneg %p348
      $region66: #{_forward_impl.1} parent=11 // pred_check_branch
        %430 = sbr.rel (%p428) target = $region68
      $region67: #{_forward_impl.1} parent=11 // pred_region
        _
      $region68: #{_forward_impl.1} parent=11 // pred_fallthru
        _
    $region12: #{_forward_impl.1} parent=5 // pred_fallthru
      _
    %p431 = scmp.lt.s32.totalorder %s28, 2
    // Predicated region
    $region69: #{_forward_impl.1} parent=5 // pred_check
      %p432 = pneg %p431
    $region70: #{_forward_impl.1} parent=5 // pred_check_branch
      %434 = sbr.rel (%p432) target = $region72
    $region71: #{_forward_impl.1} parent=5 // pred_region
      // Predicated region
      $region73: #{_forward_impl.1} parent=71 // pred_check
        %p435 = pneg %p48
      $region74: #{_forward_impl.1} parent=71 // pred_check_branch
        %437 = sbr.rel (%p435) target = $region76
      $region75: #{_forward_impl.1} parent=71 // pred_region
        %s438 = smul.u32 8, %s28
        %p439 = scmp.lt.s32.totalorder %s438, 15
        %s440 = scalar_select %p439, %s438, 15
        %s441 = smul.addr %s440, 4
        %s442 = scalar_lea.vmem %s1, %s441
        %s443 = smul.u32 8, %s28
      $region76: #{_forward_impl.1} parent=71 // pred_fallthru
        _
    $region72: #{_forward_impl.1} parent=5 // pred_fallthru
      _
    %p444 = scmp.le.s32.totalorder 1, %s28
    %p445 = scmp.lt.s32.totalorder %s28, 3
    %p446 = pnand %p444, %p445
    %p447 = pneg %p446
    // Predicated region
    $region77: #{_forward_impl.1} parent=5 // pred_check
      _
    $region78: #{_forward_impl.1} parent=5 // pred_check_branch
      %449 = sbr.rel (%p446) target = $region80
    $region79: #{_forward_impl.1} parent=5 // pred_region
      %s450 = ssub.s32 %s28, 1
      %s451 = smul.u32 8, %s33
      %p452 = scmp.lt.s32.totalorder %s451, 15
      %s453 = scalar_select %p452, %s451, 15
      %s454 = smul.addr %s453, 4
      %s455 = scalar_lea.vmem %s1, %s454
      %p456 = pneg %p54
      %p457 = pneg %p51
      %p458 = pneg %p75
      %p459 = pneg %p72
      %p460 = pneg %p96
      %p461 = pneg %p93
      %p462 = pneg %p117
      %p463 = pneg %p114
      %p464 = pneg %p138
      %p465 = pneg %p135
      %p466 = pneg %p159
      %p467 = pneg %p156
      %p468 = pneg %p180
      %p469 = pneg %p177
      %p470 = pneg %p201
      %p471 = pneg %p198
      %p472 = pneg %p222
      %p473 = pneg %p219
      %p474 = pneg %p243
      %p475 = pneg %p240
      %p476 = pneg %p264
      %p477 = pneg %p261
      %p478 = pneg %p285
      %p479 = pneg %p282
      %p480 = pneg %p306
      %p481 = pneg %p303
      %p482 = pneg %p327
      %p483 = pneg %p324
      %p484 = pneg %p348
      %p485 = pneg %p345
      %p486 = pneg %p374
      %p487 = pneg %p371
      %p488 = scmp.lt.s32.totalorder %s33, 1
      %s489 = scalar_select %p488, %s33, 1
      %s490 = smul.addr %s489, 8
      %s491 = scalar_lea.vmem %s16, %s490
      %s492 = smul.u32 8, %s33
      %p493 = scmp.lt.s32.totalorder %s492, 15
      %s494 = scalar_select %p493, %s492, 15
      %s495 = smul.addr %s494, 4
      %s496 = scalar_lea.vmem %s1, %s495
      %s497 = smul.u32 8, %s33
      %p498 = scmp.lt.s32.totalorder %s33, 1
      %s499 = scalar_select %p498, %s33, 1
      %s500 = smul.addr %s499, 8
      %s501 = scalar_lea.vmem %s16, %s500
      %s503 = sld [smem:[#allocation3]]
      %s504 = sld [smem:[#allocation3 + $0x1]]
      %s505 = sld [smem:[#allocation3 + $0x3]]
      %v506 = vld [vmem:[%s496] sm:$0xf]
      %v507 = vld [vmem:[%s496 + $0x4] sm:$0xf]
      %v508 = vld [vmem:[%s496 + $0x8] sm:$0xf]
      %v509 = vld [vmem:[%s496 + $0xc] sm:$0xf]
      %v510 = vld [vmem:[%s496 + $0x10] sm:$0xf]
      %v511 = vld [vmem:[%s496 + $0x14] sm:$0xf]
      %v512 = vld [vmem:[%s496 + $0x18] sm:$0xf]
      %v513 = vld [vmem:[%s496 + $0x1c] sm:$0xf]
      %v514 = vld [vmem:[%s2] sm:$0xf]
      %v515 = vld [vmem:[%s2 + $0x4] sm:$0xf]
      %v516 = vld [vmem:[%s2 + $0x8] sm:$0xf]
      %v517 = vld [vmem:[%s2 + $0xc] sm:$0xf]
      %v518 = vld [vmem:[%s2 + $0x10] sm:$0xf]
      %v519 = vld [vmem:[%s2 + $0x14] sm:$0xf]
      %v520 = vld [vmem:[%s2 + $0x18] sm:$0xf]
      %v521 = vld [vmem:[%s2 + $0x1c] sm:$0xf]
      %v522 = vld [vmem:[%s2 + $0x20] sm:$0x7]
      %v531 = vunpack.c.l.b16 %v506
      %v532 = vunpack.c.l.b16 %v507
      %v533 = vunpack.c.l.b16 %v508
      %v534 = vunpack.c.l.b16 %v509
      %v535 = vunpack.c.l.b16 %v510
      %v536 = vunpack.c.l.b16 %v511
      %v537 = vunpack.c.l.b16 %v512
      %v538 = vunpack.c.l.b16 %v513
      %v539 = vpack.c.b16 %v532, %v531
      %v540 = vpack.c.b16 %v534, %v533
      %v541 = vpack.c.b16 %v536, %v535
      %v542 = vpack.c.b16 %v538, %v537
      %v552 = vunpack.c.l.b16 %v514
      %v553 = vunpack.c.l.b16 %v515
      %v554 = vunpack.c.l.b16 %v516
      %v555 = vunpack.c.l.b16 %v517
      %v556 = vunpack.c.l.b16 %v518
      %v557 = vunpack.c.l.b16 %v519
      %v558 = vunpack.c.l.b16 %v520
      %v559 = vunpack.c.l.b16 %v521
      %v560 = vunpack.c.l.b16 %v522
      %v561 = vpack.c.b16 %v553, %v552
      %v562 = vpack.c.b16 %v555, %v554
      %v563 = vpack.c.b16 %v557, %v556
      %v564 = vpack.c.b16 %v559, %v558
      %v565 = vpack.c.b16 %v560, %v560
      %vm570 = vcmask 572416
      %v572 = vsel %vm570, %v539, 0
      %v575 = vsel %vm570, %v540, 0
      %v578 = vsel %vm570, %v541, 0
      %v581 = vsel %vm570, %v542, 0
      %vm583 = vcmask 1042432
      %v585 = vsel %vm583, %v565, 0
      %587 = vmatprep.subr.bf16.mxu0 0
      %588 = vmatpush1.bf16.msra.mxu0 %v561
      %589 = vmatprep.subr.bf16.mxu0 0
      %590 = vmatpush1.bf16.msra.mxu0 %v562
      %591 = vmatprep.subr.bf16.mxu0 0
      %592 = vmatpush1.bf16.msra.mxu0 %v563
      %593 = vmatprep.subr.bf16.mxu0 0
      %594 = vmatpush1.bf16.msra.mxu0 %v564
      %595 = vmatprep.subr.bf16.mxu0 0
      %596 = vmatpush1.bf16.msra.mxu0 %v585
      %597 = vmatprep.subr.bf16.mxu0 0
      %598 = vmatpush1.bf16.msra.mxu0 0
      %599 = vmatprep.subr.bf16.mxu0 0
      %600 = vmatpush1.bf16.msra.mxu0 0
      %601 = vmatprep.subr.bf16.mxu0 0
      %602 = vmatpush1.bf16.msra.mxu0 0
      %603 = vmatprep.subr.bf16.mxu0 0
      %604 = vmatpush1.bf16.msra.mxu0 0
      %605 = vmatprep.subr.bf16.mxu0 0
      %606 = vmatpush1.bf16.msra.mxu0 0
      %607 = vmatprep.subr.bf16.mxu0 0
      %608 = vmatpush1.bf16.msra.mxu0 0
      %609 = vmatprep.subr.bf16.mxu0 0
      %610 = vmatpush1.bf16.msra.mxu0 0
      %611 = vmatprep.subr.bf16.mxu0 0
      %612 = vmatpush1.bf16.msra.mxu0 0
      %613 = vmatprep.subr.bf16.mxu0 0
      %614 = vmatpush1.bf16.msra.mxu0 0
      %615 = vmatprep.subr.bf16.mxu0 0
      %616 = vmatpush1.bf16.msra.mxu0 0
      %617 = vmatprep.subr.bf16.mxu0 0
      %618 = vmatpush1.bf16.msra.mxu0 0
      %619 = vmatprep.mubr.bf16.mxu0 0
      %620 = vmatmul.mubr.bf16.gmra.mrb[0].mxu0 %v572
      %v621 = vpop.f32.mrb[0].mxu0
      %v622 = vadd.f32 0.0, %v621
      %v623 = vpop.f32.mrb[0].mxu0
      %v624 = vpop.f32.mrb[0].mxu0
      %v625 = vadd.f32 0.0, %v624
      %v626 = vpop.f32.mrb[0].mxu0
      %627 = vmatprep.mubr.bf16.mxu0 0
      %628 = vmatmul.mubr.bf16.gmra.mrb[0].mxu0 %v575
      %v629 = vpop.f32.mrb[0].mxu0
      %v630 = vadd.f32 0.0, %v629
      %v631 = vpop.f32.mrb[0].mxu0
      %v632 = vpop.f32.mrb[0].mxu0
      %v633 = vadd.f32 0.0, %v632
      %v634 = vpop.f32.mrb[0].mxu0
      %635 = vmatprep.mubr.bf16.mxu0 0
      %636 = vmatmul.mubr.bf16.gmra.mrb[0].mxu0 %v578
      %v637 = vpop.f32.mrb[0].mxu0
      %v638 = vadd.f32 0.0, %v637
      %v639 = vpop.f32.mrb[0].mxu0
      %v640 = vpop.f32.mrb[0].mxu0
      %v641 = vadd.f32 0.0, %v640
      %v642 = vpop.f32.mrb[0].mxu0
      %643 = vmatprep.mubr.bf16.mxu0 0
      %644 = vmatmul.mubr.bf16.gmra.mrb[0].mxu0 %v581
      %v645 = vpop.f32.mrb[0].mxu0
      %v646 = vadd.f32 0.0, %v645
      %v647 = vpop.f32.mrb[0].mxu0
      %v648 = vpop.f32.mrb[0].mxu0
      %v649 = vadd.f32 0.0, %v648
      %v650 = vpop.f32.mrb[0].mxu0
      %651 = vdwg.mxu0
      %vm652 = vcmask 523264
      %v653 = vsel %vm652, %v622, 0.0
      %v654 = vsel %vm652, %v625, 0.0
      %v655 = vadd.f32 %v653, %v654
      %v656 = vsel %vm652, %v630, 0.0
      %v657 = vadd.f32 %v655, %v656
      %v658 = vsel %vm652, %v633, 0.0
      %v659 = vadd.f32 %v657, %v658
      %v660 = vsel %vm652, %v638, 0.0
      %v661 = vadd.f32 %v659, %v660
      %v662 = vsel %vm652, %v641, 0.0
      %v663 = vadd.f32 %v661, %v662
      %v664 = vsel %vm652, %v646, 0.0
      %v665 = vadd.f32 %v663, %v664
      %v666 = vsel %vm652, %v649, 0.0
      %v667 = vadd.f32 %v665, %v666
      %v668 = vrot.slane %v667, 4
      %v669 = vadd.f32 %v667, %v668
      %v670 = vrot.slane %v669, 2
      %v671 = vadd.f32 %v669, %v670
      %v672 = vrot.slane %v671, 1
      %v673 = vadd.f32 %v671, %v672
      %v674 = vrcp.pop 64.0
      %v675 = vmul.f32 %v673, %v674
      %v676 = vsub.f32 %v622, %v675
      %v677 = vsub.f32 %v625, %v675
      %v678 = vsub.f32 %v630, %v675
      %v679 = vsub.f32 %v633, %v675
      %v680 = vsub.f32 %v638, %v675
      %v681 = vsub.f32 %v641, %v675
      %v682 = vsub.f32 %v646, %v675
      %v683 = vsub.f32 %v649, %v675
      %v684 = vmul.f32 %v676, %v676
      %v685 = vmul.f32 %v677, %v677
      %v686 = vmul.f32 %v678, %v678
      %v687 = vmul.f32 %v679, %v679
      %v688 = vmul.f32 %v680, %v680
      %v689 = vmul.f32 %v681, %v681
      %v690 = vmul.f32 %v682, %v682
      %v691 = vmul.f32 %v683, %v683
      %v692 = vsel %vm652, %v684, 0.0
      %v693 = vsel %vm652, %v685, 0.0
      %v694 = vadd.f32 %v692, %v693
      %v695 = vsel %vm652, %v686, 0.0
      %v696 = vadd.f32 %v694, %v695
      %v697 = vsel %vm652, %v687, 0.0
      %v698 = vadd.f32 %v696, %v697
      %v699 = vsel %vm652, %v688, 0.0
      %v700 = vadd.f32 %v698, %v699
      %v701 = vsel %vm652, %v689, 0.0
      %v702 = vadd.f32 %v700, %v701
      %v703 = vsel %vm652, %v690, 0.0
      %v704 = vadd.f32 %v702, %v703
      %v705 = vsel %vm652, %v691, 0.0
      %v706 = vadd.f32 %v704, %v705
      %v707 = vrot.slane %v706, 4
      %v708 = vadd.f32 %v706, %v707
      %v709 = vrot.slane %v708, 2
      %v710 = vadd.f32 %v708, %v709
      %v711 = vrot.slane %v710, 1
      %v712 = vadd.f32 %v710, %v711
      %v713 = vmul.f32 %v712, %v674
      %v714 = vadd.f32 %v713, 1e-05
      %v715 = vrsqrt.pop %v714
      %v716 = vmul.f32 %v676, %v715
      %v717 = vmul.f32 %v677, %v715
      %v718 = vmul.f32 %v678, %v715
      %v719 = vmul.f32 %v679, %v715
      %v720 = vmul.f32 %v680, %v715
      %v721 = vmul.f32 %v681, %v715
      %v722 = vmul.f32 %v682, %v715
      %v723 = vmul.f32 %v683, %v715
      %v724 = vld [vmem:[%s3] sm:$0x1]
      %v726 = vlaneseq
      %v727 = vshrl.u32 %v726, 7
      %v728 = vsub.s32 0, %v727
      %v729 = vrot.slane %v724, %v728
      %v731 = vmul.f32 %v716, %v729
      %v732 = vmul.f32 %v717, %v729
      %v733 = vmul.f32 %v718, %v729
      %v734 = vmul.f32 %v719, %v729
      %v735 = vmul.f32 %v720, %v729
      %v736 = vmul.f32 %v721, %v729
      %v737 = vmul.f32 %v722, %v729
      %v738 = vmul.f32 %v723, %v729
      %v739 = vld [vmem:[%s4] sm:$0x1]
      %v741 = vlaneseq
      %v742 = vshrl.u32 %v741, 7
      %v743 = vsub.s32 0, %v742
      %v744 = vrot.slane %v739, %v743
      %v746 = vadd.f32 %v731, %v744
      %v747 = vadd.f32 %v732, %v744
      %v748 = vadd.f32 %v733, %v744
      %v749 = vadd.f32 %v734, %v744
      %v750 = vadd.f32 %v735, %v744
      %v751 = vadd.f32 %v736, %v744
      %v752 = vadd.f32 %v737, %v744
      %v753 = vadd.f32 %v738, %v744
      %v754 = vstv %s503
      %vm755 = vcmp.gt.f32.partialorder %v746, %v754
      %vm756 = vcmp.gt.f32.partialorder %v747, %v754
      %vm757 = vcmp.gt.f32.partialorder %v748, %v754
      %vm758 = vcmp.gt.f32.partialorder %v749, %v754
      %vm759 = vcmp.gt.f32.partialorder %v750, %v754
      %vm760 = vcmp.gt.f32.partialorder %v751, %v754
      %vm761 = vcmp.gt.f32.partialorder %v752, %v754
      %vm762 = vcmp.gt.f32.partialorder %v753, %v754
      %v763 = vsel %vm755, 1.0, 0.0
      %v764 = vsel %vm756, 1.0, 0.0
      %v765 = vsel %vm757, 1.0, 0.0
      %v766 = vsel %vm758, 1.0, 0.0
      %v767 = vsel %vm759, 1.0, 0.0
      %v768 = vsel %vm760, 1.0, 0.0
      %v769 = vsel %vm761, 1.0, 0.0
      %v770 = vsel %vm762, 1.0, 0.0
      %v771 = vpack.c.bf16 %v764, %v763
      %v772 = vpack.c.bf16 %v766, %v765
      %v773 = vpack.c.bf16 %v768, %v767
      %v774 = vpack.c.bf16 %v770, %v769
      %v775 = vld [vmem:[%s5] sm:$0xf]
      %v776 = vld [vmem:[%s5 + $0x4] sm:$0xf]
      %v777 = vld [vmem:[%s5 + $0x8] sm:$0xf]
      %v778 = vld [vmem:[%s5 + $0xc] sm:$0xf]
      %v779 = vld [vmem:[%s5 + $0x10] sm:$0xf]
      %v780 = vld [vmem:[%s5 + $0x14] sm:$0xf]
      %v781 = vld [vmem:[%s5 + $0x18] sm:$0xf]
      %v782 = vld [vmem:[%s5 + $0x1c] sm:$0xf]
      %v783 = vld [vmem:[%s7] sm:$0x1]
      %v785 = vlaneseq
      %v786 = vshrl.u32 %v785, 7
      %v787 = vsub.s32 0, %v786
      %v788 = vrot.slane %v783, %v787
      %v798 = vunpack.c.l.b16 %v775
      %v799 = vunpack.c.l.b16 %v776
      %v800 = vunpack.c.l.b16 %v777
      %v801 = vunpack.c.l.b16 %v778
      %v802 = vunpack.c.l.b16 %v779
      %v803 = vunpack.c.l.b16 %v780
      %v804 = vunpack.c.l.b16 %v781
      %v805 = vunpack.c.l.b16 %v782
      %v806 = vpack.c.b16 %v799, %v798
      %v807 = vpack.c.b16 %v801, %v800
      %v808 = vpack.c.b16 %v803, %v802
      %v809 = vpack.c.b16 %v805, %v804
      %v815 = vsel %vm652, %v771, 0
      %v818 = vsel %vm652, %v772, 0
      %v821 = vsel %vm652, %v773, 0
      %v824 = vsel %vm652, %v774, 0
      %826 = vmatprep.subr.bf16.mxu0 0
      %827 = vmatpush1.bf16.msra.mxu0 %v806
      %828 = vmatprep.subr.bf16.mxu0 0
      %829 = vmatpush1.bf16.msra.mxu0 %v807
      %830 = vmatprep.subr.bf16.mxu0 0
      %831 = vmatpush1.bf16.msra.mxu0 %v808
      %832 = vmatprep.subr.bf16.mxu0 0
      %833 = vmatpush1.bf16.msra.mxu0 %v809
      %834 = vmatprep.subr.bf16.mxu0 0
      %835 = vmatpush1.bf16.msra.mxu0 0
      %836 = vmatprep.subr.bf16.mxu0 0
      %837 = vmatpush1.bf16.msra.mxu0 0
      %838 = vmatprep.subr.bf16.mxu0 0
      %839 = vmatpush1.bf16.msra.mxu0 0
      %840 = vmatprep.subr.bf16.mxu0 0
      %841 = vmatpush1.bf16.msra.mxu0 0
      %842 = vmatprep.subr.bf16.mxu0 0
      %843 = vmatpush1.bf16.msra.mxu0 0
      %844 = vmatprep.subr.bf16.mxu0 0
      %845 = vmatpush1.bf16.msra.mxu0 0
      %846 = vmatprep.subr.bf16.mxu0 0
      %847 = vmatpush1.bf16.msra.mxu0 0
      %848 = vmatprep.subr.bf16.mxu0 0
      %849 = vmatpush1.bf16.msra.mxu0 0
      %850 = vmatprep.subr.bf16.mxu0 0
      %851 = vmatpush1.bf16.msra.mxu0 0
      %852 = vmatprep.subr.bf16.mxu0 0
      %853 = vmatpush1.bf16.msra.mxu0 0
      %854 = vmatprep.subr.bf16.mxu0 0
      %855 = vmatpush1.bf16.msra.mxu0 0
      %856 = vmatprep.subr.bf16.mxu0 0
      %857 = vmatpush1.bf16.msra.mxu0 0
      %858 = vmatprep.mubr.bf16.mxu0 0
      %859 = vmatmul.mubr.bf16.gmra.mrb[0].mxu0 %v815
      %v860 = vpop.f32.mrb[0].mxu0
      %v861 = vadd.f32 %v788, %v860
      %v862 = vpop.f32.mrb[0].mxu0
      %v863 = vpop.f32.mrb[0].mxu0
      %v864 = vadd.f32 %v788, %v863
      %v865 = vpop.f32.mrb[0].mxu0
      %866 = vmatprep.mubr.bf16.mxu0 0
      %867 = vmatmul.mubr.bf16.gmra.mrb[0].mxu0 %v818
      %v868 = vpop.f32.mrb[0].mxu0
      %v869 = vadd.f32 %v788, %v868
      %v870 = vpop.f32.mrb[0].mxu0
      %v871 = vpop.f32.mrb[0].mxu0
      %v872 = vadd.f32 %v788, %v871
      %v873 = vpop.f32.mrb[0].mxu0
      %874 = vmatprep.mubr.bf16.mxu0 0
      %875 = vmatmul.mubr.bf16.gmra.mrb[0].mxu0 %v821
      %v876 = vpop.f32.mrb[0].mxu0
      %v877 = vadd.f32 %v788, %v876
      %v878 = vpop.f32.mrb[0].mxu0
      %v879 = vpop.f32.mrb[0].mxu0
      %v880 = vadd.f32 %v788, %v879
      %v881 = vpop.f32.mrb[0].mxu0
      %882 = vmatprep.mubr.bf16.mxu0 0
      %883 = vmatmul.mubr.bf16.gmra.mrb[0].mxu0 %v824
      %v884 = vpop.f32.mrb[0].mxu0
      %v885 = vadd.f32 %v788, %v884
      %v886 = vpop.f32.mrb[0].mxu0
      %v887 = vpop.f32.mrb[0].mxu0
      %v888 = vadd.f32 %v788, %v887
      %v889 = vpop.f32.mrb[0].mxu0
      %890 = vdwg.mxu0
      %v891 = vld [vmem:[%s6] sm:$0xf]
      %v892 = vld [vmem:[%s6 + $0x4] sm:$0xf]
      %v893 = vld [vmem:[%s6 + $0x8] sm:$0xf]
      %v894 = vld [vmem:[%s6 + $0xc] sm:$0xf]
      %v895 = vld [vmem:[%s8] sm:$0xf]
      %v896 = vld [vmem:[%s8 + $0x4] sm:$0xf]
      %v897 = vld [vmem:[%s8 + $0x8] sm:$0xf]
      %v898 = vld [vmem:[%s8 + $0xc] sm:$0xf]
      %v899 = vld [vmem:[%s9] sm:$0xf]
      %v900 = vld [vmem:[%s9 + $0x4] sm:$0xf]
      %v901 = vld [vmem:[%s9 + $0x8] sm:$0xf]
      %v902 = vld [vmem:[%s9 + $0xc] sm:$0xf]
      %v903 = vld [vmem:[%s10] sm:$0x1]
      %v908 = vunpack.c.l.b16 %v891
      %v909 = vunpack.c.l.b16 %v892
      %v910 = vunpack.c.l.b16 %v893
      %v911 = vunpack.c.l.b16 %v894
      %v912 = vpack.c.b16 %v909, %v908
      %v913 = vpack.c.b16 %v911, %v910
      %vm916 = vcmask 261120
      %v918 = vsel %vm916, 0, 0
      %920 = vmatprep.subr.bf16.mxu0 0
      %921 = vmatpush1.bf16.msra.mxu0 %v912
      %922 = vmatprep.subr.bf16.mxu0 0
      %923 = vmatpush1.bf16.msra.mxu0 %v913
      %924 = vmatprep.subr.bf16.mxu0 0
      %925 = vmatpush1.bf16.msra.mxu0 0
      %926 = vmatprep.subr.bf16.mxu0 0
      %927 = vmatpush1.bf16.msra.mxu0 0
      %928 = vmatprep.subr.bf16.mxu0 0
      %929 = vmatpush1.bf16.msra.mxu0 0
      %930 = vmatprep.subr.bf16.mxu0 0
      %931 = vmatpush1.bf16.msra.mxu0 0
      %932 = vmatprep.subr.bf16.mxu0 0
      %933 = vmatpush1.bf16.msra.mxu0 0
      %934 = vmatprep.subr.bf16.mxu0 0
      %935 = vmatpush1.bf16.msra.mxu0 0
      %936 = vmatprep.subr.bf16.mxu0 0
      %937 = vmatpush1.bf16.msra.mxu0 0
      %938 = vmatprep.subr.bf16.mxu0 0
      %939 = vmatpush1.bf16.msra.mxu0 0
      %940 = vmatprep.subr.bf16.mxu0 0
      %941 = vmatpush1.bf16.msra.mxu0 0
      %942 = vmatprep.subr.bf16.mxu0 0
      %943 = vmatpush1.bf16.msra.mxu0 0
      %944 = vmatprep.subr.bf16.mxu0 0
      %945 = vmatpush1.bf16.msra.mxu0 0
      %946 = vmatprep.subr.bf16.mxu0 0
      %947 = vmatpush1.bf16.msra.mxu0 0
      %948 = vmatprep.subr.bf16.mxu0 0
      %949 = vmatpush1.bf16.msra.mxu0 0
      %950 = vmatprep.subr.bf16.mxu0 0
      %951 = vmatpush1.bf16.msra.mxu0 0
      %952 = vmatprep.mubr.bf16.mxu0 0
      %953 = vmatmul.mubr.bf16.gmra.mrb[0].mxu0 %v918
      %v954 = vpop.f32.mrb[0].mxu0
      %v955 = vadd.f32 0.0, %v954
      %v956 = vpop.f32.mrb[0].mxu0
      %v957 = vpop.f32.mrb[0].mxu0
      %v958 = vpop.f32.mrb[0].mxu0
      %959 = vdwg.mxu0
      %v964 = vunpack.c.l.b16 %v899
      %v965 = vunpack.c.l.b16 %v900
      %v966 = vunpack.c.l.b16 %v901
      %v967 = vunpack.c.l.b16 %v902
      %v968 = vpack.c.b16 %v965, %v964
      %v969 = vpack.c.b16 %v967, %v966
      %972 = vmatprep.subr.bf16.mxu0 0
      %973 = vmatpush1.bf16.msra.mxu0 %v968
      %974 = vmatprep.subr.bf16.mxu0 0
      %975 = vmatpush1.bf16.msra.mxu0 %v969
      %976 = vmatprep.subr.bf16.mxu0 0
      %977 = vmatpush1.bf16.msra.mxu0 0
      %978 = vmatprep.subr.bf16.mxu0 0
      %979 = vmatpush1.bf16.msra.mxu0 0
      %980 = vmatprep.subr.bf16.mxu0 0
      %981 = vmatpush1.bf16.msra.mxu0 0
      %982 = vmatprep.subr.bf16.mxu0 0
      %983 = vmatpush1.bf16.msra.mxu0 0
      %984 = vmatprep.subr.bf16.mxu0 0
      %985 = vmatpush1.bf16.msra.mxu0 0
      %986 = vmatprep.subr.bf16.mxu0 0
      %987 = vmatpush1.bf16.msra.mxu0 0
      %988 = vmatprep.subr.bf16.mxu0 0
      %989 = vmatpush1.bf16.msra.mxu0 0
      %990 = vmatprep.subr.bf16.mxu0 0
      %991 = vmatpush1.bf16.msra.mxu0 0
      %992 = vmatprep.subr.bf16.mxu0 0
      %993 = vmatpush1.bf16.msra.mxu0 0
      %994 = vmatprep.subr.bf16.mxu0 0
      %995 = vmatpush1.bf16.msra.mxu0 0
      %996 = vmatprep.subr.bf16.mxu0 0
      %997 = vmatpush1.bf16.msra.mxu0 0
      %998 = vmatprep.subr.bf16.mxu0 0
      %999 = vmatpush1.bf16.msra.mxu0 0
      %1000 = vmatprep.subr.bf16.mxu0 0
      %1001 = vmatpush1.bf16.msra.mxu0 0
      %1002 = vmatprep.subr.bf16.mxu0 0
      %1003 = vmatpush1.bf16.msra.mxu0 0
      %1004 = vmatprep.mubr.bf16.mxu0 0
      %1005 = vmatmul.mubr.bf16.gmra.mrb[0].mxu0 %v918
      %v1006 = vpop.f32.mrb[0].mxu0
      %v1007 = vadd.f32 0.0, %v1006
      %v1008 = vpop.f32.mrb[0].mxu0
      %v1009 = vpop.f32.mrb[0].mxu0
      %v1010 = vpop.f32.mrb[0].mxu0
      %1011 = vdwg.mxu0
      %v1012 = vadd.f32 %v861, %v955
      %v1013 = vxor.u32 %v1012, 2147483648
      %v1014 = vmul.f32 %v1013, 1.442695
      %v1015 = vpow.pop %v1014
      %v1016 = vadd.f32 %v1015, 1.0
      %v1017 = vrcp.pop %v1016
      %v1018 = vmul.f32 1.0, %v1017
      %v1019 = vtanh.pop %v1012
      %v1020 = vmul.f32 %v1018, 0.0
      %1022 = vrot.lane.b32.xlu0 %v1019, 64
      %v1023 = vpop.permute.xlu0 %1022
      %v1025 = vmul.f32 %v1018, %v1023
      %1027 = vrot.lane.b32.xlu0 %v1025, 32
      %v1028 = vpop.permute.xlu0 %1027
      %v1030 = vadd.f32 %v1020, %v1028
      %v1031 = vtanh.pop %v1030
      %1033 = vrot.lane.b32.xlu0 %v1031, 64
      %v1034 = vpop.permute.xlu0 %1033
      %v1036 = vmul.f32 %v1018, %v1034
      %v1037 = vstv %s504
      %vm1038 = vcmp.gt.f32.partialorder %v1036, %v1037
      %v1039 = vsel %vm1038, 1.0, 0.0
      %v1040 = vpack.c.bf16 %v1039, %v1039
      %1042 = vrot.lane.b32.xlu0 %v1040, 32
      %v1043 = vpop.permute.xlu0 %1042
      %v1048 = vunpack.c.l.b16 %v895
      %v1049 = vunpack.c.l.b16 %v896
      %v1050 = vunpack.c.l.b16 %v897
      %v1051 = vunpack.c.l.b16 %v898
      %v1052 = vpack.c.b16 %v1049, %v1048
      %v1053 = vpack.c.b16 %v1051, %v1050
      %v1057 = vsel %vm916, %v1043, 0
      %1059 = vmatprep.subr.bf16.mxu0 0
      %1060 = vmatpush1.bf16.msra.mxu0 %v1052
      %1061 = vmatprep.subr.bf16.mxu0 0
      %1062 = vmatpush1.bf16.msra.mxu0 %v1053
      %1063 = vmatprep.subr.bf16.mxu0 0
      %1064 = vmatpush1.bf16.msra.mxu0 0
      %1065 = vmatprep.subr.bf16.mxu0 0
      %1066 = vmatpush1.bf16.msra.mxu0 0
      %1067 = vmatprep.subr.bf16.mxu0 0
      %1068 = vmatpush1.bf16.msra.mxu0 0
      %1069 = vmatprep.subr.bf16.mxu0 0
      %1070 = vmatpush1.bf16.msra.mxu0 0
      %1071 = vmatprep.subr.bf16.mxu0 0
      %1072 = vmatpush1.bf16.msra.mxu0 0
      %1073 = vmatprep.subr.bf16.mxu0 0
      %1074 = vmatpush1.bf16.msra.mxu0 0
      %1075 = vmatprep.subr.bf16.mxu0 0
      %1076 = vmatpush1.bf16.msra.mxu0 0
      %1077 = vmatprep.subr.bf16.mxu0 0
      %1078 = vmatpush1.bf16.msra.mxu0 0
      %1079 = vmatprep.subr.bf16.mxu0 0
      %1080 = vmatpush1.bf16.msra.mxu0 0
      %1081 = vmatprep.subr.bf16.mxu0 0
      %1082 = vmatpush1.bf16.msra.mxu0 0
      %1083 = vmatprep.subr.bf16.mxu0 0
      %1084 = vmatpush1.bf16.msra.mxu0 0
      %1085 = vmatprep.subr.bf16.mxu0 0
      %1086 = vmatpush1.bf16.msra.mxu0 0
      %1087 = vmatprep.subr.bf16.mxu0 0
      %1088 = vmatpush1.bf16.msra.mxu0 0
      %1089 = vmatprep.subr.bf16.mxu0 0
      %1090 = vmatpush1.bf16.msra.mxu0 0
      %1091 = vmatprep.mubr.bf16.mxu0 0
      %1092 = vmatmul.mubr.bf16.gmra.mrb[0].mxu0 %v1057
      %v1093 = vpop.f32.mrb[0].mxu0
      %v1094 = vadd.f32 %v1007, %v1093
      %v1095 = vpop.f32.mrb[0].mxu0
      %v1096 = vpop.f32.mrb[0].mxu0
      %v1097 = vpop.f32.mrb[0].mxu0
      %1098 = vdwg.mxu0
      %v1100 = vlaneseq
      %v1101 = vshrl.u32 %v1100, 7
      %v1102 = vsub.s32 0, %v1101
      %v1103 = vrot.slane %v903, %v1102
      %v1105 = vadd.f32 %v1094, %v1103
      %v1106 = vxor.u32 %v1105, 2147483648
      %v1107 = vmul.f32 %v1106, 1.442695
      %v1108 = vpow.pop %v1107
      %v1109 = vadd.f32 %v1108, 1.0
      %v1110 = vrcp.pop %v1109
      %v1111 = vmul.f32 1.0, %v1110
      %v1112 = vtanh.pop %v1105
      %v1113 = vmul.f32 %v1111, 0.0
      %1115 = vrot.lane.b32.xlu0 %v1112, 64
      %v1116 = vpop.permute.xlu0 %1115
      %v1118 = vmul.f32 %v1111, %v1116
      %1120 = vrot.lane.b32.xlu0 %v1118, 32
      %v1121 = vpop.permute.xlu0 %1120
      %v1123 = vadd.f32 %v1113, %v1121
      %v1124 = vtanh.pop %v1123
      %1126 = vrot.lane.b32.xlu0 %v1124, 64
      %v1127 = vpop.permute.xlu0 %1126
      %v1129 = vmul.f32 %v1111, %v1127
      %v1130 = vadd.f32 %v1129, 0.0
      %v1131 = vpack.c.bf16 %v1036, %v1036
      %1133 = vrot.lane.b32.xlu0 %v1131, 32
      %v1134 = vpop.permute.xlu0 %1133
      %v1136 = vsel %vm916, %v1134, 0
      %1138 = vmatprep.subr.bf16.mxu0 0
      %1139 = vmatpush1.bf16.msra.mxu0 %v912
      %1140 = vmatprep.subr.bf16.mxu0 0
      %1141 = vmatpush1.bf16.msra.mxu0 %v913
      %1142 = vmatprep.subr.bf16.mxu0 0
      %1143 = vmatpush1.bf16.msra.mxu0 0
      %1144 = vmatprep.subr.bf16.mxu0 0
      %1145 = vmatpush1.bf16.msra.mxu0 0
      %1146 = vmatprep.subr.bf16.mxu0 0
      %1147 = vmatpush1.bf16.msra.mxu0 0
      %1148 = vmatprep.subr.bf16.mxu0 0
      %1149 = vmatpush1.bf16.msra.mxu0 0
      %1150 = vmatprep.subr.bf16.mxu0 0
      %1151 = vmatpush1.bf16.msra.mxu0 0
      %1152 = vmatprep.subr.bf16.mxu0 0
      %1153 = vmatpush1.bf16.msra.mxu0 0
      %1154 = vmatprep.subr.bf16.mxu0 0
      %1155 = vmatpush1.bf16.msra.mxu0 0
      %1156 = vmatprep.subr.bf16.mxu0 0
      %1157 = vmatpush1.bf16.msra.mxu0 0
      %1158 = vmatprep.subr.bf16.mxu0 0
      %1159 = vmatpush1.bf16.msra.mxu0 0
      %1160 = vmatprep.subr.bf16.mxu0 0
      %1161 = vmatpush1.bf16.msra.mxu0 0
      %1162 = vmatprep.subr.bf16.mxu0 0
      %1163 = vmatpush1.bf16.msra.mxu0 0
      %1164 = vmatprep.subr.bf16.mxu0 0
      %1165 = vmatpush1.bf16.msra.mxu0 0
      %1166 = vmatprep.subr.bf16.mxu0 0
      %1167 = vmatpush1.bf16.msra.mxu0 0
      %1168 = vmatprep.subr.bf16.mxu0 0
      %1169 = vmatpush1.bf16.msra.mxu0 0
      %1170 = vmatprep.mubr.bf16.mxu0 0
      %1171 = vmatmul.mubr.bf16.gmra.mrb[0].mxu0 %v1136
      %v1172 = vpop.f32.mrb[0].mxu0
      %v1173 = vadd.f32 0.0, %v1172
      %v1174 = vpop.f32.mrb[0].mxu0
      %v1175 = vpop.f32.mrb[0].mxu0
      %v1176 = vpop.f32.mrb[0].mxu0
      %1177 = vdwg.mxu0
      %v1178 = vpack.c.bf16 %v1129, %v1129
      %1180 = vrot.lane.b32.xlu0 %v1178, 32
      %v1181 = vpop.permute.xlu0 %1180
      %v1183 = vsel %vm916, %v1181, 0
      %1185 = vmatprep.subr.bf16.mxu0 0
      %1186 = vmatpush1.bf16.msra.mxu0 %v968
      %1187 = vmatprep.subr.bf16.mxu0 0
      %1188 = vmatpush1.bf16.msra.mxu0 %v969
      %1189 = vmatprep.subr.bf16.mxu0 0
      %1190 = vmatpush1.bf16.msra.mxu0 0
      %1191 = vmatprep.subr.bf16.mxu0 0
      %1192 = vmatpush1.bf16.msra.mxu0 0
      %1193 = vmatprep.subr.bf16.mxu0 0
      %1194 = vmatpush1.bf16.msra.mxu0 0
      %1195 = vmatprep.subr.bf16.mxu0 0
      %1196 = vmatpush1.bf16.msra.mxu0 0
      %1197 = vmatprep.subr.bf16.mxu0 0
      %1198 = vmatpush1.bf16.msra.mxu0 0
      %1199 = vmatprep.subr.bf16.mxu0 0
      %1200 = vmatpush1.bf16.msra.mxu0 0
      %1201 = vmatprep.subr.bf16.mxu0 0
      %1202 = vmatpush1.bf16.msra.mxu0 0
      %1203 = vmatprep.subr.bf16.mxu0 0
      %1204 = vmatpush1.bf16.msra.mxu0 0
      %1205 = vmatprep.subr.bf16.mxu0 0
      %1206 = vmatpush1.bf16.msra.mxu0 0
      %1207 = vmatprep.subr.bf16.mxu0 0
      %1208 = vmatpush1.bf16.msra.mxu0 0
      %1209 = vmatprep.subr.bf16.mxu0 0
      %1210 = vmatpush1.bf16.msra.mxu0 0
      %1211 = vmatprep.subr.bf16.mxu0 0
      %1212 = vmatpush1.bf16.msra.mxu0 0
      %1213 = vmatprep.subr.bf16.mxu0 0
      %1214 = vmatpush1.bf16.msra.mxu0 0
      %1215 = vmatprep.subr.bf16.mxu0 0
      %1216 = vmatpush1.bf16.msra.mxu0 0
      %1217 = vmatprep.mubr.bf16.mxu0 0
      %1218 = vmatmul.mubr.bf16.gmra.mrb[0].mxu0 %v1183
      %v1219 = vpop.f32.mrb[0].mxu0
      %v1220 = vadd.f32 0.0, %v1219
      %v1221 = vpop.f32.mrb[0].mxu0
      %v1222 = vpop.f32.mrb[0].mxu0
      %v1223 = vpop.f32.mrb[0].mxu0
      %1224 = vdwg.mxu0
      %v1225 = vadd.f32 %v864, %v1173
      %v1226 = vxor.u32 %v1225, 2147483648
      %v1227 = vmul.f32 %v1226, 1.442695
      %v1228 = vpow.pop %v1227
      %v1229 = vadd.f32 %v1228, 1.0
      %v1230 = vrcp.pop %v1229
      %v1231 = vmul.f32 1.0, %v1230
      %v1232 = vtanh.pop %v1225
      %v1233 = vmul.f32 %v1231, %v1030
      %1235 = vrot.lane.b32.xlu0 %v1232, 64
      %v1236 = vpop.permute.xlu0 %1235
      %v1238 = vmul.f32 %v1231, %v1236
      %1240 = vrot.lane.b32.xlu0 %v1238, 32
      %v1241 = vpop.permute.xlu0 %1240
      %v1243 = vadd.f32 %v1233, %v1241
      %v1244 = vtanh.pop %v1243
      %1246 = vrot.lane.b32.xlu0 %v1244, 64
      %v1247 = vpop.permute.xlu0 %1246
      %v1249 = vmul.f32 %v1231, %v1247
      %vm1250 = vcmp.gt.f32.partialorder %v1249, %v1037
      %v1251 = vsel %vm1250, 1.0, 0.0
      %v1252 = vpack.c.bf16 %v1251, %v1251
      %1254 = vrot.lane.b32.xlu0 %v1252, 32
      %v1255 = vpop.permute.xlu0 %1254
      %v1257 = vsel %vm916, %v1255, 0
      %1259 = vmatprep.subr.bf16.mxu0 0
      %1260 = vmatpush1.bf16.msra.mxu0 %v1052
      %1261 = vmatprep.subr.bf16.mxu0 0
      %1262 = vmatpush1.bf16.msra.mxu0 %v1053
      %1263 = vmatprep.subr.bf16.mxu0 0
      %1264 = vmatpush1.bf16.msra.mxu0 0
      %1265 = vmatprep.subr.bf16.mxu0 0
      %1266 = vmatpush1.bf16.msra.mxu0 0
      %1267 = vmatprep.subr.bf16.mxu0 0
      %1268 = vmatpush1.bf16.msra.mxu0 0
      %1269 = vmatprep.subr.bf16.mxu0 0
      %1270 = vmatpush1.bf16.msra.mxu0 0
      %1271 = vmatprep.subr.bf16.mxu0 0
      %1272 = vmatpush1.bf16.msra.mxu0 0
      %1273 = vmatprep.subr.bf16.mxu0 0
      %1274 = vmatpush1.bf16.msra.mxu0 0
      %1275 = vmatprep.subr.bf16.mxu0 0
      %1276 = vmatpush1.bf16.msra.mxu0 0
      %1277 = vmatprep.subr.bf16.mxu0 0
      %1278 = vmatpush1.bf16.msra.mxu0 0
      %1279 = vmatprep.subr.bf16.mxu0 0
      %1280 = vmatpush1.bf16.msra.mxu0 0
      %1281 = vmatprep.subr.bf16.mxu0 0
      %1282 = vmatpush1.bf16.msra.mxu0 0
      %1283 = vmatprep.subr.bf16.mxu0 0
      %1284 = vmatpush1.bf16.msra.mxu0 0
      %1285 = vmatprep.subr.bf16.mxu0 0
      %1286 = vmatpush1.bf16.msra.mxu0 0
      %1287 = vmatprep.subr.bf16.mxu0 0
      %1288 = vmatpush1.bf16.msra.mxu0 0
      %1289 = vmatprep.subr.bf16.mxu0 0
      %1290 = vmatpush1.bf16.msra.mxu0 0
      %1291 = vmatprep.mubr.bf16.mxu0 0
      %1292 = vmatmul.mubr.bf16.gmra.mrb[0].mxu0 %v1257
      %v1293 = vpop.f32.mrb[0].mxu0
      %v1294 = vadd.f32 %v1220, %v1293
      %v1295 = vpop.f32.mrb[0].mxu0
      %v1296 = vpop.f32.mrb[0].mxu0
      %v1297 = vpop.f32.mrb[0].mxu0
      %1298 = vdwg.mxu0
      %v1299 = vadd.f32 %v1294, %v1103
      %v1300 = vxor.u32 %v1299, 2147483648
      %v1301 = vmul.f32 %v1300, 1.442695
      %v1302 = vpow.pop %v1301
      %v1303 = vadd.f32 %v1302, 1.0
      %v1304 = vrcp.pop %v1303
      %v1305 = vmul.f32 1.0, %v1304
      %v1306 = vtanh.pop %v1299
      %v1307 = vmul.f32 %v1305, %v1123
      %1309 = vrot.lane.b32.xlu0 %v1306, 64
      %v1310 = vpop.permute.xlu0 %1309
      %v1312 = vmul.f32 %v1305, %v1310
      %1314 = vrot.lane.b32.xlu0 %v1312, 32
      %v1315 = vpop.permute.xlu0 %1314
      %v1317 = vadd.f32 %v1307, %v1315
      %v1318 = vtanh.pop %v1317
      %1320 = vrot.lane.b32.xlu0 %v1318, 64
      %v1321 = vpop.permute.xlu0 %1320
      %v1323 = vmul.f32 %v1305, %v1321
      %v1324 = vadd.f32 %v1130, %v1323
      %v1325 = vpack.c.bf16 %v1249, %v1249
      %1327 = vrot.lane.b32.xlu0 %v1325, 32
      %v1328 = vpop.permute.xlu0 %1327
      %v1330 = vsel %vm916, %v1328, 0
      %1332 = vmatprep.subr.bf16.mxu0 0
      %1333 = vmatpush1.bf16.msra.mxu0 %v912
      %1334 = vmatprep.subr.bf16.mxu0 0
      %1335 = vmatpush1.bf16.msra.mxu0 %v913
      %1336 = vmatprep.subr.bf16.mxu0 0
      %1337 = vmatpush1.bf16.msra.mxu0 0
      %1338 = vmatprep.subr.bf16.mxu0 0
      %1339 = vmatpush1.bf16.msra.mxu0 0
      %1340 = vmatprep.subr.bf16.mxu0 0
      %1341 = vmatpush1.bf16.msra.mxu0 0
      %1342 = vmatprep.subr.bf16.mxu0 0
      %1343 = vmatpush1.bf16.msra.mxu0 0
      %1344 = vmatprep.subr.bf16.mxu0 0
      %1345 = vmatpush1.bf16.msra.mxu0 0
      %1346 = vmatprep.subr.bf16.mxu0 0
      %1347 = vmatpush1.bf16.msra.mxu0 0
      %1348 = vmatprep.subr.bf16.mxu0 0
      %1349 = vmatpush1.bf16.msra.mxu0 0
      %1350 = vmatprep.subr.bf16.mxu0 0
      %1351 = vmatpush1.bf16.msra.mxu0 0
      %1352 = vmatprep.subr.bf16.mxu0 0
      %1353 = vmatpush1.bf16.msra.mxu0 0
      %1354 = vmatprep.subr.bf16.mxu0 0
      %1355 = vmatpush1.bf16.msra.mxu0 0
      %1356 = vmatprep.subr.bf16.mxu0 0
      %1357 = vmatpush1.bf16.msra.mxu0 0
      %1358 = vmatprep.subr.bf16.mxu0 0
      %1359 = vmatpush1.bf16.msra.mxu0 0
      %1360 = vmatprep.subr.bf16.mxu0 0
      %1361 = vmatpush1.bf16.msra.mxu0 0
      %1362 = vmatprep.subr.bf16.mxu0 0
      %1363 = vmatpush1.bf16.msra.mxu0 0
      %1364 = vmatprep.mubr.bf16.mxu0 0
      %1365 = vmatmul.mubr.bf16.gmra.mrb[0].mxu0 %v1330
      %v1366 = vpop.f32.mrb[0].mxu0
      %v1367 = vadd.f32 0.0, %v1366
      %v1368 = vpop.f32.mrb[0].mxu0
      %v1369 = vpop.f32.mrb[0].mxu0
      %v1370 = vpop.f32.mrb[0].mxu0
      %1371 = vdwg.mxu0
      %v1372 = vpack.c.bf16 %v1323, %v1323
      %1374 = vrot.lane.b32.xlu0 %v1372, 32
      %v1375 = vpop.permute.xlu0 %1374
      %v1377 = vsel %vm916, %v1375, 0
      %1379 = vmatprep.subr.bf16.mxu0 0
      %1380 = vmatpush1.bf16.msra.mxu0 %v968
      %1381 = vmatprep.subr.bf16.mxu0 0
      %1382 = vmatpush1.bf16.msra.mxu0 %v969
      %1383 = vmatprep.subr.bf16.mxu0 0
      %1384 = vmatpush1.bf16.msra.mxu0 0
      %1385 = vmatprep.subr.bf16.mxu0 0
      %1386 = vmatpush1.bf16.msra.mxu0 0
      %1387 = vmatprep.subr.bf16.mxu0 0
      %1388 = vmatpush1.bf16.msra.mxu0 0
      %1389 = vmatprep.subr.bf16.mxu0 0
      %1390 = vmatpush1.bf16.msra.mxu0 0
      %1391 = vmatprep.subr.bf16.mxu0 0
      %1392 = vmatpush1.bf16.msra.mxu0 0
      %1393 = vmatprep.subr.bf16.mxu0 0
      %1394 = vmatpush1.bf16.msra.mxu0 0
      %1395 = vmatprep.subr.bf16.mxu0 0
      %1396 = vmatpush1.bf16.msra.mxu0 0
      %1397 = vmatprep.subr.bf16.mxu0 0
      %1398 = vmatpush1.bf16.msra.mxu0 0
      %1399 = vmatprep.subr.bf16.mxu0 0
      %1400 = vmatpush1.bf16.msra.mxu0 0
      %1401 = vmatprep.subr.bf16.mxu0 0
      %1402 = vmatpush1.bf16.msra.mxu0 0
      %1403 = vmatprep.subr.bf16.mxu0 0
      %1404 = vmatpush1.bf16.msra.mxu0 0
      %1405 = vmatprep.subr.bf16.mxu0 0
      %1406 = vmatpush1.bf16.msra.mxu0 0
      %1407 = vmatprep.subr.bf16.mxu0 0
      %1408 = vmatpush1.bf16.msra.mxu0 0
      %1409 = vmatprep.subr.bf16.mxu0 0
      %1410 = vmatpush1.bf16.msra.mxu0 0
      %1411 = vmatprep.mubr.bf16.mxu0 0
      %1412 = vmatmul.mubr.bf16.gmra.mrb[0].mxu0 %v1377
      %v1413 = vpop.f32.mrb[0].mxu0
      %v1414 = vadd.f32 0.0, %v1413
      %v1415 = vpop.f32.mrb[0].mxu0
      %v1416 = vpop.f32.mrb[0].mxu0
      %v1417 = vpop.f32.mrb[0].mxu0
      %1418 = vdwg.mxu0
      %v1419 = vadd.f32 %v869, %v1367
      %v1420 = vxor.u32 %v1419, 2147483648
      %v1421 = vmul.f32 %v1420, 1.442695
      %v1422 = vpow.pop %v1421
      %v1423 = vadd.f32 %v1422, 1.0
      %v1424 = vrcp.pop %v1423
      %v1425 = vmul.f32 1.0, %v1424
      %v1426 = vtanh.pop %v1419
      %v1427 = vmul.f32 %v1425, %v1243
      %1429 = vrot.lane.b32.xlu0 %v1426, 64
      %v1430 = vpop.permute.xlu0 %1429
      %v1432 = vmul.f32 %v1425, %v1430
      %1434 = vrot.lane.b32.xlu0 %v1432, 32
      %v1435 = vpop.permute.xlu0 %1434
      %v1437 = vadd.f32 %v1427, %v1435
      %v1438 = vtanh.pop %v1437
      %1440 = vrot.lane.b32.xlu0 %v1438, 64
      %v1441 = vpop.permute.xlu0 %1440
      %v1443 = vmul.f32 %v1425, %v1441
      %vm1444 = vcmp.gt.f32.partialorder %v1443, %v1037
      %v1445 = vsel %vm1444, 1.0, 0.0
      %v1446 = vpack.c.bf16 %v1445, %v1445
      %1448 = vrot.lane.b32.xlu0 %v1446, 32
      %v1449 = vpop.permute.xlu0 %1448
      %v1451 = vsel %vm916, %v1449, 0
      %1453 = vmatprep.subr.bf16.mxu0 0
      %1454 = vmatpush1.bf16.msra.mxu0 %v1052
      %1455 = vmatprep.subr.bf16.mxu0 0
      %1456 = vmatpush1.bf16.msra.mxu0 %v1053
      %1457 = vmatprep.subr.bf16.mxu0 0
      %1458 = vmatpush1.bf16.msra.mxu0 0
      %1459 = vmatprep.subr.bf16.mxu0 0
      %1460 = vmatpush1.bf16.msra.mxu0 0
      %1461 = vmatprep.subr.bf16.mxu0 0
      %1462 = vmatpush1.bf16.msra.mxu0 0
      %1463 = vmatprep.subr.bf16.mxu0 0
      %1464 = vmatpush1.bf16.msra.mxu0 0
      %1465 = vmatprep.subr.bf16.mxu0 0
      %1466 = vmatpush1.bf16.msra.mxu0 0
      %1467 = vmatprep.subr.bf16.mxu0 0
      %1468 = vmatpush1.bf16.msra.mxu0 0
      %1469 = vmatprep.subr.bf16.mxu0 0
      %1470 = vmatpush1.bf16.msra.mxu0 0
      %1471 = vmatprep.subr.bf16.mxu0 0
      %1472 = vmatpush1.bf16.msra.mxu0 0
      %1473 = vmatprep.subr.bf16.mxu0 0
      %1474 = vmatpush1.bf16.msra.mxu0 0
      %1475 = vmatprep.subr.bf16.mxu0 0
      %1476 = vmatpush1.bf16.msra.mxu0 0
      %1477 = vmatprep.subr.bf16.mxu0 0
      %1478 = vmatpush1.bf16.msra.mxu0 0
      %1479 = vmatprep.subr.bf16.mxu0 0
      %1480 = vmatpush1.bf16.msra.mxu0 0
      %1481 = vmatprep.subr.bf16.mxu0 0
      %1482 = vmatpush1.bf16.msra.mxu0 0
      %1483 = vmatprep.subr.bf16.mxu0 0
      %1484 = vmatpush1.bf16.msra.mxu0 0
      %1485 = vmatprep.mubr.bf16.mxu0 0
      %1486 = vmatmul.mubr.bf16.gmra.mrb[0].mxu0 %v1451
      %v1487 = vpop.f32.mrb[0].mxu0
      %v1488 = vadd.f32 %v1414, %v1487
      %v1489 = vpop.f32.mrb[0].mxu0
      %v1490 = vpop.f32.mrb[0].mxu0
      %v1491 = vpop.f32.mrb[0].mxu0
      %1492 = vdwg.mxu0
      %v1493 = vadd.f32 %v1488, %v1103
      %v1494 = vxor.u32 %v1493, 2147483648
      %v1495 = vmul.f32 %v1494, 1.442695
      %v1496 = vpow.pop %v1495
      %v1497 = vadd.f32 %v1496, 1.0
      %v1498 = vrcp.pop %v1497
      %v1499 = vmul.f32 1.0, %v1498
      %v1500 = vtanh.pop %v1493
      %v1501 = vmul.f32 %v1499, %v1317
      %1503 = vrot.lane.b32.xlu0 %v1500, 64
      %v1504 = vpop.permute.xlu0 %1503
      %v1506 = vmul.f32 %v1499, %v1504
      %1508 = vrot.lane.b32.xlu0 %v1506, 32
      %v1509 = vpop.permute.xlu0 %1508
      %v1511 = vadd.f32 %v1501, %v1509
      %v1512 = vtanh.pop %v1511
      %1514 = vrot.lane.b32.xlu0 %v1512, 64
      %v1515 = vpop.permute.xlu0 %1514
      %v1517 = vmul.f32 %v1499, %v1515
      %v1518 = vadd.f32 %v1324, %v1517
      %v1519 = vpack.c.bf16 %v1443, %v1443
      %1521 = vrot.lane.b32.xlu0 %v1519, 32
      %v1522 = vpop.permute.xlu0 %1521
      %v1524 = vsel %vm916, %v1522, 0
      %1526 = vmatprep.subr.bf16.mxu0 0
      %1527 = vmatpush1.bf16.msra.mxu0 %v912
      %1528 = vmatprep.subr.bf16.mxu0 0
      %1529 = vmatpush1.bf16.msra.mxu0 %v913
      %1530 = vmatprep.subr.bf16.mxu0 0
      %1531 = vmatpush1.bf16.msra.mxu0 0
      %1532 = vmatprep.subr.bf16.mxu0 0
      %1533 = vmatpush1.bf16.msra.mxu0 0
      %1534 = vmatprep.subr.bf16.mxu0 0
      %1535 = vmatpush1.bf16.msra.mxu0 0
      %1536 = vmatprep.subr.bf16.mxu0 0
      %1537 = vmatpush1.bf16.msra.mxu0 0
      %1538 = vmatprep.subr.bf16.mxu0 0
      %1539 = vmatpush1.bf16.msra.mxu0 0
      %1540 = vmatprep.subr.bf16.mxu0 0
      %1541 = vmatpush1.bf16.msra.mxu0 0
      %1542 = vmatprep.subr.bf16.mxu0 0
      %1543 = vmatpush1.bf16.msra.mxu0 0
      %1544 = vmatprep.subr.bf16.mxu0 0
      %1545 = vmatpush1.bf16.msra.mxu0 0
      %1546 = vmatprep.subr.bf16.mxu0 0
      %1547 = vmatpush1.bf16.msra.mxu0 0
      %1548 = vmatprep.subr.bf16.mxu0 0
      %1549 = vmatpush1.bf16.msra.mxu0 0
      %1550 = vmatprep.subr.bf16.mxu0 0
      %1551 = vmatpush1.bf16.msra.mxu0 0
      %1552 = vmatprep.subr.bf16.mxu0 0
      %1553 = vmatpush1.bf16.msra.mxu0 0
      %1554 = vmatprep.subr.bf16.mxu0 0
      %1555 = vmatpush1.bf16.msra.mxu0 0
      %1556 = vmatprep.subr.bf16.mxu0 0
      %1557 = vmatpush1.bf16.msra.mxu0 0
      %1558 = vmatprep.mubr.bf16.mxu0 0
      %1559 = vmatmul.mubr.bf16.gmra.mrb[0].mxu0 %v1524
      %v1560 = vpop.f32.mrb[0].mxu0
      %v1561 = vadd.f32 0.0, %v1560
      %v1562 = vpop.f32.mrb[0].mxu0
      %v1563 = vpop.f32.mrb[0].mxu0
      %v1564 = vpop.f32.mrb[0].mxu0
      %1565 = vdwg.mxu0
      %v1566 = vpack.c.bf16 %v1517, %v1517
      %1568 = vrot.lane.b32.xlu0 %v1566, 32
      %v1569 = vpop.permute.xlu0 %1568
      %v1571 = vsel %vm916, %v1569, 0
      %1573 = vmatprep.subr.bf16.mxu0 0
      %1574 = vmatpush1.bf16.msra.mxu0 %v968
      %1575 = vmatprep.subr.bf16.mxu0 0
      %1576 = vmatpush1.bf16.msra.mxu0 %v969
      %1577 = vmatprep.subr.bf16.mxu0 0
      %1578 = vmatpush1.bf16.msra.mxu0 0
      %1579 = vmatprep.subr.bf16.mxu0 0
      %1580 = vmatpush1.bf16.msra.mxu0 0
      %1581 = vmatprep.subr.bf16.mxu0 0
      %1582 = vmatpush1.bf16.msra.mxu0 0
      %1583 = vmatprep.subr.bf16.mxu0 0
      %1584 = vmatpush1.bf16.msra.mxu0 0
      %1585 = vmatprep.subr.bf16.mxu0 0
      %1586 = vmatpush1.bf16.msra.mxu0 0
      %1587 = vmatprep.subr.bf16.mxu0 0
      %1588 = vmatpush1.bf16.msra.mxu0 0
      %1589 = vmatprep.subr.bf16.mxu0 0
      %1590 = vmatpush1.bf16.msra.mxu0 0
      %1591 = vmatprep.subr.bf16.mxu0 0
      %1592 = vmatpush1.bf16.msra.mxu0 0
      %1593 = vmatprep.subr.bf16.mxu0 0
      %1594 = vmatpush1.bf16.msra.mxu0 0
      %1595 = vmatprep.subr.bf16.mxu0 0
      %1596 = vmatpush1.bf16.msra.mxu0 0
      %1597 = vmatprep.subr.bf16.mxu0 0
      %1598 = vmatpush1.bf16.msra.mxu0 0
      %1599 = vmatprep.subr.bf16.mxu0 0
      %1600 = vmatpush1.bf16.msra.mxu0 0
      %1601 = vmatprep.subr.bf16.mxu0 0
      %1602 = vmatpush1.bf16.msra.mxu0 0
      %1603 = vmatprep.subr.bf16.mxu0 0
      %1604 = vmatpush1.bf16.msra.mxu0 0
      %1605 = vmatprep.mubr.bf16.mxu0 0
      %1606 = vmatmul.mubr.bf16.gmra.mrb[0].mxu0 %v1571
      %v1607 = vpop.f32.mrb[0].mxu0
      %v1608 = vadd.f32 0.0, %v1607
      %v1609 = vpop.f32.mrb[0].mxu0
      %v1610 = vpop.f32.mrb[0].mxu0
      %v1611 = vpop.f32.mrb[0].mxu0
      %1612 = vdwg.mxu0
      %v1613 = vadd.f32 %v872, %v1561
      %v1614 = vxor.u32 %v1613, 2147483648
      %v1615 = vmul.f32 %v1614, 1.442695
      %v1616 = vpow.pop %v1615
      %v1617 = vadd.f32 %v1616, 1.0
      %v1618 = vrcp.pop %v1617
      %v1619 = vmul.f32 1.0, %v1618
      %v1620 = vtanh.pop %v1613
      %v1621 = vmul.f32 %v1619, %v1437
      %1623 = vrot.lane.b32.xlu0 %v1620, 64
      %v1624 = vpop.permute.xlu0 %1623
      %v1626 = vmul.f32 %v1619, %v1624
      %1628 = vrot.lane.b32.xlu0 %v1626, 32
      %v1629 = vpop.permute.xlu0 %1628
      %v1631 = vadd.f32 %v1621, %v1629
      %v1632 = vtanh.pop %v1631
      %1634 = vrot.lane.b32.xlu0 %v1632, 64
      %v1635 = vpop.permute.xlu0 %1634
      %v1637 = vmul.f32 %v1619, %v1635
      %vm1638 = vcmp.gt.f32.partialorder %v1637, %v1037
      %v1639 = vsel %vm1638, 1.0, 0.0
      %v1640 = vpack.c.bf16 %v1639, %v1639
      %1642 = vrot.lane.b32.xlu0 %v1640, 32
      %v1643 = vpop.permute.xlu0 %1642
      %v1645 = vsel %vm916, %v1643, 0
      %1647 = vmatprep.subr.bf16.mxu0 0
      %1648 = vmatpush1.bf16.msra.mxu0 %v1052
      %1649 = vmatprep.subr.bf16.mxu0 0
      %1650 = vmatpush1.bf16.msra.mxu0 %v1053
      %1651 = vmatprep.subr.bf16.mxu0 0
      %1652 = vmatpush1.bf16.msra.mxu0 0
      %1653 = vmatprep.subr.bf16.mxu0 0
      %1654 = vmatpush1.bf16.msra.mxu0 0
      %1655 = vmatprep.subr.bf16.mxu0 0
      %1656 = vmatpush1.bf16.msra.mxu0 0
      %1657 = vmatprep.subr.bf16.mxu0 0
      %1658 = vmatpush1.bf16.msra.mxu0 0
      %1659 = vmatprep.subr.bf16.mxu0 0
      %1660 = vmatpush1.bf16.msra.mxu0 0
      %1661 = vmatprep.subr.bf16.mxu0 0
      %1662 = vmatpush1.bf16.msra.mxu0 0
      %1663 = vmatprep.subr.bf16.mxu0 0
      %1664 = vmatpush1.bf16.msra.mxu0 0
      %1665 = vmatprep.subr.bf16.mxu0 0
      %1666 = vmatpush1.bf16.msra.mxu0 0
      %1667 = vmatprep.subr.bf16.mxu0 0
      %1668 = vmatpush1.bf16.msra.mxu0 0
      %1669 = vmatprep.subr.bf16.mxu0 0
      %1670 = vmatpush1.bf16.msra.mxu0 0
      %1671 = vmatprep.subr.bf16.mxu0 0
      %1672 = vmatpush1.bf16.msra.mxu0 0
      %1673 = vmatprep.subr.bf16.mxu0 0
      %1674 = vmatpush1.bf16.msra.mxu0 0
      %1675 = vmatprep.subr.bf16.mxu0 0
      %1676 = vmatpush1.bf16.msra.mxu0 0
      %1677 = vmatprep.subr.bf16.mxu0 0
      %1678 = vmatpush1.bf16.msra.mxu0 0
      %1679 = vmatprep.mubr.bf16.mxu0 0
      %1680 = vmatmul.mubr.bf16.gmra.mrb[0].mxu0 %v1645
      %v1681 = vpop.f32.mrb[0].mxu0
      %v1682 = vadd.f32 %v1608, %v1681
      %v1683 = vpop.f32.mrb[0].mxu0
      %v1684 = vpop.f32.mrb[0].mxu0
      %v1685 = vpop.f32.mrb[0].mxu0
      %1686 = vdwg.mxu0
      %v1687 = vadd.f32 %v1682, %v1103
      %v1688 = vxor.u32 %v1687, 2147483648
      %v1689 = vmul.f32 %v1688, 1.442695
      %v1690 = vpow.pop %v1689
      %v1691 = vadd.f32 %v1690, 1.0
      %v1692 = vrcp.pop %v1691
      %v1693 = vmul.f32 1.0, %v1692
      %v1694 = vtanh.pop %v1687
      %v1695 = vmul.f32 %v1693, %v1511
      %1697 = vrot.lane.b32.xlu0 %v1694, 64
      %v1698 = vpop.permute.xlu0 %1697
      %v1700 = vmul.f32 %v1693, %v1698
      %1702 = vrot.lane.b32.xlu0 %v1700, 32
      %v1703 = vpop.permute.xlu0 %1702
      %v1705 = vadd.f32 %v1695, %v1703
      %v1706 = vtanh.pop %v1705
      %1708 = vrot.lane.b32.xlu0 %v1706, 64
      %v1709 = vpop.permute.xlu0 %1708
      %v1711 = vmul.f32 %v1693, %v1709
      %v1712 = vadd.f32 %v1518, %v1711
      %v1713 = vpack.c.bf16 %v1637, %v1637
      %1715 = vrot.lane.b32.xlu0 %v1713, 32
      %v1716 = vpop.permute.xlu0 %1715
      %v1718 = vsel %vm916, %v1716, 0
      %1720 = vmatprep.subr.bf16.mxu0 0
      %1721 = vmatpush1.bf16.msra.mxu0 %v912
      %1722 = vmatprep.subr.bf16.mxu0 0
      %1723 = vmatpush1.bf16.msra.mxu0 %v913
      %1724 = vmatprep.subr.bf16.mxu0 0
      %1725 = vmatpush1.bf16.msra.mxu0 0
      %1726 = vmatprep.subr.bf16.mxu0 0
      %1727 = vmatpush1.bf16.msra.mxu0 0
      %1728 = vmatprep.subr.bf16.mxu0 0
      %1729 = vmatpush1.bf16.msra.mxu0 0
      %1730 = vmatprep.subr.bf16.mxu0 0
      %1731 = vmatpush1.bf16.msra.mxu0 0
      %1732 = vmatprep.subr.bf16.mxu0 0
      %1733 = vmatpush1.bf16.msra.mxu0 0
      %1734 = vmatprep.subr.bf16.mxu0 0
      %1735 = vmatpush1.bf16.msra.mxu0 0
      %1736 = vmatprep.subr.bf16.mxu0 0
      %1737 = vmatpush1.bf16.msra.mxu0 0
      %1738 = vmatprep.subr.bf16.mxu0 0
      %1739 = vmatpush1.bf16.msra.mxu0 0
      %1740 = vmatprep.subr.bf16.mxu0 0
      %1741 = vmatpush1.bf16.msra.mxu0 0
      %1742 = vmatprep.subr.bf16.mxu0 0
      %1743 = vmatpush1.bf16.msra.mxu0 0
      %1744 = vmatprep.subr.bf16.mxu0 0
      %1745 = vmatpush1.bf16.msra.mxu0 0
      %1746 = vmatprep.subr.bf16.mxu0 0
      %1747 = vmatpush1.bf16.msra.mxu0 0
      %1748 = vmatprep.subr.bf16.mxu0 0
      %1749 = vmatpush1.bf16.msra.mxu0 0
      %1750 = vmatprep.subr.bf16.mxu0 0
      %1751 = vmatpush1.bf16.msra.mxu0 0
      %1752 = vmatprep.mubr.bf16.mxu0 0
      %1753 = vmatmul.mubr.bf16.gmra.mrb[0].mxu0 %v1718
      %v1754 = vpop.f32.mrb[0].mxu0
      %v1755 = vadd.f32 0.0, %v1754
      %v1756 = vpop.f32.mrb[0].mxu0
      %v1757 = vpop.f32.mrb[0].mxu0
      %v1758 = vpop.f32.mrb[0].mxu0
      %1759 = vdwg.mxu0
      %v1760 = vpack.c.bf16 %v1711, %v1711
      %1762 = vrot.lane.b32.xlu0 %v1760, 32
      %v1763 = vpop.permute.xlu0 %1762
      %v1765 = vsel %vm916, %v1763, 0
      %1767 = vmatprep.subr.bf16.mxu0 0
      %1768 = vmatpush1.bf16.msra.mxu0 %v968
      %1769 = vmatprep.subr.bf16.mxu0 0
      %1770 = vmatpush1.bf16.msra.mxu0 %v969
      %1771 = vmatprep.subr.bf16.mxu0 0
      %1772 = vmatpush1.bf16.msra.mxu0 0
      %1773 = vmatprep.subr.bf16.mxu0 0
      %1774 = vmatpush1.bf16.msra.mxu0 0
      %1775 = vmatprep.subr.bf16.mxu0 0
      %1776 = vmatpush1.bf16.msra.mxu0 0
      %1777 = vmatprep.subr.bf16.mxu0 0
      %1778 = vmatpush1.bf16.msra.mxu0 0
      %1779 = vmatprep.subr.bf16.mxu0 0
      %1780 = vmatpush1.bf16.msra.mxu0 0
      %1781 = vmatprep.subr.bf16.mxu0 0
      %1782 = vmatpush1.bf16.msra.mxu0 0
      %1783 = vmatprep.subr.bf16.mxu0 0
      %1784 = vmatpush1.bf16.msra.mxu0 0
      %1785 = vmatprep.subr.bf16.mxu0 0
      %1786 = vmatpush1.bf16.msra.mxu0 0
      %1787 = vmatprep.subr.bf16.mxu0 0
      %1788 = vmatpush1.bf16.msra.mxu0 0
      %1789 = vmatprep.subr.bf16.mxu0 0
      %1790 = vmatpush1.bf16.msra.mxu0 0
      %1791 = vmatprep.subr.bf16.mxu0 0
      %1792 = vmatpush1.bf16.msra.mxu0 0
      %1793 = vmatprep.subr.bf16.mxu0 0
      %1794 = vmatpush1.bf16.msra.mxu0 0
      %1795 = vmatprep.subr.bf16.mxu0 0
      %1796 = vmatpush1.bf16.msra.mxu0 0
      %1797 = vmatprep.subr.bf16.mxu0 0
      %1798 = vmatpush1.bf16.msra.mxu0 0
      %1799 = vmatprep.mubr.bf16.mxu0 0
      %1800 = vmatmul.mubr.bf16.gmra.mrb[0].mxu0 %v1765
      %v1801 = vpop.f32.mrb[0].mxu0
      %v1802 = vadd.f32 0.0, %v1801
      %v1803 = vpop.f32.mrb[0].mxu0
      %v1804 = vpop.f32.mrb[0].mxu0
      %v1805 = vpop.f32.mrb[0].mxu0
      %1806 = vdwg.mxu0
      %v1807 = vadd.f32 %v877, %v1755
      %v1808 = vxor.u32 %v1807, 2147483648
      %v1809 = vmul.f32 %v1808, 1.442695
      %v1810 = vpow.pop %v1809
      %v1811 = vadd.f32 %v1810, 1.0
      %v1812 = vrcp.pop %v1811
      %v1813 = vmul.f32 1.0, %v1812
      %v1814 = vtanh.pop %v1807
      %v1815 = vmul.f32 %v1813, %v1631
      %1817 = vrot.lane.b32.xlu0 %v1814, 64
      %v1818 = vpop.permute.xlu0 %1817
      %v1820 = vmul.f32 %v1813, %v1818
      %1822 = vrot.lane.b32.xlu0 %v1820, 32
      %v1823 = vpop.permute.xlu0 %1822
      %v1825 = vadd.f32 %v1815, %v1823
      %v1826 = vtanh.pop %v1825
      %1828 = vrot.lane.b32.xlu0 %v1826, 64
      %v1829 = vpop.permute.xlu0 %1828
      %v1831 = vmul.f32 %v1813, %v1829
      %vm1832 = vcmp.gt.f32.partialorder %v1831, %v1037
      %v1833 = vsel %vm1832, 1.0, 0.0
      %v1834 = vpack.c.bf16 %v1833, %v1833
      %1836 = vrot.lane.b32.xlu0 %v1834, 32
      %v1837 = vpop.permute.xlu0 %1836
      %v1839 = vsel %vm916, %v1837, 0
      %1841 = vmatprep.subr.bf16.mxu0 0
      %1842 = vmatpush1.bf16.msra.mxu0 %v1052
      %1843 = vmatprep.subr.bf16.mxu0 0
      %1844 = vmatpush1.bf16.msra.mxu0 %v1053
      %1845 = vmatprep.subr.bf16.mxu0 0
      %1846 = vmatpush1.bf16.msra.mxu0 0
      %1847 = vmatprep.subr.bf16.mxu0 0
      %1848 = vmatpush1.bf16.msra.mxu0 0
      %1849 = vmatprep.subr.bf16.mxu0 0
      %1850 = vmatpush1.bf16.msra.mxu0 0
      %1851 = vmatprep.subr.bf16.mxu0 0
      %1852 = vmatpush1.bf16.msra.mxu0 0
      %1853 = vmatprep.subr.bf16.mxu0 0
      %1854 = vmatpush1.bf16.msra.mxu0 0
      %1855 = vmatprep.subr.bf16.mxu0 0
      %1856 = vmatpush1.bf16.msra.mxu0 0
      %1857 = vmatprep.subr.bf16.mxu0 0
      %1858 = vmatpush1.bf16.msra.mxu0 0
      %1859 = vmatprep.subr.bf16.mxu0 0
      %1860 = vmatpush1.bf16.msra.mxu0 0
      %1861 = vmatprep.subr.bf16.mxu0 0
      %1862 = vmatpush1.bf16.msra.mxu0 0
      %1863 = vmatprep.subr.bf16.mxu0 0
      %1864 = vmatpush1.bf16.msra.mxu0 0
      %1865 = vmatprep.subr.bf16.mxu0 0
      %1866 = vmatpush1.bf16.msra.mxu0 0
      %1867 = vmatprep.subr.bf16.mxu0 0
      %1868 = vmatpush1.bf16.msra.mxu0 0
      %1869 = vmatprep.subr.bf16.mxu0 0
      %1870 = vmatpush1.bf16.msra.mxu0 0
      %1871 = vmatprep.subr.bf16.mxu0 0
      %1872 = vmatpush1.bf16.msra.mxu0 0
      %1873 = vmatprep.mubr.bf16.mxu0 0
      %1874 = vmatmul.mubr.bf16.gmra.mrb[0].mxu0 %v1839
      %v1875 = vpop.f32.mrb[0].mxu0
      %v1876 = vadd.f32 %v1802, %v1875
      %v1877 = vpop.f32.mrb[0].mxu0
      %v1878 = vpop.f32.mrb[0].mxu0
      %v1879 = vpop.f32.mrb[0].mxu0
      %1880 = vdwg.mxu0
      %v1881 = vadd.f32 %v1876, %v1103
      %v1882 = vxor.u32 %v1881, 2147483648
      %v1883 = vmul.f32 %v1882, 1.442695
      %v1884 = vpow.pop %v1883
      %v1885 = vadd.f32 %v1884, 1.0
      %v1886 = vrcp.pop %v1885
      %v1887 = vmul.f32 1.0, %v1886
      %v1888 = vtanh.pop %v1881
      %v1889 = vmul.f32 %v1887, %v1705
      %1891 = vrot.lane.b32.xlu0 %v1888, 64
      %v1892 = vpop.permute.xlu0 %1891
      %v1894 = vmul.f32 %v1887, %v1892
      %1896 = vrot.lane.b32.xlu0 %v1894, 32
      %v1897 = vpop.permute.xlu0 %1896
      %v1899 = vadd.f32 %v1889, %v1897
      %v1900 = vtanh.pop %v1899
      %1902 = vrot.lane.b32.xlu0 %v1900, 64
      %v1903 = vpop.permute.xlu0 %1902
      %v1905 = vmul.f32 %v1887, %v1903
      %v1906 = vadd.f32 %v1712, %v1905
      %v1907 = vpack.c.bf16 %v1831, %v1831
      %1909 = vrot.lane.b32.xlu0 %v1907, 32
      %v1910 = vpop.permute.xlu0 %1909
      %v1912 = vsel %vm916, %v1910, 0
      %1914 = vmatprep.subr.bf16.mxu0 0
      %1915 = vmatpush1.bf16.msra.mxu0 %v912
      %1916 = vmatprep.subr.bf16.mxu0 0
      %1917 = vmatpush1.bf16.msra.mxu0 %v913
      %1918 = vmatprep.subr.bf16.mxu0 0
      %1919 = vmatpush1.bf16.msra.mxu0 0
      %1920 = vmatprep.subr.bf16.mxu0 0
      %1921 = vmatpush1.bf16.msra.mxu0 0
      %1922 = vmatprep.subr.bf16.mxu0 0
      %1923 = vmatpush1.bf16.msra.mxu0 0
      %1924 = vmatprep.subr.bf16.mxu0 0
      %1925 = vmatpush1.bf16.msra.mxu0 0
      %1926 = vmatprep.subr.bf16.mxu0 0
      %1927 = vmatpush1.bf16.msra.mxu0 0
      %1928 = vmatprep.subr.bf16.mxu0 0
      %1929 = vmatpush1.bf16.msra.mxu0 0
      %1930 = vmatprep.subr.bf16.mxu0 0
      %1931 = vmatpush1.bf16.msra.mxu0 0
      %1932 = vmatprep.subr.bf16.mxu0 0
      %1933 = vmatpush1.bf16.msra.mxu0 0
      %1934 = vmatprep.subr.bf16.mxu0 0
      %1935 = vmatpush1.bf16.msra.mxu0 0
      %1936 = vmatprep.subr.bf16.mxu0 0
      %1937 = vmatpush1.bf16.msra.mxu0 0
      %1938 = vmatprep.subr.bf16.mxu0 0
      %1939 = vmatpush1.bf16.msra.mxu0 0
      %1940 = vmatprep.subr.bf16.mxu0 0
      %1941 = vmatpush1.bf16.msra.mxu0 0
      %1942 = vmatprep.subr.bf16.mxu0 0
      %1943 = vmatpush1.bf16.msra.mxu0 0
      %1944 = vmatprep.subr.bf16.mxu0 0
      %1945 = vmatpush1.bf16.msra.mxu0 0
      %1946 = vmatprep.mubr.bf16.mxu0 0
      %1947 = vmatmul.mubr.bf16.gmra.mrb[0].mxu0 %v1912
      %v1948 = vpop.f32.mrb[0].mxu0
      %v1949 = vadd.f32 0.0, %v1948
      %v1950 = vpop.f32.mrb[0].mxu0
      %v1951 = vpop.f32.mrb[0].mxu0
      %v1952 = vpop.f32.mrb[0].mxu0
      %1953 = vdwg.mxu0
      %v1954 = vpack.c.bf16 %v1905, %v1905
      %1956 = vrot.lane.b32.xlu0 %v1954, 32
      %v1957 = vpop.permute.xlu0 %1956
      %v1959 = vsel %vm916, %v1957, 0
      %1961 = vmatprep.subr.bf16.mxu0 0
      %1962 = vmatpush1.bf16.msra.mxu0 %v968
      %1963 = vmatprep.subr.bf16.mxu0 0
      %1964 = vmatpush1.bf16.msra.mxu0 %v969
      %1965 = vmatprep.subr.bf16.mxu0 0
      %1966 = vmatpush1.bf16.msra.mxu0 0
      %1967 = vmatprep.subr.bf16.mxu0 0
      %1968 = vmatpush1.bf16.msra.mxu0 0
      %1969 = vmatprep.subr.bf16.mxu0 0
      %1970 = vmatpush1.bf16.msra.mxu0 0
      %1971 = vmatprep.subr.bf16.mxu0 0
      %1972 = vmatpush1.bf16.msra.mxu0 0
      %1973 = vmatprep.subr.bf16.mxu0 0
      %1974 = vmatpush1.bf16.msra.mxu0 0
      %1975 = vmatprep.subr.bf16.mxu0 0
      %1976 = vmatpush1.bf16.msra.mxu0 0
      %1977 = vmatprep.subr.bf16.mxu0 0
      %1978 = vmatpush1.bf16.msra.mxu0 0
      %1979 = vmatprep.subr.bf16.mxu0 0
      %1980 = vmatpush1.bf16.msra.mxu0 0
      %1981 = vmatprep.subr.bf16.mxu0 0
      %1982 = vmatpush1.bf16.msra.mxu0 0
      %1983 = vmatprep.subr.bf16.mxu0 0
      %1984 = vmatpush1.bf16.msra.mxu0 0
      %1985 = vmatprep.subr.bf16.mxu0 0
      %1986 = vmatpush1.bf16.msra.mxu0 0
      %1987 = vmatprep.subr.bf16.mxu0 0
      %1988 = vmatpush1.bf16.msra.mxu0 0
      %1989 = vmatprep.subr.bf16.mxu0 0
      %1990 = vmatpush1.bf16.msra.mxu0 0
      %1991 = vmatprep.subr.bf16.mxu0 0
      %1992 = vmatpush1.bf16.msra.mxu0 0
      %1993 = vmatprep.mubr.bf16.mxu0 0
      %1994 = vmatmul.mubr.bf16.gmra.mrb[0].mxu0 %v1959
      %v1995 = vpop.f32.mrb[0].mxu0
      %v1996 = vadd.f32 0.0, %v1995
      %v1997 = vpop.f32.mrb[0].mxu0
      %v1998 = vpop.f32.mrb[0].mxu0
      %v1999 = vpop.f32.mrb[0].mxu0
      %2000 = vdwg.mxu0
      %v2001 = vadd.f32 %v880, %v1949
      %v2002 = vxor.u32 %v2001, 2147483648
      %v2003 = vmul.f32 %v2002, 1.442695
      %v2004 = vpow.pop %v2003
      %v2005 = vadd.f32 %v2004, 1.0
      %v2006 = vrcp.pop %v2005
      %v2007 = vmul.f32 1.0, %v2006
      %v2008 = vtanh.pop %v2001
      %v2009 = vmul.f32 %v2007, %v1825
      %2011 = vrot.lane.b32.xlu0 %v2008, 64
      %v2012 = vpop.permute.xlu0 %2011
      %v2014 = vmul.f32 %v2007, %v2012
      %2016 = vrot.lane.b32.xlu0 %v2014, 32
      %v2017 = vpop.permute.xlu0 %2016
      %v2019 = vadd.f32 %v2009, %v2017
      %v2020 = vtanh.pop %v2019
      %2022 = vrot.lane.b32.xlu0 %v2020, 64
      %v2023 = vpop.permute.xlu0 %2022
      %v2025 = vmul.f32 %v2007, %v2023
      %vm2026 = vcmp.gt.f32.partialorder %v2025, %v1037
      %v2027 = vsel %vm2026, 1.0, 0.0
      %v2028 = vpack.c.bf16 %v2027, %v2027
      %2030 = vrot.lane.b32.xlu0 %v2028, 32
      %v2031 = vpop.permute.xlu0 %2030
      %v2033 = vsel %vm916, %v2031, 0
      %2035 = vmatprep.subr.bf16.mxu0 0
      %2036 = vmatpush1.bf16.msra.mxu0 %v1052
      %2037 = vmatprep.subr.bf16.mxu0 0
      %2038 = vmatpush1.bf16.msra.mxu0 %v1053
      %2039 = vmatprep.subr.bf16.mxu0 0
      %2040 = vmatpush1.bf16.msra.mxu0 0
      %2041 = vmatprep.subr.bf16.mxu0 0
      %2042 = vmatpush1.bf16.msra.mxu0 0
      %2043 = vmatprep.subr.bf16.mxu0 0
      %2044 = vmatpush1.bf16.msra.mxu0 0
      %2045 = vmatprep.subr.bf16.mxu0 0
      %2046 = vmatpush1.bf16.msra.mxu0 0
      %2047 = vmatprep.subr.bf16.mxu0 0
      %2048 = vmatpush1.bf16.msra.mxu0 0
      %2049 = vmatprep.subr.bf16.mxu0 0
      %2050 = vmatpush1.bf16.msra.mxu0 0
      %2051 = vmatprep.subr.bf16.mxu0 0
      %2052 = vmatpush1.bf16.msra.mxu0 0
      %2053 = vmatprep.subr.bf16.mxu0 0
      %2054 = vmatpush1.bf16.msra.mxu0 0
      %2055 = vmatprep.subr.bf16.mxu0 0
      %2056 = vmatpush1.bf16.msra.mxu0 0
      %2057 = vmatprep.subr.bf16.mxu0 0
      %2058 = vmatpush1.bf16.msra.mxu0 0
      %2059 = vmatprep.subr.bf16.mxu0 0
      %2060 = vmatpush1.bf16.msra.mxu0 0
      %2061 = vmatprep.subr.bf16.mxu0 0
      %2062 = vmatpush1.bf16.msra.mxu0 0
      %2063 = vmatprep.subr.bf16.mxu0 0
      %2064 = vmatpush1.bf16.msra.mxu0 0
      %2065 = vmatprep.subr.bf16.mxu0 0
      %2066 = vmatpush1.bf16.msra.mxu0 0
      %2067 = vmatprep.mubr.bf16.mxu0 0
      %2068 = vmatmul.mubr.bf16.gmra.mrb[0].mxu0 %v2033
      %v2069 = vpop.f32.mrb[0].mxu0
      %v2070 = vadd.f32 %v1996, %v2069
      %v2071 = vpop.f32.mrb[0].mxu0
      %v2072 = vpop.f32.mrb[0].mxu0
      %v2073 = vpop.f32.mrb[0].mxu0
      %2074 = vdwg.mxu0
      %v2075 = vadd.f32 %v2070, %v1103
      %v2076 = vxor.u32 %v2075, 2147483648
      %v2077 = vmul.f32 %v2076, 1.442695
      %v2078 = vpow.pop %v2077
      %v2079 = vadd.f32 %v2078, 1.0
      %v2080 = vrcp.pop %v2079
      %v2081 = vmul.f32 1.0, %v2080
      %v2082 = vtanh.pop %v2075
      %v2083 = vmul.f32 %v2081, %v1899
      %2085 = vrot.lane.b32.xlu0 %v2082, 64
      %v2086 = vpop.permute.xlu0 %2085
      %v2088 = vmul.f32 %v2081, %v2086
      %2090 = vrot.lane.b32.xlu0 %v2088, 32
      %v2091 = vpop.permute.xlu0 %2090
      %v2093 = vadd.f32 %v2083, %v2091
      %v2094 = vtanh.pop %v2093
      %2096 = vrot.lane.b32.xlu0 %v2094, 64
      %v2097 = vpop.permute.xlu0 %2096
      %v2099 = vmul.f32 %v2081, %v2097
      %v2100 = vadd.f32 %v1906, %v2099
      %v2101 = vpack.c.bf16 %v2025, %v2025
      %2103 = vrot.lane.b32.xlu0 %v2101, 32
      %v2104 = vpop.permute.xlu0 %2103
      %v2106 = vsel %vm916, %v2104, 0
      %2108 = vmatprep.subr.bf16.mxu0 0
      %2109 = vmatpush1.bf16.msra.mxu0 %v912
      %2110 = vmatprep.subr.bf16.mxu0 0
      %2111 = vmatpush1.bf16.msra.mxu0 %v913
      %2112 = vmatprep.subr.bf16.mxu0 0
      %2113 = vmatpush1.bf16.msra.mxu0 0
      %2114 = vmatprep.subr.bf16.mxu0 0
      %2115 = vmatpush1.bf16.msra.mxu0 0
      %2116 = vmatprep.subr.bf16.mxu0 0
      %2117 = vmatpush1.bf16.msra.mxu0 0
      %2118 = vmatprep.subr.bf16.mxu0 0
      %2119 = vmatpush1.bf16.msra.mxu0 0
      %2120 = vmatprep.subr.bf16.mxu0 0
      %2121 = vmatpush1.bf16.msra.mxu0 0
      %2122 = vmatprep.subr.bf16.mxu0 0
      %2123 = vmatpush1.bf16.msra.mxu0 0
      %2124 = vmatprep.subr.bf16.mxu0 0
      %2125 = vmatpush1.bf16.msra.mxu0 0
      %2126 = vmatprep.subr.bf16.mxu0 0
      %2127 = vmatpush1.bf16.msra.mxu0 0
      %2128 = vmatprep.subr.bf16.mxu0 0
      %2129 = vmatpush1.bf16.msra.mxu0 0
      %2130 = vmatprep.subr.bf16.mxu0 0
      %2131 = vmatpush1.bf16.msra.mxu0 0
      %2132 = vmatprep.subr.bf16.mxu0 0
      %2133 = vmatpush1.bf16.msra.mxu0 0
      %2134 = vmatprep.subr.bf16.mxu0 0
      %2135 = vmatpush1.bf16.msra.mxu0 0
      %2136 = vmatprep.subr.bf16.mxu0 0
      %2137 = vmatpush1.bf16.msra.mxu0 0
      %2138 = vmatprep.subr.bf16.mxu0 0
      %2139 = vmatpush1.bf16.msra.mxu0 0
      %2140 = vmatprep.mubr.bf16.mxu0 0
      %2141 = vmatmul.mubr.bf16.gmra.mrb[0].mxu0 %v2106
      %v2142 = vpop.f32.mrb[0].mxu0
      %v2143 = vadd.f32 0.0, %v2142
      %v2144 = vpop.f32.mrb[0].mxu0
      %v2145 = vpop.f32.mrb[0].mxu0
      %v2146 = vpop.f32.mrb[0].mxu0
      %2147 = vdwg.mxu0
      %v2148 = vpack.c.bf16 %v2099, %v2099
      %2150 = vrot.lane.b32.xlu0 %v2148, 32
      %v2151 = vpop.permute.xlu0 %2150
      %v2153 = vsel %vm916, %v2151, 0
      %2155 = vmatprep.subr.bf16.mxu0 0
      %2156 = vmatpush1.bf16.msra.mxu0 %v968
      %2157 = vmatprep.subr.bf16.mxu0 0
      %2158 = vmatpush1.bf16.msra.mxu0 %v969
      %2159 = vmatprep.subr.bf16.mxu0 0
      %2160 = vmatpush1.bf16.msra.mxu0 0
      %2161 = vmatprep.subr.bf16.mxu0 0
      %2162 = vmatpush1.bf16.msra.mxu0 0
      %2163 = vmatprep.subr.bf16.mxu0 0
      %2164 = vmatpush1.bf16.msra.mxu0 0
      %2165 = vmatprep.subr.bf16.mxu0 0
      %2166 = vmatpush1.bf16.msra.mxu0 0
      %2167 = vmatprep.subr.bf16.mxu0 0
      %2168 = vmatpush1.bf16.msra.mxu0 0
      %2169 = vmatprep.subr.bf16.mxu0 0
      %2170 = vmatpush1.bf16.msra.mxu0 0
      %2171 = vmatprep.subr.bf16.mxu0 0
      %2172 = vmatpush1.bf16.msra.mxu0 0
      %2173 = vmatprep.subr.bf16.mxu0 0
      %2174 = vmatpush1.bf16.msra.mxu0 0
      %2175 = vmatprep.subr.bf16.mxu0 0
      %2176 = vmatpush1.bf16.msra.mxu0 0
      %2177 = vmatprep.subr.bf16.mxu0 0
      %2178 = vmatpush1.bf16.msra.mxu0 0
      %2179 = vmatprep.subr.bf16.mxu0 0
      %2180 = vmatpush1.bf16.msra.mxu0 0
      %2181 = vmatprep.subr.bf16.mxu0 0
      %2182 = vmatpush1.bf16.msra.mxu0 0
      %2183 = vmatprep.subr.bf16.mxu0 0
      %2184 = vmatpush1.bf16.msra.mxu0 0
      %2185 = vmatprep.subr.bf16.mxu0 0
      %2186 = vmatpush1.bf16.msra.mxu0 0
      %2187 = vmatprep.mubr.bf16.mxu0 0
      %2188 = vmatmul.mubr.bf16.gmra.mrb[0].mxu0 %v2153
      %v2189 = vpop.f32.mrb[0].mxu0
      %v2190 = vadd.f32 0.0, %v2189
      %v2191 = vpop.f32.mrb[0].mxu0
      %v2192 = vpop.f32.mrb[0].mxu0
      %v2193 = vpop.f32.mrb[0].mxu0
      %2194 = vdwg.mxu0
      %v2195 = vadd.f32 %v885, %v2143
      %v2196 = vxor.u32 %v2195, 2147483648
      %v2197 = vmul.f32 %v2196, 1.442695
      %v2198 = vpow.pop %v2197
      %v2199 = vadd.f32 %v2198, 1.0
      %v2200 = vrcp.pop %v2199
      %v2201 = vmul.f32 1.0, %v2200
      %v2202 = vtanh.pop %v2195
      %v2203 = vmul.f32 %v2201, %v2019
      %2205 = vrot.lane.b32.xlu0 %v2202, 64
      %v2206 = vpop.permute.xlu0 %2205
      %v2208 = vmul.f32 %v2201, %v2206
      %2210 = vrot.lane.b32.xlu0 %v2208, 32
      %v2211 = vpop.permute.xlu0 %2210
      %v2213 = vadd.f32 %v2203, %v2211
      %v2214 = vtanh.pop %v2213
      %2216 = vrot.lane.b32.xlu0 %v2214, 64
      %v2217 = vpop.permute.xlu0 %2216
      %v2219 = vmul.f32 %v2201, %v2217
      %vm2220 = vcmp.gt.f32.partialorder %v2219, %v1037
      %v2221 = vsel %vm2220, 1.0, 0.0
      %v2222 = vpack.c.bf16 %v2221, %v2221
      %2224 = vrot.lane.b32.xlu0 %v2222, 32
      %v2225 = vpop.permute.xlu0 %2224
      %v2227 = vsel %vm916, %v2225, 0
      %2229 = vmatprep.subr.bf16.mxu0 0
      %2230 = vmatpush1.bf16.msra.mxu0 %v1052
      %2231 = vmatprep.subr.bf16.mxu0 0
      %2232 = vmatpush1.bf16.msra.mxu0 %v1053
      %2233 = vmatprep.subr.bf16.mxu0 0
      %2234 = vmatpush1.bf16.msra.mxu0 0
      %2235 = vmatprep.subr.bf16.mxu0 0
      %2236 = vmatpush1.bf16.msra.mxu0 0
      %2237 = vmatprep.subr.bf16.mxu0 0
      %2238 = vmatpush1.bf16.msra.mxu0 0
      %2239 = vmatprep.subr.bf16.mxu0 0
      %2240 = vmatpush1.bf16.msra.mxu0 0
      %2241 = vmatprep.subr.bf16.mxu0 0
      %2242 = vmatpush1.bf16.msra.mxu0 0
      %2243 = vmatprep.subr.bf16.mxu0 0
      %2244 = vmatpush1.bf16.msra.mxu0 0
      %2245 = vmatprep.subr.bf16.mxu0 0
      %2246 = vmatpush1.bf16.msra.mxu0 0
      %2247 = vmatprep.subr.bf16.mxu0 0
      %2248 = vmatpush1.bf16.msra.mxu0 0
      %2249 = vmatprep.subr.bf16.mxu0 0
      %2250 = vmatpush1.bf16.msra.mxu0 0
      %2251 = vmatprep.subr.bf16.mxu0 0
      %2252 = vmatpush1.bf16.msra.mxu0 0
      %2253 = vmatprep.subr.bf16.mxu0 0
      %2254 = vmatpush1.bf16.msra.mxu0 0
      %2255 = vmatprep.subr.bf16.mxu0 0
      %2256 = vmatpush1.bf16.msra.mxu0 0
      %2257 = vmatprep.subr.bf16.mxu0 0
      %2258 = vmatpush1.bf16.msra.mxu0 0
      %2259 = vmatprep.subr.bf16.mxu0 0
      %2260 = vmatpush1.bf16.msra.mxu0 0
      %2261 = vmatprep.mubr.bf16.mxu0 0
      %2262 = vmatmul.mubr.bf16.gmra.mrb[0].mxu0 %v2227
      %v2263 = vpop.f32.mrb[0].mxu0
      %v2264 = vadd.f32 %v2190, %v2263
      %v2265 = vpop.f32.mrb[0].mxu0
      %v2266 = vpop.f32.mrb[0].mxu0
      %v2267 = vpop.f32.mrb[0].mxu0
      %2268 = vdwg.mxu0
      %v2269 = vadd.f32 %v2264, %v1103
      %v2270 = vxor.u32 %v2269, 2147483648
      %v2271 = vmul.f32 %v2270, 1.442695
      %v2272 = vpow.pop %v2271
      %v2273 = vadd.f32 %v2272, 1.0
      %v2274 = vrcp.pop %v2273
      %v2275 = vmul.f32 1.0, %v2274
      %v2276 = vtanh.pop %v2269
      %v2277 = vmul.f32 %v2275, %v2093
      %2279 = vrot.lane.b32.xlu0 %v2276, 64
      %v2280 = vpop.permute.xlu0 %2279
      %v2282 = vmul.f32 %v2275, %v2280
      %2284 = vrot.lane.b32.xlu0 %v2282, 32
      %v2285 = vpop.permute.xlu0 %2284
      %v2287 = vadd.f32 %v2277, %v2285
      %v2288 = vtanh.pop %v2287
      %2290 = vrot.lane.b32.xlu0 %v2288, 64
      %v2291 = vpop.permute.xlu0 %2290
      %v2293 = vmul.f32 %v2275, %v2291
      %v2294 = vadd.f32 %v2100, %v2293
      %v2295 = vpack.c.bf16 %v2219, %v2219
      %2297 = vrot.lane.b32.xlu0 %v2295, 32
      %v2298 = vpop.permute.xlu0 %2297
      %v2300 = vsel %vm916, %v2298, 0
      %2302 = vmatprep.subr.bf16.mxu0 0
      %2303 = vmatpush1.bf16.msra.mxu0 %v912
      %2304 = vmatprep.subr.bf16.mxu0 0
      %2305 = vmatpush1.bf16.msra.mxu0 %v913
      %2306 = vmatprep.subr.bf16.mxu0 0
      %2307 = vmatpush1.bf16.msra.mxu0 0
      %2308 = vmatprep.subr.bf16.mxu0 0
      %2309 = vmatpush1.bf16.msra.mxu0 0
      %2310 = vmatprep.subr.bf16.mxu0 0
      %2311 = vmatpush1.bf16.msra.mxu0 0
      %2312 = vmatprep.subr.bf16.mxu0 0
      %2313 = vmatpush1.bf16.msra.mxu0 0
      %2314 = vmatprep.subr.bf16.mxu0 0
      %2315 = vmatpush1.bf16.msra.mxu0 0
      %2316 = vmatprep.subr.bf16.mxu0 0
      %2317 = vmatpush1.bf16.msra.mxu0 0
      %2318 = vmatprep.subr.bf16.mxu0 0
      %2319 = vmatpush1.bf16.msra.mxu0 0
      %2320 = vmatprep.subr.bf16.mxu0 0
      %2321 = vmatpush1.bf16.msra.mxu0 0
      %2322 = vmatprep.subr.bf16.mxu0 0
      %2323 = vmatpush1.bf16.msra.mxu0 0
      %2324 = vmatprep.subr.bf16.mxu0 0
      %2325 = vmatpush1.bf16.msra.mxu0 0
      %2326 = vmatprep.subr.bf16.mxu0 0
      %2327 = vmatpush1.bf16.msra.mxu0 0
      %2328 = vmatprep.subr.bf16.mxu0 0
      %2329 = vmatpush1.bf16.msra.mxu0 0
      %2330 = vmatprep.subr.bf16.mxu0 0
      %2331 = vmatpush1.bf16.msra.mxu0 0
      %2332 = vmatprep.subr.bf16.mxu0 0
      %2333 = vmatpush1.bf16.msra.mxu0 0
      %2334 = vmatprep.mubr.bf16.mxu0 0
      %2335 = vmatmul.mubr.bf16.gmra.mrb[0].mxu0 %v2300
      %v2336 = vpop.f32.mrb[0].mxu0
      %v2337 = vadd.f32 0.0, %v2336
      %v2338 = vpop.f32.mrb[0].mxu0
      %v2339 = vpop.f32.mrb[0].mxu0
      %v2340 = vpop.f32.mrb[0].mxu0
      %2341 = vdwg.mxu0
      %v2342 = vpack.c.bf16 %v2293, %v2293
      %2344 = vrot.lane.b32.xlu0 %v2342, 32
      %v2345 = vpop.permute.xlu0 %2344
      %v2347 = vsel %vm916, %v2345, 0
      %2349 = vmatprep.subr.bf16.mxu0 0
      %2350 = vmatpush1.bf16.msra.mxu0 %v968
      %2351 = vmatprep.subr.bf16.mxu0 0
      %2352 = vmatpush1.bf16.msra.mxu0 %v969
      %2353 = vmatprep.subr.bf16.mxu0 0
      %2354 = vmatpush1.bf16.msra.mxu0 0
      %2355 = vmatprep.subr.bf16.mxu0 0
      %2356 = vmatpush1.bf16.msra.mxu0 0
      %2357 = vmatprep.subr.bf16.mxu0 0
      %2358 = vmatpush1.bf16.msra.mxu0 0
      %2359 = vmatprep.subr.bf16.mxu0 0
      %2360 = vmatpush1.bf16.msra.mxu0 0
      %2361 = vmatprep.subr.bf16.mxu0 0
      %2362 = vmatpush1.bf16.msra.mxu0 0
      %2363 = vmatprep.subr.bf16.mxu0 0
      %2364 = vmatpush1.bf16.msra.mxu0 0
      %2365 = vmatprep.subr.bf16.mxu0 0
      %2366 = vmatpush1.bf16.msra.mxu0 0
      %2367 = vmatprep.subr.bf16.mxu0 0
      %2368 = vmatpush1.bf16.msra.mxu0 0
      %2369 = vmatprep.subr.bf16.mxu0 0
      %2370 = vmatpush1.bf16.msra.mxu0 0
      %2371 = vmatprep.subr.bf16.mxu0 0
      %2372 = vmatpush1.bf16.msra.mxu0 0
      %2373 = vmatprep.subr.bf16.mxu0 0
      %2374 = vmatpush1.bf16.msra.mxu0 0
      %2375 = vmatprep.subr.bf16.mxu0 0
      %2376 = vmatpush1.bf16.msra.mxu0 0
      %2377 = vmatprep.subr.bf16.mxu0 0
      %2378 = vmatpush1.bf16.msra.mxu0 0
      %2379 = vmatprep.subr.bf16.mxu0 0
      %2380 = vmatpush1.bf16.msra.mxu0 0
      %2381 = vmatprep.mubr.bf16.mxu0 0
      %2382 = vmatmul.mubr.bf16.gmra.mrb[0].mxu0 %v2347
      %v2383 = vpop.f32.mrb[0].mxu0
      %v2384 = vadd.f32 0.0, %v2383
      %v2385 = vpop.f32.mrb[0].mxu0
      %v2386 = vpop.f32.mrb[0].mxu0
      %v2387 = vpop.f32.mrb[0].mxu0
      %2388 = vdwg.mxu0
      %v2389 = vadd.f32 %v888, %v2337
      %v2390 = vxor.u32 %v2389, 2147483648
      %v2391 = vmul.f32 %v2390, 1.442695
      %v2392 = vpow.pop %v2391
      %v2393 = vadd.f32 %v2392, 1.0
      %v2394 = vrcp.pop %v2393
      %v2395 = vmul.f32 1.0, %v2394
      %v2396 = vtanh.pop %v2389
      %v2397 = vmul.f32 %v2395, %v2213
      %2399 = vrot.lane.b32.xlu0 %v2396, 64
      %v2400 = vpop.permute.xlu0 %2399
      %v2402 = vmul.f32 %v2395, %v2400
      %2404 = vrot.lane.b32.xlu0 %v2402, 32
      %v2405 = vpop.permute.xlu0 %2404
      %v2407 = vadd.f32 %v2397, %v2405
      %v2408 = vtanh.pop %v2407
      %2410 = vrot.lane.b32.xlu0 %v2408, 64
      %v2411 = vpop.permute.xlu0 %2410
      %v2413 = vmul.f32 %v2395, %v2411
      %vm2414 = vcmp.gt.f32.partialorder %v2413, %v1037
      %v2415 = vsel %vm2414, 1.0, 0.0
      %v2416 = vpack.c.bf16 %v2415, %v2415
      %2418 = vrot.lane.b32.xlu0 %v2416, 32
      %v2419 = vpop.permute.xlu0 %2418
      %v2421 = vsel %vm916, %v2419, 0
      %2423 = vmatprep.subr.bf16.mxu0 0
      %2424 = vmatpush1.bf16.msra.mxu0 %v1052
      %2425 = vmatprep.subr.bf16.mxu0 0
      %2426 = vmatpush1.bf16.msra.mxu0 %v1053
      %2427 = vmatprep.subr.bf16.mxu0 0
      %2428 = vmatpush1.bf16.msra.mxu0 0
      %2429 = vmatprep.subr.bf16.mxu0 0
      %2430 = vmatpush1.bf16.msra.mxu0 0
      %2431 = vmatprep.subr.bf16.mxu0 0
      %2432 = vmatpush1.bf16.msra.mxu0 0
      %2433 = vmatprep.subr.bf16.mxu0 0
      %2434 = vmatpush1.bf16.msra.mxu0 0
      %2435 = vmatprep.subr.bf16.mxu0 0
      %2436 = vmatpush1.bf16.msra.mxu0 0
      %2437 = vmatprep.subr.bf16.mxu0 0
      %2438 = vmatpush1.bf16.msra.mxu0 0
      %2439 = vmatprep.subr.bf16.mxu0 0
      %2440 = vmatpush1.bf16.msra.mxu0 0
      %2441 = vmatprep.subr.bf16.mxu0 0
      %2442 = vmatpush1.bf16.msra.mxu0 0
      %2443 = vmatprep.subr.bf16.mxu0 0
      %2444 = vmatpush1.bf16.msra.mxu0 0
      %2445 = vmatprep.subr.bf16.mxu0 0
      %2446 = vmatpush1.bf16.msra.mxu0 0
      %2447 = vmatprep.subr.bf16.mxu0 0
      %2448 = vmatpush1.bf16.msra.mxu0 0
      %2449 = vmatprep.subr.bf16.mxu0 0
      %2450 = vmatpush1.bf16.msra.mxu0 0
      %2451 = vmatprep.subr.bf16.mxu0 0
      %2452 = vmatpush1.bf16.msra.mxu0 0
      %2453 = vmatprep.subr.bf16.mxu0 0
      %2454 = vmatpush1.bf16.msra.mxu0 0
      %2455 = vmatprep.mubr.bf16.mxu0 0
      %2456 = vmatmul.mubr.bf16.gmra.mrb[0].mxu0 %v2421
      %v2457 = vpop.f32.mrb[0].mxu0
      %v2458 = vadd.f32 %v2384, %v2457
      %v2459 = vpop.f32.mrb[0].mxu0
      %v2460 = vpop.f32.mrb[0].mxu0
      %v2461 = vpop.f32.mrb[0].mxu0
      %2462 = vdwg.mxu0
      %v2463 = vadd.f32 %v2458, %v1103
      %v2464 = vxor.u32 %v2463, 2147483648
      %v2465 = vmul.f32 %v2464, 1.442695
      %v2466 = vpow.pop %v2465
      %v2467 = vadd.f32 %v2466, 1.0
      %v2468 = vrcp.pop %v2467
      %v2469 = vmul.f32 1.0, %v2468
      %v2470 = vtanh.pop %v2463
      %v2471 = vmul.f32 %v2469, %v2287
      %2473 = vrot.lane.b32.xlu0 %v2470, 64
      %v2474 = vpop.permute.xlu0 %2473
      %v2476 = vmul.f32 %v2469, %v2474
      %2478 = vrot.lane.b32.xlu0 %v2476, 32
      %v2479 = vpop.permute.xlu0 %2478
      %v2481 = vadd.f32 %v2471, %v2479
      %v2482 = vtanh.pop %v2481
      %2484 = vrot.lane.b32.xlu0 %v2482, 64
      %v2485 = vpop.permute.xlu0 %2484
      %v2487 = vmul.f32 %v2469, %v2485
      %v2488 = vadd.f32 %v2294, %v2487
      %v2489 = vmul.f32 %v2488, 0.125
      %v2490 = vpack.c.bf16 %v2489, %v2489
      %v2491 = vld [vmem:[%s11] sm:$0xf]
      %v2492 = vld [vmem:[%s11 + $0x4] sm:$0xf]
      %v2493 = vld [vmem:[%s11 + $0x8] sm:$0xf]
      %v2494 = vld [vmem:[%s11 + $0xc] sm:$0xf]
      %v2495 = vld [vmem:[%s12] sm:$0x1]
      %v2497 = vlaneseq
      %v2498 = vshrl.u32 %v2497, 7
      %v2499 = vsub.s32 0, %v2498
      %v2500 = vrot.slane %v2495, %v2499
      %2503 = vrot.lane.b32.xlu0 %v2490, 32
      %v2504 = vpop.permute.xlu0 %2503
      %v2509 = vunpack.c.l.b16 %v2491
      %v2510 = vunpack.c.l.b16 %v2492
      %v2511 = vunpack.c.l.b16 %v2493
      %v2512 = vunpack.c.l.b16 %v2494
      %v2513 = vpack.c.b16 %v2510, %v2509
      %v2514 = vpack.c.b16 %v2512, %v2511
      %v2518 = vsel %vm916, %v2504, 0
      %2520 = vmatprep.subr.bf16.mxu0 0
      %2521 = vmatpush1.bf16.msra.mxu0 %v2513
      %2522 = vmatprep.subr.bf16.mxu0 0
      %2523 = vmatpush1.bf16.msra.mxu0 %v2514
      %2524 = vmatprep.subr.bf16.mxu0 0
      %2525 = vmatpush1.bf16.msra.mxu0 0
      %2526 = vmatprep.subr.bf16.mxu0 0
      %2527 = vmatpush1.bf16.msra.mxu0 0
      %2528 = vmatprep.subr.bf16.mxu0 0
      %2529 = vmatpush1.bf16.msra.mxu0 0
      %2530 = vmatprep.subr.bf16.mxu0 0
      %2531 = vmatpush1.bf16.msra.mxu0 0
      %2532 = vmatprep.subr.bf16.mxu0 0
      %2533 = vmatpush1.bf16.msra.mxu0 0
      %2534 = vmatprep.subr.bf16.mxu0 0
      %2535 = vmatpush1.bf16.msra.mxu0 0
      %2536 = vmatprep.subr.bf16.mxu0 0
      %2537 = vmatpush1.bf16.msra.mxu0 0
      %2538 = vmatprep.subr.bf16.mxu0 0
      %2539 = vmatpush1.bf16.msra.mxu0 0
      %2540 = vmatprep.subr.bf16.mxu0 0
      %2541 = vmatpush1.bf16.msra.mxu0 0
      %2542 = vmatprep.subr.bf16.mxu0 0
      %2543 = vmatpush1.bf16.msra.mxu0 0
      %2544 = vmatprep.subr.bf16.mxu0 0
      %2545 = vmatpush1.bf16.msra.mxu0 0
      %2546 = vmatprep.subr.bf16.mxu0 0
      %2547 = vmatpush1.bf16.msra.mxu0 0
      %2548 = vmatprep.subr.bf16.mxu0 0
      %2549 = vmatpush1.bf16.msra.mxu0 0
      %2550 = vmatprep.subr.bf16.mxu0 0
      %2551 = vmatpush1.bf16.msra.mxu0 0
      %2552 = vmatprep.mubr.bf16.mxu0 0
      %2553 = vmatmul.mubr.bf16.gmra.mrb[0].mxu0 %v2518
      %v2554 = vpop.f32.mrb[0].mxu0
      %v2555 = vadd.f32 %v2500, %v2554
      %v2556 = vpop.f32.mrb[0].mxu0
      %v2557 = vpop.f32.mrb[0].mxu0
      %v2558 = vpop.f32.mrb[0].mxu0
      %2559 = vdwg.mxu0
      %v2560 = vstv %s505
      %vm2561 = vcmp.gt.f32.partialorder %v2555, %v2560
      %v2562 = vsel %vm2561, 1.0, 0.0
      %v2563 = vld [vmem:[%s13] sm:$0xf]
      %v2564 = vld [vmem:[%s13 + $0x4] sm:$0xf]
      %v2565 = vld [vmem:[%s13 + $0x8] sm:$0xf]
      %v2566 = vld [vmem:[%s13 + $0xc] sm:$0xf]
      %v2567 = vpack.c.bf16 %v2562, %v2562
      %v2568 = vld [vmem:[%s14] sm:$0xf]
      %v2569 = vld [vmem:[%s14 + $0x4] sm:$0xf]
      %v2570 = vld [vmem:[%s14 + $0x8] sm:$0xf]
      %v2571 = vld [vmem:[%s14 + $0xc] sm:$0xf]
      %v2572 = vld [vmem:[%s14 + $0x10] sm:$0xf]
      %v2573 = vld [vmem:[%s14 + $0x14] sm:$0xf]
      %v2574 = vld [vmem:[%s14 + $0x18] sm:$0xf]
      %v2575 = vld [vmem:[%s14 + $0x1c] sm:$0xf]
      %v2584 = vunpack.c.l.b16 %v2568
      %v2585 = vunpack.c.l.b16 %v2569
      %v2586 = vunpack.c.l.b16 %v2570
      %v2587 = vunpack.c.l.b16 %v2571
      %v2588 = vunpack.c.l.b16 %v2572
      %v2589 = vunpack.c.l.b16 %v2573
      %v2590 = vunpack.c.l.b16 %v2574
      %v2591 = vunpack.c.l.b16 %v2575
      %v2592 = vpack.c.b16 %v2585, %v2584
      %v2593 = vpack.c.b16 %v2587, %v2586
      %v2594 = vpack.c.b16 %v2589, %v2588
      %v2595 = vpack.c.b16 %v2591, %v2590
      %v2601 = vsel %vm652, %v2567, 0
      %2603 = vmatprep.subr.bf16.mxu0 0
      %2604 = vmatpush1.bf16.msra.mxu0 %v2592
      %2605 = vmatprep.subr.bf16.mxu0 0
      %2606 = vmatpush1.bf16.msra.mxu0 %v2593
      %2607 = vmatprep.subr.bf16.mxu0 0
      %2608 = vmatpush1.bf16.msra.mxu0 %v2594
      %2609 = vmatprep.subr.bf16.mxu0 0
      %2610 = vmatpush1.bf16.msra.mxu0 %v2595
      %2611 = vmatprep.subr.bf16.mxu0 0
      %2612 = vmatpush1.bf16.msra.mxu0 0
      %2613 = vmatprep.subr.bf16.mxu0 0
      %2614 = vmatpush1.bf16.msra.mxu0 0
      %2615 = vmatprep.subr.bf16.mxu0 0
      %2616 = vmatpush1.bf16.msra.mxu0 0
      %2617 = vmatprep.subr.bf16.mxu0 0
      %2618 = vmatpush1.bf16.msra.mxu0 0
      %2619 = vmatprep.subr.bf16.mxu0 0
      %2620 = vmatpush1.bf16.msra.mxu0 0
      %2621 = vmatprep.subr.bf16.mxu0 0
      %2622 = vmatpush1.bf16.msra.mxu0 0
      %2623 = vmatprep.subr.bf16.mxu0 0
      %2624 = vmatpush1.bf16.msra.mxu0 0
      %2625 = vmatprep.subr.bf16.mxu0 0
      %2626 = vmatpush1.bf16.msra.mxu0 0
      %2627 = vmatprep.subr.bf16.mxu0 0
      %2628 = vmatpush1.bf16.msra.mxu0 0
      %2629 = vmatprep.subr.bf16.mxu0 0
      %2630 = vmatpush1.bf16.msra.mxu0 0
      %2631 = vmatprep.subr.bf16.mxu0 0
      %2632 = vmatpush1.bf16.msra.mxu0 0
      %2633 = vmatprep.subr.bf16.mxu0 0
      %2634 = vmatpush1.bf16.msra.mxu0 0
      %2635 = vmatprep.mubr.bf16.mxu0 0
      %2636 = vmatmul.mubr.bf16.gmra.mrb[0].mxu0 %v2601
      %v2637 = vpop.f32.mrb[0].mxu0
      %v2638 = vadd.f32 0.0, %v2637
      %v2639 = vpop.f32.mrb[0].mxu0
      %v2640 = vpop.f32.mrb[0].mxu0
      %v2641 = vpop.f32.mrb[0].mxu0
      %2642 = vdwg.mxu0
      %v2647 = vunpack.c.l.b16 %v2563
      %v2648 = vunpack.c.l.b16 %v2564
      %v2649 = vunpack.c.l.b16 %v2565
      %v2650 = vunpack.c.l.b16 %v2566
      %v2651 = vpack.c.b16 %v2648, %v2647
      %v2652 = vpack.c.b16 %v2650, %v2649
      %2655 = vmatprep.subr.bf16.mxu0 0
      %2656 = vmatpush1.bf16.msra.mxu0 %v2651
      %2657 = vmatprep.subr.bf16.mxu0 0
      %2658 = vmatpush1.bf16.msra.mxu0 %v2652
      %2659 = vmatprep.subr.bf16.mxu0 0
      %2660 = vmatpush1.bf16.msra.mxu0 0
      %2661 = vmatprep.subr.bf16.mxu0 0
      %2662 = vmatpush1.bf16.msra.mxu0 0
      %2663 = vmatprep.subr.bf16.mxu0 0
      %2664 = vmatpush1.bf16.msra.mxu0 0
      %2665 = vmatprep.subr.bf16.mxu0 0
      %2666 = vmatpush1.bf16.msra.mxu0 0
      %2667 = vmatprep.subr.bf16.mxu0 0
      %2668 = vmatpush1.bf16.msra.mxu0 0
      %2669 = vmatprep.subr.bf16.mxu0 0
      %2670 = vmatpush1.bf16.msra.mxu0 0
      %2671 = vmatprep.subr.bf16.mxu0 0
      %2672 = vmatpush1.bf16.msra.mxu0 0
      %2673 = vmatprep.subr.bf16.mxu0 0
      %2674 = vmatpush1.bf16.msra.mxu0 0
      %2675 = vmatprep.subr.bf16.mxu0 0
      %2676 = vmatpush1.bf16.msra.mxu0 0
      %2677 = vmatprep.subr.bf16.mxu0 0
      %2678 = vmatpush1.bf16.msra.mxu0 0
      %2679 = vmatprep.subr.bf16.mxu0 0
      %2680 = vmatpush1.bf16.msra.mxu0 0
      %2681 = vmatprep.subr.bf16.mxu0 0
      %2682 = vmatpush1.bf16.msra.mxu0 0
      %2683 = vmatprep.subr.bf16.mxu0 0
      %2684 = vmatpush1.bf16.msra.mxu0 0
      %2685 = vmatprep.subr.bf16.mxu0 0
      %2686 = vmatpush1.bf16.msra.mxu0 0
      %2687 = vmatprep.mubr.bf16.mxu0 0
      %2688 = vmatmul.mubr.bf16.gmra.mrb[0].mxu0 %v2518
      %v2689 = vpop.f32.mrb[0].mxu0
      %v2690 = vadd.f32 %v2638, %v2689
      %v2691 = vpop.f32.mrb[0].mxu0
      %v2692 = vpop.f32.mrb[0].mxu0
      %v2693 = vpop.f32.mrb[0].mxu0
      %2694 = vdwg.mxu0
      %v2695 = vld [vmem:[%s15] sm:$0x1]
      %v2697 = vlaneseq
      %v2698 = vshrl.u32 %v2697, 7
      %v2699 = vsub.s32 0, %v2698
      %v2700 = vrot.slane %v2695, %v2699
      %v2702 = vadd.f32 %v2690, %v2700
      %2703 = vst [vmem:[%s501] sm:$0xff] %v2702
      %p2704 = scmp.lt.s32.totalorder %s33, 1
      %s2705 = scalar_select %p2704, %s33, 1
      %s2706 = smul.addr %s2705, 8
      %s2707 = scalar_lea.vmem %s16, %s2706
      // Predicated region
      $region81: #{_forward_impl.1} parent=79 // pred_check
        %p2708 = pneg %p371
      $region82: #{_forward_impl.1} parent=79 // pred_check_branch
        %2710 = sbr.rel (%p2708) target = $region84
      $region83: #{_forward_impl.1} parent=79 // pred_region
        _
      $region84: #{_forward_impl.1} parent=79 // pred_fallthru
        _
    $region80: #{_forward_impl.1} parent=5 // pred_fallthru
      _
    %p2711 = scmp.le.s32.totalorder 2, %s28
    // Predicated region
    $region85: #{_forward_impl.1} parent=5 // pred_check
      %p2712 = pneg %p2711
    $region86: #{_forward_impl.1} parent=5 // pred_check_branch
      %2714 = sbr.rel (%p2712) target = $region88
    $region87: #{_forward_impl.1} parent=5 // pred_region
      %s2715 = ssub.s32 %s28, 2
      // Predicated region
      $region89: #{_forward_impl.1} parent=87 // pred_check
        %p2716 = pneg %p377
      $region90: #{_forward_impl.1} parent=87 // pred_check_branch
        %2718 = sbr.rel (%p2716) target = $region92
      $region91: #{_forward_impl.1} parent=87 // pred_region
        %p2719 = scmp.lt.s32.totalorder %s34, 1
        %s2720 = scalar_select %p2719, %s34, 1
        %s2721 = smul.addr %s2720, 8
        %s2722 = scalar_lea.vmem %s16, %s2721
      $region92: #{_forward_impl.1} parent=87 // pred_fallthru
        _
    $region88: #{_forward_impl.1} parent=5 // pred_fallthru
      _
  $region6: #{_forward_impl.1} parent=0 // loop_footer
    %s32 = sadd.s32 1, %s28
  $region7: #{_forward_impl.1} parent=0 // loop_footer_branch
    %27 = sbr.rel target = $region3
  $region8: #{_forward_impl.1} parent=0 // loop_exit
    _

</llo_original>
